<compile_context>
chip_gen: v7x
topology: tpu7x:2x2x1
jax: 0.10.0
libtpu: 0.0.40
codegen_flags: <defaults>
</compile_context>

<pallas_src>
import functools

import numpy as np
import jax
import jax.numpy as jnp
from jax import lax
from jax.experimental import pallas as pl
from jax.experimental.pallas import tpu as pltpu


# ------------------------------ fused kernel --------------------------------

def _wdisc_fused_kernel(n_blocks, n_img, *refs):
    """Whole WDiscriminator forward in one kernel invocation (no grid).

    Input refs (in order):
      x            (N*H0, W0*C0)          VMEM  activation slab (images stacked on rows)
      per block b:
        bt_b       (KH*W*Cin, OW*Cout)    ANY   fused banded conv weight (HBM)
        g_b        (1, Cout)              VMEM  BN gamma
        be_b       (1, Cout)              VMEM  BN beta
        E_b        (OW*Cout, Cout)        VMEM  lane -> channel selector
        ET_b       (Cout, OW*Cout)        VMEM  channel -> lane selector
      bt_tail      (KH*W*Cin, OW*Cout_t)  ANY   tail conv weight (HBM)
      bias_tail    (1, OW*Cout_t)         VMEM  tail bias tiled over lanes
    Output:
      out          (N*OH_t, OW_t*Cout_t)  VMEM
    Scratch:
      bt_vmem[0..n_blocks] VMEM staging buffers;  sem: DMA sems (n_blocks+1,)
    """
    n_in = 1 + 5 * n_blocks + 2
    in_refs = refs[:n_in]
    o_ref = refs[n_in]
    bt_vmem = refs[n_in + 1: n_in + 2 + n_blocks]
    sem = refs[n_in + 2 + n_blocks]

    x_ref = in_refs[0]
    bt_hbm = [in_refs[1 + 5 * b] for b in range(n_blocks)] + [in_refs[n_in - 2]]
    bias_ref = in_refs[n_in - 1]

    # Kick off all conv-weight DMAs up front; each layer waits on its own
    # weight just before its matmul so later-layer DMAs hide behind compute.
    for l in range(n_blocks + 1):
        pltpu.make_async_copy(bt_hbm[l], bt_vmem[l], sem.at[l]).start()

    def build_lhs(act, h_in, kh, oh):
        # Per image: lane-concat the KH shifted row windows -> (OH, KH*lanes);
        # then stack images along rows -> (N*OH, KH*lanes).  One matmul/layer.
        per_img = []
        for i in range(n_img):
            base = i * h_in
            taps = [act[base + dh: base + dh + oh, :] for dh in range(kh)]
            per_img.append(jnp.concatenate(taps, axis=-1))
        return jnp.concatenate(per_img, axis=0)

    act = x_ref[...]                                  # (N*H, W*Cin)
    h_in = act.shape[0] // n_img

    for b in range(n_blocks):
        g_ref, be_ref, e_ref, et_ref = in_refs[2 + 5 * b: 6 + 5 * b]
        lanes_in = act.shape[1]
        kh = bt_vmem[b].shape[0] // lanes_in
        oh = h_in - kh + 1
        cout = g_ref.shape[1]
        ow = bt_vmem[b].shape[1] // cout

        lhs = build_lhs(act, h_in, kh, oh)            # (N*OH, KH*W*Cin)
        pltpu.make_async_copy(bt_hbm[b], bt_vmem[b], sem.at[b]).wait()
        y = jnp.dot(lhs, bt_vmem[b][...], preferred_element_type=jnp.float32)

        # Training-mode BatchNorm over (N, OH, OW): one-pass batch stats.
        # (One-pass E[x^2]-mean^2 is fine at these magnitudes; switch to a
        #  mean-subtracted pass if activations grow.)
        colsum = jnp.sum(y, axis=0, keepdims=True)                 # (1, OW*Cout)
        colsq = jnp.sum(y * y, axis=0, keepdims=True)
        sums_c = jnp.dot(jnp.concatenate([colsum, colsq], axis=0), e_ref[...],
                         preferred_element_type=jnp.float32)       # (2, Cout)
        inv_count = 1.0 / float(n_img * oh * ow)
        mean = sums_c[0:1, :] * inv_count
        var = sums_c[1:2, :] * inv_count - mean * mean             # biased var
        scale_c = g_ref[...] * lax.rsqrt(var + 1e-5)
        shift_c = be_ref[...] - mean * scale_c
        aff_l = jnp.dot(jnp.concatenate([scale_c, shift_c], axis=0), et_ref[...],
                        preferred_element_type=jnp.float32)        # (2, OW*Cout)
        z = y * aff_l[0:1, :] + aff_l[1:2, :]
        act = jnp.where(z >= 0.0, z, 0.2 * z)                      # LeakyReLU(0.2)
        h_in = oh

    # Tail: conv + bias only.
    lanes_in = act.shape[1]
    kh = bt_vmem[n_blocks].shape[0] // lanes_in
    oh = h_in - kh + 1
    lhs = build_lhs(act, h_in, kh, oh)
    pltpu.make_async_copy(bt_hbm[n_blocks], bt_vmem[n_blocks], sem.at[n_blocks]).wait()
    o_ref[...] = (jnp.dot(lhs, bt_vmem[n_blocks][...],
                          preferred_element_type=jnp.float32) + bias_ref[...])


# --------------------- host-side weight pre-transforms ----------------------

def _make_banded_weight_np(w_oihw, w_in):
    """(Cout, Cin, KH, KW) -> (KH*W_in*Cin, OW*Cout) fused block-Toeplitz weight.

    Row index = dh*(W*Cin) + w*Cin + c, column index = ow*Cout + d, value
    = weight[d, c, dh, w-ow] when 0 <= w-ow < KW else 0, so
    LHS(OH, KH*W*Cin) @ BT performs height taps + width taps + channel
    contraction of a valid conv in one matmul.
    """
    w_oihw = np.asarray(w_oihw, np.float32)
    cout, cin, kh, kw = w_oihw.shape
    ow = w_in - kw + 1
    bt = np.zeros((kh, w_in, cin, ow, cout), np.float32)
    for dh in range(kh):
        for dw in range(kw):
            tap = np.transpose(w_oihw[:, :, dh, dw])       # (cin, cout)
            for o in range(ow):
                bt[dh, o + dw, :, o, :] = tap
    return bt.reshape(kh * w_in * cin, ow * cout)


def _make_channel_selectors_np(ow, cout):
    """Constant selector matrices: lanes->channels (E) and channels->lanes (E^T)."""
    lane_ch = np.arange(ow * cout, dtype=np.int64) % cout
    e = (lane_ch[:, None] == np.arange(cout)[None, :]).astype(np.float32)
    return e, np.ascontiguousarray(e.T)


def prepare_wdiscriminator(params, input_hw):
    """One-time host-side weight pre-transform (outside the jitted hot path)."""
    h, w = input_hw
    blocks = [params["head"]] + list(params["body"])
    prep = {"bt": [], "g": [], "be": [], "e": [], "et": []}
    cur_h, cur_w = h, w
    for (wgt, _b, g, be) in blocks:     # conv bias cancels in training-mode BN
        wgt_np = np.asarray(jax.device_get(wgt), np.float32)
        cout, _cin, kh, kw = wgt_np.shape
        oh, ow = cur_h - kh + 1, cur_w - kw + 1
        prep["bt"].append(jnp.asarray(_make_banded_weight_np(wgt_np, cur_w)))
        prep["g"].append(jnp.asarray(
            np.asarray(jax.device_get(g), np.float32).reshape(1, cout)))
        prep["be"].append(jnp.asarray(
            np.asarray(jax.device_get(be), np.float32).reshape(1, cout)))
        e, et = _make_channel_selectors_np(ow, cout)
        prep["e"].append(jnp.asarray(e))
        prep["et"].append(jnp.asarray(et))
        cur_h, cur_w = oh, ow
    wt, bias = params["tail"]
    wt_np = np.asarray(jax.device_get(wt), np.float32)
    bias_np = np.asarray(jax.device_get(bias), np.float32)
    cout_t, _cin_t, kh, kw = wt_np.shape
    oh, ow = cur_h - kh + 1, cur_w - kw + 1
    prep["bt_tail"] = jnp.asarray(_make_banded_weight_np(wt_np, cur_w))
    prep["bias_tail"] = jnp.asarray(np.tile(bias_np.reshape(1, cout_t), (1, ow)))
    return prep


# -------------------------- WDiscriminator wrapper ---------------------------

def wdiscriminator_forward(x_nchw, prep):
    n, c, h, w = x_nchw.shape
    n_blocks = len(prep["bt"])

    # NCHW -> row-stacked (N*H, W*C) slab; C fastest within the lane axis.
    x = jnp.transpose(x_nchw, (0, 2, 3, 1)).reshape(n * h, w * c)

    # Walk static geometry (all derived from shapes) to size the output.
    cur_h, cur_w, cur_c = h, w, c
    for b in range(n_blocks):
        kh = prep["bt"][b].shape[0] // (cur_w * cur_c)
        cout = prep["g"][b].shape[1]
        ow = prep["bt"][b].shape[1] // cout
        cur_h, cur_w, cur_c = cur_h - kh + 1, ow, cout
    kh_t = prep["bt_tail"].shape[0] // (cur_w * cur_c)
    oh_t, ow_t = cur_h - kh_t + 1, cur_w - kh_t + 1        # square kernels
    cout_t = prep["bias_tail"].shape[1] // ow_t

    inputs = [x]
    in_specs = [pl.BlockSpec(memory_space=pltpu.MemorySpace.VMEM)]
    for b in range(n_blocks):
        inputs += [prep["bt"][b], prep["g"][b], prep["be"][b],
                   prep["e"][b], prep["et"][b]]
        in_specs += ([pl.BlockSpec(memory_space=pl.ANY)]            # BT stays in HBM
                     + [pl.BlockSpec(memory_space=pltpu.MemorySpace.VMEM)] * 4)
    inputs += [prep["bt_tail"], prep["bias_tail"]]
    in_specs += [pl.BlockSpec(memory_space=pl.ANY),
                 pl.BlockSpec(memory_space=pltpu.MemorySpace.VMEM)]

    scratch_shapes = (
        [pltpu.VMEM(prep["bt"][b].shape, jnp.float32) for b in range(n_blocks)]
        + [pltpu.VMEM(prep["bt_tail"].shape, jnp.float32)]
        + [pltpu.SemaphoreType.DMA((n_blocks + 1,))])

    out2d = pl.pallas_call(
        functools.partial(_wdisc_fused_kernel, n_blocks, n),
        out_shape=jax.ShapeDtypeStruct((n * oh_t, ow_t * cout_t), jnp.float32),
        in_specs=in_specs,
        out_specs=pl.BlockSpec(memory_space=pltpu.MemorySpace.VMEM),
        scratch_shapes=scratch_shapes,
    )(*inputs)

    # (N*OH, OW*Cout_t) -> NCHW.  Lane-dense output packing is a TODO once the
    # output is non-trivial in size (6 lanes is fine at this toy scale).
    return jnp.transpose(out2d.reshape(n, oh_t, ow_t, cout_t), (0, 3, 1, 2))


# ----------------------- pure-JAX reference (checking) -----------------------

def _ref_conv(x, w, b):
    y = lax.conv_general_dilated(
        x, w, window_strides=(1, 1), padding="VALID",
        dimension_numbers=("NCHW", "OIHW", "NCHW"))
    return y + b.reshape(1, -1, 1, 1)


def _ref_block(x, w, b, g, be):
    y = _ref_conv(x, w, b)
    mean = jnp.mean(y, axis=(0, 2, 3), keepdims=True)
    var = jnp.mean((y - mean) ** 2, axis=(0, 2, 3), keepdims=True)
    y = (y - mean) * lax.rsqrt(var + 1e-5)
    y = y * g.reshape(1, -1, 1, 1) + be.reshape(1, -1, 1, 1)
    return jnp.where(y >= 0, y, 0.2 * y)


def ref_forward(x, params):
    w, b, g, be = params["head"]
    x = _ref_block(x, w, b, g, be)
    for (w, b, g, be) in params["body"]:
        x = _ref_block(x, w, b, g, be)
    w, b = params["tail"]
    return _ref_conv(x, w, b)


# ------------------------------ param builder --------------------------------

def make_params(key, nc_im, nfc, min_nfc, ker_size, num_layer):
    def conv_params(k, cin, cout):
        k1, k2 = jax.random.split(k)
        w = 0.02 * jax.random.normal(k1, (cout, cin, ker_size, ker_size), jnp.float32)
        b = 0.01 * jax.random.normal(k2, (cout,), jnp.float32)
        return w, b

    def bn_params(k, cout):
        k1, k2 = jax.random.split(k)
        g = 1.0 + 0.02 * jax.random.normal(k1, (cout,), jnp.float32)
        be = 0.01 * jax.random.normal(k2, (cout,), jnp.float32)
        return g, be

    keys = jax.random.split(key, 2 * num_layer)
    params = {}
    N = int(nfc)
    w, b = conv_params(keys[0], nc_im, N)
    g, be = bn_params(keys[1], N)
    params["head"] = (w, b, g, be)
    body = []
    for i in range(num_layer - 2):
        N = int(nfc / (2 ** (i + 1)))
        cin = max(2 * N, min_nfc)
        cout = max(N, min_nfc)
        w, b = conv_params(keys[2 + 2 * i], cin, cout)
        g, be = bn_params(keys[3 + 2 * i], cout)
        body.append((w, b, g, be))
    params["body"] = body
    cin = max(N, min_nfc)
    w, b = conv_params(keys[-1], cin, 1)
    params["tail"] = (w, b)
    return params


# ----------------------------------- main ------------------------------------

if __name__ == "__main__":
    # SinGAN-style opts at small scale:
    nc_im, nfc, min_nfc, ker_size, padd_size, num_layer = 3, 16, 8, 3, 0, 5
    batch, spatial = 2, 16

    key = jax.random.PRNGKey(0)
    kx, kp = jax.random.split(key)
    x = jax.random.normal(kx, (batch, nc_im, spatial, spatial), jnp.float32)
    params = make_params(kp, nc_im, nfc, min_nfc, ker_size, num_layer)

    # One-time host-side weight pre-transform (outside the jitted hot path).
    prep = prepare_wdiscriminator(params, (spatial, spatial))

    fwd = jax.jit(wdiscriminator_forward)
    out = jax.block_until_ready(fwd(x, prep))

    # sanity: (2, 1, 6, 6) for 5 valid 3x3 convs on a 16x16 input
    expected = spatial - 2 * num_layer
    assert out.shape == (batch, 1, expected, expected), out.shape

    ref = jax.block_until_ready(ref_forward(x, params))
    err = float(jnp.max(jnp.abs(out - ref)))
    assert jnp.allclose(out, ref, atol=1e-4, rtol=1e-4), err

    print("KERNEL_OK")
</pallas_src>

<mosaic_0001>
module attributes {stable_mosaic.version = 11 : i64} {
  func.func @_wdisc_fused_kernel(%arg0: memref<32x48xf32, #tpu.memory_space<vmem>>, %arg1: memref<144x224xf32, #tpu.memory_space<any>>, %arg2: memref<1x16xf32, #tpu.memory_space<vmem>>, %arg3: memref<1x16xf32, #tpu.memory_space<vmem>>, %arg4: memref<224x16xf32, #tpu.memory_space<vmem>>, %arg5: memref<16x224xf32, #tpu.memory_space<vmem>>, %arg6: memref<672x96xf32, #tpu.memory_space<any>>, %arg7: memref<1x8xf32, #tpu.memory_space<vmem>>, %arg8: memref<1x8xf32, #tpu.memory_space<vmem>>, %arg9: memref<96x8xf32, #tpu.memory_space<vmem>>, %arg10: memref<8x96xf32, #tpu.memory_space<vmem>>, %arg11: memref<288x80xf32, #tpu.memory_space<any>>, %arg12: memref<1x8xf32, #tpu.memory_space<vmem>>, %arg13: memref<1x8xf32, #tpu.memory_space<vmem>>, %arg14: memref<80x8xf32, #tpu.memory_space<vmem>>, %arg15: memref<8x80xf32, #tpu.memory_space<vmem>>, %arg16: memref<240x64xf32, #tpu.memory_space<any>>, %arg17: memref<1x8xf32, #tpu.memory_space<vmem>>, %arg18: memref<1x8xf32, #tpu.memory_space<vmem>>, %arg19: memref<64x8xf32, #tpu.memory_space<vmem>>, %arg20: memref<8x64xf32, #tpu.memory_space<vmem>>, %arg21: memref<192x6xf32, #tpu.memory_space<any>>, %arg22: memref<1x6xf32, #tpu.memory_space<vmem>>, %arg23: memref<12x6xf32, #tpu.memory_space<vmem>>, %arg24: memref<144x224xf32, #tpu.memory_space<vmem>>, %arg25: memref<672x96xf32, #tpu.memory_space<vmem>>, %arg26: memref<288x80xf32, #tpu.memory_space<vmem>>, %arg27: memref<240x64xf32, #tpu.memory_space<vmem>>, %arg28: memref<192x6xf32, #tpu.memory_space<vmem>>, %arg29: memref<5x!tpu.dma_semaphore, #tpu.memory_space<semaphore_mem>>) attributes {dimension_semantics = [], scalar_prefetch = 0 : i64, scratch_operands = 6 : i64, tpu.core_type = #tpu.core_type<tc>} {
    %c0_i32 = arith.constant 0 : i32
    %0 = tpu.memref_slice %arg29[%c0_i32] : memref<5x!tpu.dma_semaphore, #tpu.memory_space<semaphore_mem>> -> memref<1x!tpu.dma_semaphore, #tpu.memory_space<semaphore_mem>>
    %1 = tpu.memref_squeeze %0 : memref<1x!tpu.dma_semaphore, #tpu.memory_space<semaphore_mem>> -> memref<!tpu.dma_semaphore, #tpu.memory_space<semaphore_mem>>
    tpu.enqueue_dma source(%arg1 : memref<144x224xf32, #tpu.memory_space<any>>) target(%arg24 : memref<144x224xf32, #tpu.memory_space<vmem>>) target_semaphore(%1 : memref<!tpu.dma_semaphore, #tpu.memory_space<semaphore_mem>>)
    %c1_i32 = arith.constant 1 : i32
    %2 = tpu.memref_slice %arg29[%c1_i32] : memref<5x!tpu.dma_semaphore, #tpu.memory_space<semaphore_mem>> -> memref<1x!tpu.dma_semaphore, #tpu.memory_space<semaphore_mem>>
    %3 = tpu.memref_squeeze %2 : memref<1x!tpu.dma_semaphore, #tpu.memory_space<semaphore_mem>> -> memref<!tpu.dma_semaphore, #tpu.memory_space<semaphore_mem>>
    tpu.enqueue_dma source(%arg6 : memref<672x96xf32, #tpu.memory_space<any>>) target(%arg25 : memref<672x96xf32, #tpu.memory_space<vmem>>) target_semaphore(%3 : memref<!tpu.dma_semaphore, #tpu.memory_space<semaphore_mem>>)
    %c2_i32 = arith.constant 2 : i32
    %4 = tpu.memref_slice %arg29[%c2_i32] : memref<5x!tpu.dma_semaphore, #tpu.memory_space<semaphore_mem>> -> memref<1x!tpu.dma_semaphore, #tpu.memory_space<semaphore_mem>>
    %5 = tpu.memref_squeeze %4 : memref<1x!tpu.dma_semaphore, #tpu.memory_space<semaphore_mem>> -> memref<!tpu.dma_semaphore, #tpu.memory_space<semaphore_mem>>
    tpu.enqueue_dma source(%arg11 : memref<288x80xf32, #tpu.memory_space<any>>) target(%arg26 : memref<288x80xf32, #tpu.memory_space<vmem>>) target_semaphore(%5 : memref<!tpu.dma_semaphore, #tpu.memory_space<semaphore_mem>>)
    %c3_i32 = arith.constant 3 : i32
    %6 = tpu.memref_slice %arg29[%c3_i32] : memref<5x!tpu.dma_semaphore, #tpu.memory_space<semaphore_mem>> -> memref<1x!tpu.dma_semaphore, #tpu.memory_space<semaphore_mem>>
    %7 = tpu.memref_squeeze %6 : memref<1x!tpu.dma_semaphore, #tpu.memory_space<semaphore_mem>> -> memref<!tpu.dma_semaphore, #tpu.memory_space<semaphore_mem>>
    tpu.enqueue_dma source(%arg16 : memref<240x64xf32, #tpu.memory_space<any>>) target(%arg27 : memref<240x64xf32, #tpu.memory_space<vmem>>) target_semaphore(%7 : memref<!tpu.dma_semaphore, #tpu.memory_space<semaphore_mem>>)
    %c4_i32 = arith.constant 4 : i32
    %8 = tpu.memref_slice %arg29[%c4_i32] : memref<5x!tpu.dma_semaphore, #tpu.memory_space<semaphore_mem>> -> memref<1x!tpu.dma_semaphore, #tpu.memory_space<semaphore_mem>>
    %9 = tpu.memref_squeeze %8 : memref<1x!tpu.dma_semaphore, #tpu.memory_space<semaphore_mem>> -> memref<!tpu.dma_semaphore, #tpu.memory_space<semaphore_mem>>
    tpu.enqueue_dma source(%arg21 : memref<192x6xf32, #tpu.memory_space<any>>) target(%arg28 : memref<192x6xf32, #tpu.memory_space<vmem>>) target_semaphore(%9 : memref<!tpu.dma_semaphore, #tpu.memory_space<semaphore_mem>>)
    %c0 = arith.constant 0 : index
    %c0_0 = arith.constant 0 : index
    %10 = vector.load %arg0[%c0, %c0_0] : memref<32x48xf32, #tpu.memory_space<vmem>>, vector<32x48xf32>
    %11 = vector.extract_strided_slice %10 {offsets = [0, 0], sizes = [14, 48], strides = [1, 1]} : vector<32x48xf32> to vector<14x48xf32>
    %12 = vector.extract_strided_slice %10 {offsets = [1, 0], sizes = [14, 48], strides = [1, 1]} : vector<32x48xf32> to vector<14x48xf32>
    %13 = vector.extract_strided_slice %10 {offsets = [2, 0], sizes = [14, 48], strides = [1, 1]} : vector<32x48xf32> to vector<14x48xf32>
    %14 = tpu.concatenate %11, %12, %13 in 1 : vector<14x48xf32>, vector<14x48xf32>, vector<14x48xf32> -> vector<14x144xf32>
    %15 = vector.extract_strided_slice %10 {offsets = [16, 0], sizes = [14, 48], strides = [1, 1]} : vector<32x48xf32> to vector<14x48xf32>
    %16 = vector.extract_strided_slice %10 {offsets = [17, 0], sizes = [14, 48], strides = [1, 1]} : vector<32x48xf32> to vector<14x48xf32>
    %17 = vector.extract_strided_slice %10 {offsets = [18, 0], sizes = [14, 48], strides = [1, 1]} : vector<32x48xf32> to vector<14x48xf32>
    %18 = tpu.concatenate %15, %16, %17 in 1 : vector<14x48xf32>, vector<14x48xf32>, vector<14x48xf32> -> vector<14x144xf32>
    %19 = tpu.concatenate %14, %18 in 0 : vector<14x144xf32>, vector<14x144xf32> -> vector<28x144xf32>
    %c0_i32_1 = arith.constant 0 : i32
    %20 = tpu.memref_slice %arg29[%c0_i32_1] : memref<5x!tpu.dma_semaphore, #tpu.memory_space<semaphore_mem>> -> memref<1x!tpu.dma_semaphore, #tpu.memory_space<semaphore_mem>>
    %21 = tpu.memref_squeeze %20 : memref<1x!tpu.dma_semaphore, #tpu.memory_space<semaphore_mem>> -> memref<!tpu.dma_semaphore, #tpu.memory_space<semaphore_mem>>
    tpu.wait_dma2 semaphore(%21 : memref<!tpu.dma_semaphore, #tpu.memory_space<semaphore_mem>>) src(%arg1 : memref<144x224xf32, #tpu.memory_space<any>>) dst(%arg24 : memref<144x224xf32, #tpu.memory_space<vmem>>)
    %c0_2 = arith.constant 0 : index
    %c0_3 = arith.constant 0 : index
    %22 = vector.load %arg24[%c0_2, %c0_3] : memref<144x224xf32, #tpu.memory_space<vmem>>, vector<144x224xf32>
    %cst = arith.constant dense<0.000000e+00> : vector<28x224xf32>
    %23 = tpu.matmul %19, %22, %cst {dimension_numbers = #tpu.dot_dimension_numbers<[1], [0], [0], [1], [0, 0, 1, 1], [], []>} : vector<28x144xf32>, vector<144x224xf32>, vector<28x224xf32> -> vector<28x224xf32>
    %cst_4 = arith.constant dense<0.000000e+00> : vector<224xf32>
    %24 = vector.multi_reduction <add>, %23, %cst_4 [0] : vector<28x224xf32> to vector<224xf32>
    %25 = vector.shape_cast %24 : vector<224xf32> to vector<1x224xf32>
    %26 = arith.mulf %23, %23 : vector<28x224xf32>
    %cst_5 = arith.constant dense<0.000000e+00> : vector<224xf32>
    %27 = vector.multi_reduction <add>, %26, %cst_5 [0] : vector<28x224xf32> to vector<224xf32>
    %28 = vector.shape_cast %27 : vector<224xf32> to vector<1x224xf32>
    %29 = tpu.concatenate %25, %28 in 0 : vector<1x224xf32>, vector<1x224xf32> -> vector<2x224xf32>
    %c0_6 = arith.constant 0 : index
    %c0_7 = arith.constant 0 : index
    %30 = vector.load %arg4[%c0_6, %c0_7] : memref<224x16xf32, #tpu.memory_space<vmem>>, vector<224x16xf32>
    %cst_8 = arith.constant dense<0.000000e+00> : vector<2x16xf32>
    %31 = tpu.matmul %29, %30, %cst_8 {dimension_numbers = #tpu.dot_dimension_numbers<[1], [0], [0], [1], [0, 0, 1, 1], [], []>} : vector<2x224xf32>, vector<224x16xf32>, vector<2x16xf32> -> vector<2x16xf32>
    %32 = vector.extract_strided_slice %31 {offsets = [0, 0], sizes = [1, 16], strides = [1, 1]} : vector<2x16xf32> to vector<1x16xf32>
    %cst_9 = arith.constant 0.00255102036 : f32
    %33 = vector.broadcast %cst_9 : f32 to vector<1x16xf32>
    %34 = arith.mulf %32, %33 : vector<1x16xf32>
    %35 = vector.extract_strided_slice %31 {offsets = [1, 0], sizes = [1, 16], strides = [1, 1]} : vector<2x16xf32> to vector<1x16xf32>
    %cst_10 = arith.constant 0.00255102036 : f32
    %36 = vector.broadcast %cst_10 : f32 to vector<1x16xf32>
    %37 = arith.mulf %35, %36 : vector<1x16xf32>
    %38 = arith.mulf %34, %34 : vector<1x16xf32>
    %39 = arith.subf %37, %38 : vector<1x16xf32>
    %c0_11 = arith.constant 0 : index
    %c0_12 = arith.constant 0 : index
    %40 = vector.load %arg2[%c0_11, %c0_12] : memref<1x16xf32, #tpu.memory_space<vmem>>, vector<1x16xf32>
    %cst_13 = arith.constant 9.99999974E-6 : f32
    %41 = vector.broadcast %cst_13 : f32 to vector<1x16xf32>
    %42 = arith.addf %39, %41 : vector<1x16xf32>
    %43 = math.rsqrt %42 : vector<1x16xf32>
    %44 = arith.mulf %40, %43 : vector<1x16xf32>
    %c0_14 = arith.constant 0 : index
    %c0_15 = arith.constant 0 : index
    %45 = vector.load %arg3[%c0_14, %c0_15] : memref<1x16xf32, #tpu.memory_space<vmem>>, vector<1x16xf32>
    %46 = arith.mulf %34, %44 : vector<1x16xf32>
    %47 = arith.subf %45, %46 : vector<1x16xf32>
    %48 = tpu.concatenate %44, %47 in 0 : vector<1x16xf32>, vector<1x16xf32> -> vector<2x16xf32>
    %c0_16 = arith.constant 0 : index
    %c0_17 = arith.constant 0 : index
    %49 = vector.load %arg5[%c0_16, %c0_17] : memref<16x224xf32, #tpu.memory_space<vmem>>, vector<16x224xf32>
    %cst_18 = arith.constant dense<0.000000e+00> : vector<2x224xf32>
    %50 = tpu.matmul %48, %49, %cst_18 {dimension_numbers = #tpu.dot_dimension_numbers<[1], [0], [0], [1], [0, 0, 1, 1], [], []>} : vector<2x16xf32>, vector<16x224xf32>, vector<2x224xf32> -> vector<2x224xf32>
    %51 = vector.extract_strided_slice %50 {offsets = [0, 0], sizes = [1, 224], strides = [1, 1]} : vector<2x224xf32> to vector<1x224xf32>
    %52 = vector.broadcast %51 : vector<1x224xf32> to vector<28x224xf32>
    %53 = arith.mulf %23, %52 : vector<28x224xf32>
    %54 = vector.extract_strided_slice %50 {offsets = [1, 0], sizes = [1, 224], strides = [1, 1]} : vector<2x224xf32> to vector<1x224xf32>
    %55 = vector.broadcast %54 : vector<1x224xf32> to vector<28x224xf32>
    %56 = arith.addf %53, %55 : vector<28x224xf32>
    %cst_19 = arith.constant 0.000000e+00 : f32
    %57 = vector.broadcast %cst_19 : f32 to vector<28x224xf32>
    %58 = arith.cmpf oge, %56, %57 : vector<28x224xf32>
    %cst_20 = arith.constant 2.000000e-01 : f32
    %59 = vector.broadcast %cst_20 : f32 to vector<28x224xf32>
    %60 = arith.mulf %59, %56 : vector<28x224xf32>
    %61 = arith.select %58, %56, %60 : vector<28x224xi1>, vector<28x224xf32>
    %62 = vector.extract_strided_slice %61 {offsets = [0, 0], sizes = [12, 224], strides = [1, 1]} : vector<28x224xf32> to vector<12x224xf32>
    %63 = vector.extract_strided_slice %61 {offsets = [1, 0], sizes = [12, 224], strides = [1, 1]} : vector<28x224xf32> to vector<12x224xf32>
    %64 = vector.extract_strided_slice %61 {offsets = [2, 0], sizes = [12, 224], strides = [1, 1]} : vector<28x224xf32> to vector<12x224xf32>
    %65 = tpu.concatenate %62, %63, %64 in 1 : vector<12x224xf32>, vector<12x224xf32>, vector<12x224xf32> -> vector<12x672xf32>
    %66 = vector.extract_strided_slice %61 {offsets = [14, 0], sizes = [12, 224], strides = [1, 1]} : vector<28x224xf32> to vector<12x224xf32>
    %67 = vector.extract_strided_slice %61 {offsets = [15, 0], sizes = [12, 224], strides = [1, 1]} : vector<28x224xf32> to vector<12x224xf32>
    %68 = vector.extract_strided_slice %61 {offsets = [16, 0], sizes = [12, 224], strides = [1, 1]} : vector<28x224xf32> to vector<12x224xf32>
    %69 = tpu.concatenate %66, %67, %68 in 1 : vector<12x224xf32>, vector<12x224xf32>, vector<12x224xf32> -> vector<12x672xf32>
    %70 = tpu.concatenate %65, %69 in 0 : vector<12x672xf32>, vector<12x672xf32> -> vector<24x672xf32>
    %c1_i32_21 = arith.constant 1 : i32
    %71 = tpu.memref_slice %arg29[%c1_i32_21] : memref<5x!tpu.dma_semaphore, #tpu.memory_space<semaphore_mem>> -> memref<1x!tpu.dma_semaphore, #tpu.memory_space<semaphore_mem>>
    %72 = tpu.memref_squeeze %71 : memref<1x!tpu.dma_semaphore, #tpu.memory_space<semaphore_mem>> -> memref<!tpu.dma_semaphore, #tpu.memory_space<semaphore_mem>>
    tpu.wait_dma2 semaphore(%72 : memref<!tpu.dma_semaphore, #tpu.memory_space<semaphore_mem>>) src(%arg6 : memref<672x96xf32, #tpu.memory_space<any>>) dst(%arg25 : memref<672x96xf32, #tpu.memory_space<vmem>>)
    %c0_22 = arith.constant 0 : index
    %c0_23 = arith.constant 0 : index
    %73 = vector.load %arg25[%c0_22, %c0_23] : memref<672x96xf32, #tpu.memory_space<vmem>>, vector<672x96xf32>
    %cst_24 = arith.constant dense<0.000000e+00> : vector<24x96xf32>
    %74 = tpu.matmul %70, %73, %cst_24 {dimension_numbers = #tpu.dot_dimension_numbers<[1], [0], [0], [1], [0, 0, 1, 1], [], []>} : vector<24x672xf32>, vector<672x96xf32>, vector<24x96xf32> -> vector<24x96xf32>
    %cst_25 = arith.constant dense<0.000000e+00> : vector<96xf32>
    %75 = vector.multi_reduction <add>, %74, %cst_25 [0] : vector<24x96xf32> to vector<96xf32>
    %76 = vector.shape_cast %75 : vector<96xf32> to vector<1x96xf32>
    %77 = arith.mulf %74, %74 : vector<24x96xf32>
    %cst_26 = arith.constant dense<0.000000e+00> : vector<96xf32>
    %78 = vector.multi_reduction <add>, %77, %cst_26 [0] : vector<24x96xf32> to vector<96xf32>
    %79 = vector.shape_cast %78 : vector<96xf32> to vector<1x96xf32>
    %80 = tpu.concatenate %76, %79 in 0 : vector<1x96xf32>, vector<1x96xf32> -> vector<2x96xf32>
    %c0_27 = arith.constant 0 : index
    %c0_28 = arith.constant 0 : index
    %81 = vector.load %arg9[%c0_27, %c0_28] : memref<96x8xf32, #tpu.memory_space<vmem>>, vector<96x8xf32>
    %cst_29 = arith.constant dense<0.000000e+00> : vector<2x8xf32>
    %82 = tpu.matmul %80, %81, %cst_29 {dimension_numbers = #tpu.dot_dimension_numbers<[1], [0], [0], [1], [0, 0, 1, 1], [], []>} : vector<2x96xf32>, vector<96x8xf32>, vector<2x8xf32> -> vector<2x8xf32>
    %83 = vector.extract_strided_slice %82 {offsets = [0, 0], sizes = [1, 8], strides = [1, 1]} : vector<2x8xf32> to vector<1x8xf32>
    %cst_30 = arith.constant 0.00347222225 : f32
    %84 = vector.broadcast %cst_30 : f32 to vector<1x8xf32>
    %85 = arith.mulf %83, %84 : vector<1x8xf32>
    %86 = vector.extract_strided_slice %82 {offsets = [1, 0], sizes = [1, 8], strides = [1, 1]} : vector<2x8xf32> to vector<1x8xf32>
    %cst_31 = arith.constant 0.00347222225 : f32
    %87 = vector.broadcast %cst_31 : f32 to vector<1x8xf32>
    %88 = arith.mulf %86, %87 : vector<1x8xf32>
    %89 = arith.mulf %85, %85 : vector<1x8xf32>
    %90 = arith.subf %88, %89 : vector<1x8xf32>
    %c0_32 = arith.constant 0 : index
    %c0_33 = arith.constant 0 : index
    %91 = vector.load %arg7[%c0_32, %c0_33] : memref<1x8xf32, #tpu.memory_space<vmem>>, vector<1x8xf32>
    %cst_34 = arith.constant 9.99999974E-6 : f32
    %92 = vector.broadcast %cst_34 : f32 to vector<1x8xf32>
    %93 = arith.addf %90, %92 : vector<1x8xf32>
    %94 = math.rsqrt %93 : vector<1x8xf32>
    %95 = arith.mulf %91, %94 : vector<1x8xf32>
    %c0_35 = arith.constant 0 : index
    %c0_36 = arith.constant 0 : index
    %96 = vector.load %arg8[%c0_35, %c0_36] : memref<1x8xf32, #tpu.memory_space<vmem>>, vector<1x8xf32>
    %97 = arith.mulf %85, %95 : vector<1x8xf32>
    %98 = arith.subf %96, %97 : vector<1x8xf32>
    %99 = tpu.concatenate %95, %98 in 0 : vector<1x8xf32>, vector<1x8xf32> -> vector<2x8xf32>
    %c0_37 = arith.constant 0 : index
    %c0_38 = arith.constant 0 : index
    %100 = vector.load %arg10[%c0_37, %c0_38] : memref<8x96xf32, #tpu.memory_space<vmem>>, vector<8x96xf32>
    %cst_39 = arith.constant dense<0.000000e+00> : vector<2x96xf32>
    %101 = tpu.matmul %99, %100, %cst_39 {dimension_numbers = #tpu.dot_dimension_numbers<[1], [0], [0], [1], [0, 0, 1, 1], [], []>} : vector<2x8xf32>, vector<8x96xf32>, vector<2x96xf32> -> vector<2x96xf32>
    %102 = vector.extract_strided_slice %101 {offsets = [0, 0], sizes = [1, 96], strides = [1, 1]} : vector<2x96xf32> to vector<1x96xf32>
    %103 = vector.broadcast %102 : vector<1x96xf32> to vector<24x96xf32>
    %104 = arith.mulf %74, %103 : vector<24x96xf32>
    %105 = vector.extract_strided_slice %101 {offsets = [1, 0], sizes = [1, 96], strides = [1, 1]} : vector<2x96xf32> to vector<1x96xf32>
    %106 = vector.broadcast %105 : vector<1x96xf32> to vector<24x96xf32>
    %107 = arith.addf %104, %106 : vector<24x96xf32>
    %cst_40 = arith.constant 0.000000e+00 : f32
    %108 = vector.broadcast %cst_40 : f32 to vector<24x96xf32>
    %109 = arith.cmpf oge, %107, %108 : vector<24x96xf32>
    %cst_41 = arith.constant 2.000000e-01 : f32
    %110 = vector.broadcast %cst_41 : f32 to vector<24x96xf32>
    %111 = arith.mulf %110, %107 : vector<24x96xf32>
    %112 = arith.select %109, %107, %111 : vector<24x96xi1>, vector<24x96xf32>
    %113 = vector.extract_strided_slice %112 {offsets = [0, 0], sizes = [10, 96], strides = [1, 1]} : vector<24x96xf32> to vector<10x96xf32>
    %114 = vector.extract_strided_slice %112 {offsets = [1, 0], sizes = [10, 96], strides = [1, 1]} : vector<24x96xf32> to vector<10x96xf32>
    %115 = vector.extract_strided_slice %112 {offsets = [2, 0], sizes = [10, 96], strides = [1, 1]} : vector<24x96xf32> to vector<10x96xf32>
    %116 = tpu.concatenate %113, %114, %115 in 1 : vector<10x96xf32>, vector<10x96xf32>, vector<10x96xf32> -> vector<10x288xf32>
    %117 = vector.extract_strided_slice %112 {offsets = [12, 0], sizes = [10, 96], strides = [1, 1]} : vector<24x96xf32> to vector<10x96xf32>
    %118 = vector.extract_strided_slice %112 {offsets = [13, 0], sizes = [10, 96], strides = [1, 1]} : vector<24x96xf32> to vector<10x96xf32>
    %119 = vector.extract_strided_slice %112 {offsets = [14, 0], sizes = [10, 96], strides = [1, 1]} : vector<24x96xf32> to vector<10x96xf32>
    %120 = tpu.concatenate %117, %118, %119 in 1 : vector<10x96xf32>, vector<10x96xf32>, vector<10x96xf32> -> vector<10x288xf32>
    %121 = tpu.concatenate %116, %120 in 0 : vector<10x288xf32>, vector<10x288xf32> -> vector<20x288xf32>
    %c2_i32_42 = arith.constant 2 : i32
    %122 = tpu.memref_slice %arg29[%c2_i32_42] : memref<5x!tpu.dma_semaphore, #tpu.memory_space<semaphore_mem>> -> memref<1x!tpu.dma_semaphore, #tpu.memory_space<semaphore_mem>>
    %123 = tpu.memref_squeeze %122 : memref<1x!tpu.dma_semaphore, #tpu.memory_space<semaphore_mem>> -> memref<!tpu.dma_semaphore, #tpu.memory_space<semaphore_mem>>
    tpu.wait_dma2 semaphore(%123 : memref<!tpu.dma_semaphore, #tpu.memory_space<semaphore_mem>>) src(%arg11 : memref<288x80xf32, #tpu.memory_space<any>>) dst(%arg26 : memref<288x80xf32, #tpu.memory_space<vmem>>)
    %c0_43 = arith.constant 0 : index
    %c0_44 = arith.constant 0 : index
    %124 = vector.load %arg26[%c0_43, %c0_44] : memref<288x80xf32, #tpu.memory_space<vmem>>, vector<288x80xf32>
    %cst_45 = arith.constant dense<0.000000e+00> : vector<20x80xf32>
    %125 = tpu.matmul %121, %124, %cst_45 {dimension_numbers = #tpu.dot_dimension_numbers<[1], [0], [0], [1], [0, 0, 1, 1], [], []>} : vector<20x288xf32>, vector<288x80xf32>, vector<20x80xf32> -> vector<20x80xf32>
    %cst_46 = arith.constant dense<0.000000e+00> : vector<80xf32>
    %126 = vector.multi_reduction <add>, %125, %cst_46 [0] : vector<20x80xf32> to vector<80xf32>
    %127 = vector.shape_cast %126 : vector<80xf32> to vector<1x80xf32>
    %128 = arith.mulf %125, %125 : vector<20x80xf32>
    %cst_47 = arith.constant dense<0.000000e+00> : vector<80xf32>
    %129 = vector.multi_reduction <add>, %128, %cst_47 [0] : vector<20x80xf32> to vector<80xf32>
    %130 = vector.shape_cast %129 : vector<80xf32> to vector<1x80xf32>
    %131 = tpu.concatenate %127, %130 in 0 : vector<1x80xf32>, vector<1x80xf32> -> vector<2x80xf32>
    %c0_48 = arith.constant 0 : index
    %c0_49 = arith.constant 0 : index
    %132 = vector.load %arg14[%c0_48, %c0_49] : memref<80x8xf32, #tpu.memory_space<vmem>>, vector<80x8xf32>
    %cst_50 = arith.constant dense<0.000000e+00> : vector<2x8xf32>
    %133 = tpu.matmul %131, %132, %cst_50 {dimension_numbers = #tpu.dot_dimension_numbers<[1], [0], [0], [1], [0, 0, 1, 1], [], []>} : vector<2x80xf32>, vector<80x8xf32>, vector<2x8xf32> -> vector<2x8xf32>
    %134 = vector.extract_strided_slice %133 {offsets = [0, 0], sizes = [1, 8], strides = [1, 1]} : vector<2x8xf32> to vector<1x8xf32>
    %cst_51 = arith.constant 5.000000e-03 : f32
    %135 = vector.broadcast %cst_51 : f32 to vector<1x8xf32>
    %136 = arith.mulf %134, %135 : vector<1x8xf32>
    %137 = vector.extract_strided_slice %133 {offsets = [1, 0], sizes = [1, 8], strides = [1, 1]} : vector<2x8xf32> to vector<1x8xf32>
    %cst_52 = arith.constant 5.000000e-03 : f32
    %138 = vector.broadcast %cst_52 : f32 to vector<1x8xf32>
    %139 = arith.mulf %137, %138 : vector<1x8xf32>
    %140 = arith.mulf %136, %136 : vector<1x8xf32>
    %141 = arith.subf %139, %140 : vector<1x8xf32>
    %c0_53 = arith.constant 0 : index
    %c0_54 = arith.constant 0 : index
    %142 = vector.load %arg12[%c0_53, %c0_54] : memref<1x8xf32, #tpu.memory_space<vmem>>, vector<1x8xf32>
    %cst_55 = arith.constant 9.99999974E-6 : f32
    %143 = vector.broadcast %cst_55 : f32 to vector<1x8xf32>
    %144 = arith.addf %141, %143 : vector<1x8xf32>
    %145 = math.rsqrt %144 : vector<1x8xf32>
    %146 = arith.mulf %142, %145 : vector<1x8xf32>
    %c0_56 = arith.constant 0 : index
    %c0_57 = arith.constant 0 : index
    %147 = vector.load %arg13[%c0_56, %c0_57] : memref<1x8xf32, #tpu.memory_space<vmem>>, vector<1x8xf32>
    %148 = arith.mulf %136, %146 : vector<1x8xf32>
    %149 = arith.subf %147, %148 : vector<1x8xf32>
    %150 = tpu.concatenate %146, %149 in 0 : vector<1x8xf32>, vector<1x8xf32> -> vector<2x8xf32>
    %c0_58 = arith.constant 0 : index
    %c0_59 = arith.constant 0 : index
    %151 = vector.load %arg15[%c0_58, %c0_59] : memref<8x80xf32, #tpu.memory_space<vmem>>, vector<8x80xf32>
    %cst_60 = arith.constant dense<0.000000e+00> : vector<2x80xf32>
    %152 = tpu.matmul %150, %151, %cst_60 {dimension_numbers = #tpu.dot_dimension_numbers<[1], [0], [0], [1], [0, 0, 1, 1], [], []>} : vector<2x8xf32>, vector<8x80xf32>, vector<2x80xf32> -> vector<2x80xf32>
    %153 = vector.extract_strided_slice %152 {offsets = [0, 0], sizes = [1, 80], strides = [1, 1]} : vector<2x80xf32> to vector<1x80xf32>
    %154 = vector.broadcast %153 : vector<1x80xf32> to vector<20x80xf32>
    %155 = arith.mulf %125, %154 : vector<20x80xf32>
    %156 = vector.extract_strided_slice %152 {offsets = [1, 0], sizes = [1, 80], strides = [1, 1]} : vector<2x80xf32> to vector<1x80xf32>
    %157 = vector.broadcast %156 : vector<1x80xf32> to vector<20x80xf32>
    %158 = arith.addf %155, %157 : vector<20x80xf32>
    %cst_61 = arith.constant 0.000000e+00 : f32
    %159 = vector.broadcast %cst_61 : f32 to vector<20x80xf32>
    %160 = arith.cmpf oge, %158, %159 : vector<20x80xf32>
    %cst_62 = arith.constant 2.000000e-01 : f32
    %161 = vector.broadcast %cst_62 : f32 to vector<20x80xf32>
    %162 = arith.mulf %161, %158 : vector<20x80xf32>
    %163 = arith.select %160, %158, %162 : vector<20x80xi1>, vector<20x80xf32>
    %164 = vector.extract_strided_slice %163 {offsets = [0, 0], sizes = [8, 80], strides = [1, 1]} : vector<20x80xf32> to vector<8x80xf32>
    %165 = vector.extract_strided_slice %163 {offsets = [1, 0], sizes = [8, 80], strides = [1, 1]} : vector<20x80xf32> to vector<8x80xf32>
    %166 = vector.extract_strided_slice %163 {offsets = [2, 0], sizes = [8, 80], strides = [1, 1]} : vector<20x80xf32> to vector<8x80xf32>
    %167 = tpu.concatenate %164, %165, %166 in 1 : vector<8x80xf32>, vector<8x80xf32>, vector<8x80xf32> -> vector<8x240xf32>
    %168 = vector.extract_strided_slice %163 {offsets = [10, 0], sizes = [8, 80], strides = [1, 1]} : vector<20x80xf32> to vector<8x80xf32>
    %169 = vector.extract_strided_slice %163 {offsets = [11, 0], sizes = [8, 80], strides = [1, 1]} : vector<20x80xf32> to vector<8x80xf32>
    %170 = vector.extract_strided_slice %163 {offsets = [12, 0], sizes = [8, 80], strides = [1, 1]} : vector<20x80xf32> to vector<8x80xf32>
    %171 = tpu.concatenate %168, %169, %170 in 1 : vector<8x80xf32>, vector<8x80xf32>, vector<8x80xf32> -> vector<8x240xf32>
    %172 = tpu.concatenate %167, %171 in 0 : vector<8x240xf32>, vector<8x240xf32> -> vector<16x240xf32>
    %c3_i32_63 = arith.constant 3 : i32
    %173 = tpu.memref_slice %arg29[%c3_i32_63] : memref<5x!tpu.dma_semaphore, #tpu.memory_space<semaphore_mem>> -> memref<1x!tpu.dma_semaphore, #tpu.memory_space<semaphore_mem>>
    %174 = tpu.memref_squeeze %173 : memref<1x!tpu.dma_semaphore, #tpu.memory_space<semaphore_mem>> -> memref<!tpu.dma_semaphore, #tpu.memory_space<semaphore_mem>>
    tpu.wait_dma2 semaphore(%174 : memref<!tpu.dma_semaphore, #tpu.memory_space<semaphore_mem>>) src(%arg16 : memref<240x64xf32, #tpu.memory_space<any>>) dst(%arg27 : memref<240x64xf32, #tpu.memory_space<vmem>>)
    %c0_64 = arith.constant 0 : index
    %c0_65 = arith.constant 0 : index
    %175 = vector.load %arg27[%c0_64, %c0_65] : memref<240x64xf32, #tpu.memory_space<vmem>>, vector<240x64xf32>
    %cst_66 = arith.constant dense<0.000000e+00> : vector<16x64xf32>
    %176 = tpu.matmul %172, %175, %cst_66 {dimension_numbers = #tpu.dot_dimension_numbers<[1], [0], [0], [1], [0, 0, 1, 1], [], []>} : vector<16x240xf32>, vector<240x64xf32>, vector<16x64xf32> -> vector<16x64xf32>
    %cst_67 = arith.constant dense<0.000000e+00> : vector<64xf32>
    %177 = vector.multi_reduction <add>, %176, %cst_67 [0] : vector<16x64xf32> to vector<64xf32>
    %178 = vector.shape_cast %177 : vector<64xf32> to vector<1x64xf32>
    %179 = arith.mulf %176, %176 : vector<16x64xf32>
    %cst_68 = arith.constant dense<0.000000e+00> : vector<64xf32>
    %180 = vector.multi_reduction <add>, %179, %cst_68 [0] : vector<16x64xf32> to vector<64xf32>
    %181 = vector.shape_cast %180 : vector<64xf32> to vector<1x64xf32>
    %182 = tpu.concatenate %178, %181 in 0 : vector<1x64xf32>, vector<1x64xf32> -> vector<2x64xf32>
    %c0_69 = arith.constant 0 : index
    %c0_70 = arith.constant 0 : index
    %183 = vector.load %arg19[%c0_69, %c0_70] : memref<64x8xf32, #tpu.memory_space<vmem>>, vector<64x8xf32>
    %cst_71 = arith.constant dense<0.000000e+00> : vector<2x8xf32>
    %184 = tpu.matmul %182, %183, %cst_71 {dimension_numbers = #tpu.dot_dimension_numbers<[1], [0], [0], [1], [0, 0, 1, 1], [], []>} : vector<2x64xf32>, vector<64x8xf32>, vector<2x8xf32> -> vector<2x8xf32>
    %185 = vector.extract_strided_slice %184 {offsets = [0, 0], sizes = [1, 8], strides = [1, 1]} : vector<2x8xf32> to vector<1x8xf32>
    %cst_72 = arith.constant 7.812500e-03 : f32
    %186 = vector.broadcast %cst_72 : f32 to vector<1x8xf32>
    %187 = arith.mulf %185, %186 : vector<1x8xf32>
    %188 = vector.extract_strided_slice %184 {offsets = [1, 0], sizes = [1, 8], strides = [1, 1]} : vector<2x8xf32> to vector<1x8xf32>
    %cst_73 = arith.constant 7.812500e-03 : f32
    %189 = vector.broadcast %cst_73 : f32 to vector<1x8xf32>
    %190 = arith.mulf %188, %189 : vector<1x8xf32>
    %191 = arith.mulf %187, %187 : vector<1x8xf32>
    %192 = arith.subf %190, %191 : vector<1x8xf32>
    %c0_74 = arith.constant 0 : index
    %c0_75 = arith.constant 0 : index
    %193 = vector.load %arg17[%c0_74, %c0_75] : memref<1x8xf32, #tpu.memory_space<vmem>>, vector<1x8xf32>
    %cst_76 = arith.constant 9.99999974E-6 : f32
    %194 = vector.broadcast %cst_76 : f32 to vector<1x8xf32>
    %195 = arith.addf %192, %194 : vector<1x8xf32>
    %196 = math.rsqrt %195 : vector<1x8xf32>
    %197 = arith.mulf %193, %196 : vector<1x8xf32>
    %c0_77 = arith.constant 0 : index
    %c0_78 = arith.constant 0 : index
    %198 = vector.load %arg18[%c0_77, %c0_78] : memref<1x8xf32, #tpu.memory_space<vmem>>, vector<1x8xf32>
    %199 = arith.mulf %187, %197 : vector<1x8xf32>
    %200 = arith.subf %198, %199 : vector<1x8xf32>
    %201 = tpu.concatenate %197, %200 in 0 : vector<1x8xf32>, vector<1x8xf32> -> vector<2x8xf32>
    %c0_79 = arith.constant 0 : index
    %c0_80 = arith.constant 0 : index
    %202 = vector.load %arg20[%c0_79, %c0_80] : memref<8x64xf32, #tpu.memory_space<vmem>>, vector<8x64xf32>
    %cst_81 = arith.constant dense<0.000000e+00> : vector<2x64xf32>
    %203 = tpu.matmul %201, %202, %cst_81 {dimension_numbers = #tpu.dot_dimension_numbers<[1], [0], [0], [1], [0, 0, 1, 1], [], []>} : vector<2x8xf32>, vector<8x64xf32>, vector<2x64xf32> -> vector<2x64xf32>
    %204 = vector.extract_strided_slice %203 {offsets = [0, 0], sizes = [1, 64], strides = [1, 1]} : vector<2x64xf32> to vector<1x64xf32>
    %205 = vector.broadcast %204 : vector<1x64xf32> to vector<16x64xf32>
    %206 = arith.mulf %176, %205 : vector<16x64xf32>
    %207 = vector.extract_strided_slice %203 {offsets = [1, 0], sizes = [1, 64], strides = [1, 1]} : vector<2x64xf32> to vector<1x64xf32>
    %208 = vector.broadcast %207 : vector<1x64xf32> to vector<16x64xf32>
    %209 = arith.addf %206, %208 : vector<16x64xf32>
    %cst_82 = arith.constant 0.000000e+00 : f32
    %210 = vector.broadcast %cst_82 : f32 to vector<16x64xf32>
    %211 = arith.cmpf oge, %209, %210 : vector<16x64xf32>
    %cst_83 = arith.constant 2.000000e-01 : f32
    %212 = vector.broadcast %cst_83 : f32 to vector<16x64xf32>
    %213 = arith.mulf %212, %209 : vector<16x64xf32>
    %214 = arith.select %211, %209, %213 : vector<16x64xi1>, vector<16x64xf32>
    %215 = vector.extract_strided_slice %214 {offsets = [0, 0], sizes = [6, 64], strides = [1, 1]} : vector<16x64xf32> to vector<6x64xf32>
    %216 = vector.extract_strided_slice %214 {offsets = [1, 0], sizes = [6, 64], strides = [1, 1]} : vector<16x64xf32> to vector<6x64xf32>
    %217 = vector.extract_strided_slice %214 {offsets = [2, 0], sizes = [6, 64], strides = [1, 1]} : vector<16x64xf32> to vector<6x64xf32>
    %218 = tpu.concatenate %215, %216, %217 in 1 : vector<6x64xf32>, vector<6x64xf32>, vector<6x64xf32> -> vector<6x192xf32>
    %219 = vector.extract_strided_slice %214 {offsets = [8, 0], sizes = [6, 64], strides = [1, 1]} : vector<16x64xf32> to vector<6x64xf32>
    %220 = vector.extract_strided_slice %214 {offsets = [9, 0], sizes = [6, 64], strides = [1, 1]} : vector<16x64xf32> to vector<6x64xf32>
    %221 = vector.extract_strided_slice %214 {offsets = [10, 0], sizes = [6, 64], strides = [1, 1]} : vector<16x64xf32> to vector<6x64xf32>
    %222 = tpu.concatenate %219, %220, %221 in 1 : vector<6x64xf32>, vector<6x64xf32>, vector<6x64xf32> -> vector<6x192xf32>
    %223 = tpu.concatenate %218, %222 in 0 : vector<6x192xf32>, vector<6x192xf32> -> vector<12x192xf32>
    %c4_i32_84 = arith.constant 4 : i32
    %224 = tpu.memref_slice %arg29[%c4_i32_84] : memref<5x!tpu.dma_semaphore, #tpu.memory_space<semaphore_mem>> -> memref<1x!tpu.dma_semaphore, #tpu.memory_space<semaphore_mem>>
    %225 = tpu.memref_squeeze %224 : memref<1x!tpu.dma_semaphore, #tpu.memory_space<semaphore_mem>> -> memref<!tpu.dma_semaphore, #tpu.memory_space<semaphore_mem>>
    tpu.wait_dma2 semaphore(%225 : memref<!tpu.dma_semaphore, #tpu.memory_space<semaphore_mem>>) src(%arg21 : memref<192x6xf32, #tpu.memory_space<any>>) dst(%arg28 : memref<192x6xf32, #tpu.memory_space<vmem>>)
    %c0_85 = arith.constant 0 : index
    %c0_86 = arith.constant 0 : index
    %226 = vector.load %arg28[%c0_85, %c0_86] : memref<192x6xf32, #tpu.memory_space<vmem>>, vector<192x6xf32>
    %cst_87 = arith.constant dense<0.000000e+00> : vector<12x6xf32>
    %227 = tpu.matmul %223, %226, %cst_87 {dimension_numbers = #tpu.dot_dimension_numbers<[1], [0], [0], [1], [0, 0, 1, 1], [], []>} : vector<12x192xf32>, vector<192x6xf32>, vector<12x6xf32> -> vector<12x6xf32>
    %c0_88 = arith.constant 0 : index
    %c0_89 = arith.constant 0 : index
    %228 = vector.load %arg22[%c0_88, %c0_89] : memref<1x6xf32, #tpu.memory_space<vmem>>, vector<1x6xf32>
    %229 = vector.broadcast %228 : vector<1x6xf32> to vector<12x6xf32>
    %230 = arith.addf %227, %229 : vector<12x6xf32>
    %c0_90 = arith.constant 0 : index
    %c0_91 = arith.constant 0 : index
    %231 = vector.load %arg23[%c0_90, %c0_91] : memref<12x6xf32, #tpu.memory_space<vmem>>, vector<12x6xf32>
    tpu.vector_store %arg23[%c0_90, %c0_91], %230 {strides = array<i32>} : memref<12x6xf32, #tpu.memory_space<vmem>>, vector<12x6xf32>,
    return
  }
}

</mosaic_0001>

<llo_original>
// kernel: wdiscriminator_forward.1
$region0: #{wdiscriminator_forward.1}
  #allocation0 [shape = 'u32[]', space=smem, size = 0x4, offset = 0x4, fixed_abs, tag = 'smem constant byte address 0x4 - core index']
  #allocation1 [shape = 'u32[144,128]{1,0:T(1,128)}', space=vmem, size = 0x12000, scoped, tag = 'internal scratch']
  #allocation2 [shape = 'f32[144,224]{1,0:T(8,128)}', space=vmem, size = 0x24000, scoped, tag = 'scratch operand']
  #allocation3 [shape = 'f32[672,96]{1,0:T(8,128)}', space=vmem, size = 0x54000, scoped, tag = 'scratch operand']
  #allocation4 [shape = 'f32[288,80]{1,0:T(8,128)}', space=vmem, size = 0x24000, scoped, tag = 'scratch operand']
  #allocation5 [shape = 'f32[240,64]{1,0:T(8,128)}', space=vmem, size = 0x1e000, scoped, tag = 'scratch operand']
  #allocation6 [shape = 'f32[192,6]{1,0:T(8,128)}', space=vmem, size = 0x18000, scoped, tag = 'scratch operand']
  #allocation7 [shape = 's32[5]{0}', space=sflag, size = 0x14, scoped, tag = 'scratch operand']
  #allocation8 [shape = 's32[]', space=sflag, size = 0x4, offset = 0, fixed_abs, tag = 'sflag constant byte address 0x0 - dummy sync flag']
  #allocation9 [shape = 's32[]', space=sflag, size = 0x4, offset = 0, fixed_abs, tag = 'sflag constant byte address 0x0 - dummy sync flag']
  #allocation10 [shape = 's32[]', space=sflag, size = 0x4, offset = 0, fixed_abs, tag = 'sflag constant byte address 0x0 - dummy sync flag']
  #allocation11 [shape = 's32[]', space=sflag, size = 0x4, offset = 0, fixed_abs, tag = 'sflag constant byte address 0x0 - dummy sync flag']
  #allocation12 [shape = 's32[]', space=sflag, size = 0x4, offset = 0, fixed_abs, tag = 'sflag constant byte address 0x0 - dummy sync flag']
  %s0 = inlined_call_operand.vmem [shape: f32[32,48], index: 0, kind: input, shape index: {}]
  %s1 = inlined_call_operand.vmem [shape: f32[144,224], index: 1, kind: input, shape index: {}]
  %s2 = inlined_call_operand.vmem [shape: f32[1,16], index: 2, kind: input, shape index: {}]
  %s3 = inlined_call_operand.vmem [shape: f32[1,16], index: 3, kind: input, shape index: {}]
  %s4 = inlined_call_operand.vmem [shape: f32[224,16], index: 4, kind: input, shape index: {}]
  %s5 = inlined_call_operand.vmem [shape: f32[16,224], index: 5, kind: input, shape index: {}]
  %s6 = inlined_call_operand.vmem [shape: f32[672,96], index: 6, kind: input, shape index: {}]
  %s7 = inlined_call_operand.vmem [shape: f32[1,8], index: 7, kind: input, shape index: {}]
  %s8 = inlined_call_operand.vmem [shape: f32[1,8], index: 8, kind: input, shape index: {}]
  %s9 = inlined_call_operand.vmem [shape: f32[96,8], index: 9, kind: input, shape index: {}]
  %s10 = inlined_call_operand.vmem [shape: f32[8,96], index: 10, kind: input, shape index: {}]
  %s11 = inlined_call_operand.vmem [shape: f32[288,80], index: 11, kind: input, shape index: {}]
  %s12 = inlined_call_operand.vmem [shape: f32[1,8], index: 12, kind: input, shape index: {}]
  %s13 = inlined_call_operand.vmem [shape: f32[1,8], index: 13, kind: input, shape index: {}]
  %s14 = inlined_call_operand.vmem [shape: f32[80,8], index: 14, kind: input, shape index: {}]
  %s15 = inlined_call_operand.vmem [shape: f32[8,80], index: 15, kind: input, shape index: {}]
  %s16 = inlined_call_operand.vmem [shape: f32[240,64], index: 16, kind: input, shape index: {}]
  %s17 = inlined_call_operand.vmem [shape: f32[1,8], index: 17, kind: input, shape index: {}]
  %s18 = inlined_call_operand.vmem [shape: f32[1,8], index: 18, kind: input, shape index: {}]
  %s19 = inlined_call_operand.vmem [shape: f32[64,8], index: 19, kind: input, shape index: {}]
  %s20 = inlined_call_operand.vmem [shape: f32[8,64], index: 20, kind: input, shape index: {}]
  %s21 = inlined_call_operand.vmem [shape: f32[192,6], index: 21, kind: input, shape index: {}]
  %s22 = inlined_call_operand.vmem [shape: f32[1,6], index: 22, kind: input, shape index: {}]
  %s23 = inlined_call_operand.vmem [shape: f32[12,6], index: 23, kind: output, shape index: {}]
  %s24 = sld [smem:[#allocation0]]
  $region252: #{wdiscriminator_forward.1} parent=0
    _
  %s26 = ssub.s32 1, %s24
  %s27 = scalar_select 0, %s26, %s24
  // Predicated region
  $region2: #{wdiscriminator_forward.1} parent=0 // pred_check
    _
  $region3: #{wdiscriminator_forward.1} parent=0 // pred_check_branch
    %29 = sbr.rel (0) target = $region5
  $region4: #{wdiscriminator_forward.1} parent=0 // pred_region
    _
  $region5: #{wdiscriminator_forward.1} parent=0 // pred_fallthru
    _
  // Predicated region
  $region6: #{wdiscriminator_forward.1} parent=0 // pred_check
    _
  $region7: #{wdiscriminator_forward.1} parent=0 // pred_check_branch
    %31 = sbr.rel (0) target = $region9
  $region8: #{wdiscriminator_forward.1} parent=0 // pred_region
    _
  $region9: #{wdiscriminator_forward.1} parent=0 // pred_fallthru
    _
  // Predicated region
  $region10: #{wdiscriminator_forward.1} parent=0 // pred_check
    _
  $region11: #{wdiscriminator_forward.1} parent=0 // pred_check_branch
    %33 = sbr.rel (0) target = $region13
  $region12: #{wdiscriminator_forward.1} parent=0 // pred_region
    _
  $region13: #{wdiscriminator_forward.1} parent=0 // pred_fallthru
    _
  // Predicated region
  $region14: #{wdiscriminator_forward.1} parent=0 // pred_check
    _
  $region15: #{wdiscriminator_forward.1} parent=0 // pred_check_branch
    %35 = sbr.rel (0) target = $region17
  $region16: #{wdiscriminator_forward.1} parent=0 // pred_region
    _
  $region17: #{wdiscriminator_forward.1} parent=0 // pred_fallthru
    _
  // Predicated region
  $region18: #{wdiscriminator_forward.1} parent=0 // pred_check
    _
  $region19: #{wdiscriminator_forward.1} parent=0 // pred_check_branch
    %37 = sbr.rel (0) target = $region21
  $region20: #{wdiscriminator_forward.1} parent=0 // pred_region
    _
  $region21: #{wdiscriminator_forward.1} parent=0 // pred_fallthru
    _
  // Predicated region
  $region22: #{wdiscriminator_forward.1} parent=0 // pred_check
    _
  $region23: #{wdiscriminator_forward.1} parent=0 // pred_check_branch
    %39 = sbr.rel (0) target = $region25
  $region24: #{wdiscriminator_forward.1} parent=0 // pred_region
    _
  $region25: #{wdiscriminator_forward.1} parent=0 // pred_fallthru
    _
  // Predicated region
  $region26: #{wdiscriminator_forward.1} parent=0 // pred_check
    _
  $region27: #{wdiscriminator_forward.1} parent=0 // pred_check_branch
    %41 = sbr.rel (0) target = $region29
  $region28: #{wdiscriminator_forward.1} parent=0 // pred_region
    _
  $region29: #{wdiscriminator_forward.1} parent=0 // pred_fallthru
    _
  // Predicated region
  $region30: #{wdiscriminator_forward.1} parent=0 // pred_check
    _
  $region31: #{wdiscriminator_forward.1} parent=0 // pred_check_branch
    %43 = sbr.rel (0) target = $region33
  $region32: #{wdiscriminator_forward.1} parent=0 // pred_region
    _
  $region33: #{wdiscriminator_forward.1} parent=0 // pred_fallthru
    _
  // Predicated region
  $region34: #{wdiscriminator_forward.1} parent=0 // pred_check
    _
  $region35: #{wdiscriminator_forward.1} parent=0 // pred_check_branch
    %45 = sbr.rel (0) target = $region37
  $region36: #{wdiscriminator_forward.1} parent=0 // pred_region
    _
  $region37: #{wdiscriminator_forward.1} parent=0 // pred_fallthru
    _
  // Predicated region
  $region38: #{wdiscriminator_forward.1} parent=0 // pred_check
    _
  $region39: #{wdiscriminator_forward.1} parent=0 // pred_check_branch
    %47 = sbr.rel (0) target = $region41
  $region40: #{wdiscriminator_forward.1} parent=0 // pred_region
    _
  $region41: #{wdiscriminator_forward.1} parent=0 // pred_fallthru
    _
  // Predicated region
  $region42: #{wdiscriminator_forward.1} parent=0 // pred_check
    _
  $region43: #{wdiscriminator_forward.1} parent=0 // pred_check_branch
    %49 = sbr.rel (0) target = $region45
  $region44: #{wdiscriminator_forward.1} parent=0 // pred_region
    _
  $region45: #{wdiscriminator_forward.1} parent=0 // pred_fallthru
    _
  // Predicated region
  $region46: #{wdiscriminator_forward.1} parent=0 // pred_check
    _
  $region47: #{wdiscriminator_forward.1} parent=0 // pred_check_branch
    %51 = sbr.rel (0) target = $region49
  $region48: #{wdiscriminator_forward.1} parent=0 // pred_region
    _
  $region49: #{wdiscriminator_forward.1} parent=0 // pred_fallthru
    _
  // Predicated region
  $region50: #{wdiscriminator_forward.1} parent=0 // pred_check
    _
  $region51: #{wdiscriminator_forward.1} parent=0 // pred_check_branch
    %53 = sbr.rel (0) target = $region53
  $region52: #{wdiscriminator_forward.1} parent=0 // pred_region
    _
  $region53: #{wdiscriminator_forward.1} parent=0 // pred_fallthru
    _
  // Predicated region
  $region54: #{wdiscriminator_forward.1} parent=0 // pred_check
    _
  $region55: #{wdiscriminator_forward.1} parent=0 // pred_check_branch
    %55 = sbr.rel (0) target = $region57
  $region56: #{wdiscriminator_forward.1} parent=0 // pred_region
    _
  $region57: #{wdiscriminator_forward.1} parent=0 // pred_fallthru
    _
  // Predicated region
  $region58: #{wdiscriminator_forward.1} parent=0 // pred_check
    _
  $region59: #{wdiscriminator_forward.1} parent=0 // pred_check_branch
    %57 = sbr.rel (0) target = $region61
  $region60: #{wdiscriminator_forward.1} parent=0 // pred_region
    _
  $region61: #{wdiscriminator_forward.1} parent=0 // pred_fallthru
    _
  // Predicated region
  $region62: #{wdiscriminator_forward.1} parent=0 // pred_check
    _
  $region63: #{wdiscriminator_forward.1} parent=0 // pred_check_branch
    %59 = sbr.rel (0) target = $region65
  $region64: #{wdiscriminator_forward.1} parent=0 // pred_region
    _
  $region65: #{wdiscriminator_forward.1} parent=0 // pred_fallthru
    _
  // Predicated region
  $region66: #{wdiscriminator_forward.1} parent=0 // pred_check
    _
  $region67: #{wdiscriminator_forward.1} parent=0 // pred_check_branch
    %61 = sbr.rel (0) target = $region69
  $region68: #{wdiscriminator_forward.1} parent=0 // pred_region
    _
  $region69: #{wdiscriminator_forward.1} parent=0 // pred_fallthru
    _
  // Predicated region
  $region70: #{wdiscriminator_forward.1} parent=0 // pred_check
    _
  $region71: #{wdiscriminator_forward.1} parent=0 // pred_check_branch
    %63 = sbr.rel (0) target = $region73
  $region72: #{wdiscriminator_forward.1} parent=0 // pred_region
    _
  $region73: #{wdiscriminator_forward.1} parent=0 // pred_fallthru
    _
  %p65 = scmp.lt.u32.totalorder 288, 8
  %p66 = pneg %p65
  // Predicated region
  $region74: #{wdiscriminator_forward.1} parent=0 // pred_check
    _
  $region75: #{wdiscriminator_forward.1} parent=0 // pred_check_branch
    %68 = sbr.rel (%p65) target = $region77
  $region76: #{wdiscriminator_forward.1} parent=0 // pred_region
    %s83 = sand.u32 288, 7
    %p84 = scmp.eq.s32.totalorder %s83, 0
    // Predicated region
    $region89: #{wdiscriminator_forward.1} parent=76 // pred_check
      %p85 = pneg %p84
    $region90: #{wdiscriminator_forward.1} parent=76 // pred_check_branch
      %87 = sbr.rel (%p85) target = $region92
    $region91: #{wdiscriminator_forward.1} parent=76 // pred_region
      loop: start=0, step=1, limit=1
      $region93: #{wdiscriminator_forward.1} parent=91 // loop_pre_header
        _
      $region94: #{wdiscriminator_forward.1} parent=91 // loop_header
        %s89 = sphi 0, %s93
        %p90 = scmp.ge.s32.totalorder %s89, 1
        %s94 = sphi %s1, %s1
        %s95 = sphi [#allocation2], [#allocation2]
      $region95: #{wdiscriminator_forward.1} parent=91 // loop_header_branch
        %92 = sbr.rel (%p90) target = $region99
      $region96: #{wdiscriminator_forward.1} parent=91 // loop_body
        %v96 = vld [vmem:[%s94] sm:$0xff]
        %97 = vst [vmem:[%s95] sm:$0xff] %v96
        %v98 = vld [vmem:[%s94 + $0x8] sm:$0xff]
        %99 = vst [vmem:[%s95 + $0x8] sm:$0xff] %v98
        %v100 = vld [vmem:[%s94 + $0x10] sm:$0xff]
        %101 = vst [vmem:[%s95 + $0x10] sm:$0xff] %v100
        %v102 = vld [vmem:[%s94 + $0x18] sm:$0xff]
        %103 = vst [vmem:[%s95 + $0x18] sm:$0xff] %v102
        %v104 = vld [vmem:[%s94 + $0x20] sm:$0xff]
        %105 = vst [vmem:[%s95 + $0x20] sm:$0xff] %v104
        %v106 = vld [vmem:[%s94 + $0x28] sm:$0xff]
        %107 = vst [vmem:[%s95 + $0x28] sm:$0xff] %v106
        %v108 = vld [vmem:[%s94 + $0x30] sm:$0xff]
        %109 = vst [vmem:[%s95 + $0x30] sm:$0xff] %v108
        %v110 = vld [vmem:[%s94 + $0x38] sm:$0xff]
        %111 = vst [vmem:[%s95 + $0x38] sm:$0xff] %v110
        %v112 = vld [vmem:[%s94 + $0x40] sm:$0xff]
        %113 = vst [vmem:[%s95 + $0x40] sm:$0xff] %v112
        %v114 = vld [vmem:[%s94 + $0x48] sm:$0xff]
        %115 = vst [vmem:[%s95 + $0x48] sm:$0xff] %v114
        %v116 = vld [vmem:[%s94 + $0x50] sm:$0xff]
        %117 = vst [vmem:[%s95 + $0x50] sm:$0xff] %v116
        %v118 = vld [vmem:[%s94 + $0x58] sm:$0xff]
        %119 = vst [vmem:[%s95 + $0x58] sm:$0xff] %v118
        %v120 = vld [vmem:[%s94 + $0x60] sm:$0xff]
        %121 = vst [vmem:[%s95 + $0x60] sm:$0xff] %v120
        %v122 = vld [vmem:[%s94 + $0x68] sm:$0xff]
        %123 = vst [vmem:[%s95 + $0x68] sm:$0xff] %v122
        %v124 = vld [vmem:[%s94 + $0x70] sm:$0xff]
        %125 = vst [vmem:[%s95 + $0x70] sm:$0xff] %v124
        %v126 = vld [vmem:[%s94 + $0x78] sm:$0xff]
        %127 = vst [vmem:[%s95 + $0x78] sm:$0xff] %v126
        %v128 = vld [vmem:[%s94 + $0x80] sm:$0xff]
        %129 = vst [vmem:[%s95 + $0x80] sm:$0xff] %v128
        %v130 = vld [vmem:[%s94 + $0x88] sm:$0xff]
        %131 = vst [vmem:[%s95 + $0x88] sm:$0xff] %v130
        %v132 = vld [vmem:[%s94 + $0x90] sm:$0xff]
        %133 = vst [vmem:[%s95 + $0x90] sm:$0xff] %v132
        %v134 = vld [vmem:[%s94 + $0x98] sm:$0xff]
        %135 = vst [vmem:[%s95 + $0x98] sm:$0xff] %v134
        %v136 = vld [vmem:[%s94 + $0xa0] sm:$0xff]
        %137 = vst [vmem:[%s95 + $0xa0] sm:$0xff] %v136
        %v138 = vld [vmem:[%s94 + $0xa8] sm:$0xff]
        %139 = vst [vmem:[%s95 + $0xa8] sm:$0xff] %v138
        %v140 = vld [vmem:[%s94 + $0xb0] sm:$0xff]
        %141 = vst [vmem:[%s95 + $0xb0] sm:$0xff] %v140
        %v142 = vld [vmem:[%s94 + $0xb8] sm:$0xff]
        %143 = vst [vmem:[%s95 + $0xb8] sm:$0xff] %v142
        %v144 = vld [vmem:[%s94 + $0xc0] sm:$0xff]
        %145 = vst [vmem:[%s95 + $0xc0] sm:$0xff] %v144
        %v146 = vld [vmem:[%s94 + $0xc8] sm:$0xff]
        %147 = vst [vmem:[%s95 + $0xc8] sm:$0xff] %v146
        %v148 = vld [vmem:[%s94 + $0xd0] sm:$0xff]
        %149 = vst [vmem:[%s95 + $0xd0] sm:$0xff] %v148
        %v150 = vld [vmem:[%s94 + $0xd8] sm:$0xff]
        %151 = vst [vmem:[%s95 + $0xd8] sm:$0xff] %v150
        %v152 = vld [vmem:[%s94 + $0xe0] sm:$0xff]
        %153 = vst [vmem:[%s95 + $0xe0] sm:$0xff] %v152
        %v154 = vld [vmem:[%s94 + $0xe8] sm:$0xff]
        %155 = vst [vmem:[%s95 + $0xe8] sm:$0xff] %v154
        %v156 = vld [vmem:[%s94 + $0xf0] sm:$0xff]
        %157 = vst [vmem:[%s95 + $0xf0] sm:$0xff] %v156
        %v158 = vld [vmem:[%s94 + $0xf8] sm:$0xff]
        %159 = vst [vmem:[%s95 + $0xf8] sm:$0xff] %v158
        %v160 = vld [vmem:[%s94 + $0x100] sm:$0xff]
        %161 = vst [vmem:[%s95 + $0x100] sm:$0xff] %v160
        %v162 = vld [vmem:[%s94 + $0x108] sm:$0xff]
        %163 = vst [vmem:[%s95 + $0x108] sm:$0xff] %v162
        %v164 = vld [vmem:[%s94 + $0x110] sm:$0xff]
        %165 = vst [vmem:[%s95 + $0x110] sm:$0xff] %v164
        %v166 = vld [vmem:[%s94 + $0x118] sm:$0xff]
        %167 = vst [vmem:[%s95 + $0x118] sm:$0xff] %v166
      $region97: #{wdiscriminator_forward.1} parent=91 // loop_footer
        %s93 = sadd.s32 1, %s89
      $region98: #{wdiscriminator_forward.1} parent=91 // loop_footer_branch
        %88 = sbr.rel target = $region94
      $region99: #{wdiscriminator_forward.1} parent=91 // loop_exit
        _
    $region92: #{wdiscriminator_forward.1} parent=76 // pred_fallthru
      _
    %p168 = pneg %p84
    // Predicated region
    $region100: #{wdiscriminator_forward.1} parent=76 // pred_check
      _
    $region101: #{wdiscriminator_forward.1} parent=76 // pred_check_branch
      %170 = sbr.rel (%p84) target = $region103
    $region102: #{wdiscriminator_forward.1} parent=76 // pred_region
      %s171 = sand.u32 288, 7
    $region103: #{wdiscriminator_forward.1} parent=76 // pred_fallthru
      _
  $region77: #{wdiscriminator_forward.1} parent=0 // pred_fallthru
    _
  // Predicated region
  $region78: #{wdiscriminator_forward.1} parent=0 // pred_check
    %p69 = pneg %p65
  $region79: #{wdiscriminator_forward.1} parent=0 // pred_check_branch
    %71 = sbr.rel (%p69) target = $region81
  $region80: #{wdiscriminator_forward.1} parent=0 // pred_region
    %s72 = sshllo.u32 0, 288
    loop: start=0, step=1, limit=1
    $region82: #{wdiscriminator_forward.1} parent=80 // loop_pre_header
      _
    $region83: #{wdiscriminator_forward.1} parent=80 // loop_header
      %s74 = sphi 0, %s78
      %p75 = scmp.ge.s32.totalorder %s74, 1
      %s79 = sphi %s1, %s1
      %s80 = sphi [#allocation2], [#allocation2]
    $region84: #{wdiscriminator_forward.1} parent=80 // loop_header_branch
      %77 = sbr.rel (%p75) target = $region88
    $region85: #{wdiscriminator_forward.1} parent=80 // loop_body
      %v81 = vld [vmem:[%s79] sm:%s72]
      %82 = vst [vmem:[%s80] sm:%s72] %v81
    $region86: #{wdiscriminator_forward.1} parent=80 // loop_footer
      %s78 = sadd.s32 1, %s74
    $region87: #{wdiscriminator_forward.1} parent=80 // loop_footer_branch
      %73 = sbr.rel target = $region83
    $region88: #{wdiscriminator_forward.1} parent=80 // loop_exit
      _
  $region81: #{wdiscriminator_forward.1} parent=0 // pred_fallthru
    _
  // Predicated region
  $region104: #{wdiscriminator_forward.1} parent=0 // pred_check
    _
  $region105: #{wdiscriminator_forward.1} parent=0 // pred_check_branch
    %174 = sbr.rel (0) target = $region107
  $region106: #{wdiscriminator_forward.1} parent=0 // pred_region
    %175 = vsyncadd [#allocation7], 4608
  $region107: #{wdiscriminator_forward.1} parent=0 // pred_fallthru
    _
  %s176 = scalar_lea.sflag [#allocation7], 1
  %p178 = scmp.lt.u32.totalorder 672, 8
  %p179 = pneg %p178
  // Predicated region
  $region108: #{wdiscriminator_forward.1} parent=0 // pred_check
    _
  $region109: #{wdiscriminator_forward.1} parent=0 // pred_check_branch
    %181 = sbr.rel (%p178) target = $region111
  $region110: #{wdiscriminator_forward.1} parent=0 // pred_region
    %s196 = sand.u32 672, 7
    %p197 = scmp.eq.s32.totalorder %s196, 0
    // Predicated region
    $region123: #{wdiscriminator_forward.1} parent=110 // pred_check
      %p198 = pneg %p197
    $region124: #{wdiscriminator_forward.1} parent=110 // pred_check_branch
      %200 = sbr.rel (%p198) target = $region126
    $region125: #{wdiscriminator_forward.1} parent=110 // pred_region
      loop: start=0, step=1, limit=1
      $region127: #{wdiscriminator_forward.1} parent=125 // loop_pre_header
        _
      $region128: #{wdiscriminator_forward.1} parent=125 // loop_header
        %s202 = sphi 0, %s206
        %p203 = scmp.ge.s32.totalorder %s202, 1
        %s207 = sphi %s6, %s6
        %s208 = sphi [#allocation3], [#allocation3]
      $region129: #{wdiscriminator_forward.1} parent=125 // loop_header_branch
        %205 = sbr.rel (%p203) target = $region133
      $region130: #{wdiscriminator_forward.1} parent=125 // loop_body
        %v209 = vld [vmem:[%s207] sm:$0xff]
        %210 = vst [vmem:[%s208] sm:$0xff] %v209
        %v211 = vld [vmem:[%s207 + $0x8] sm:$0xff]
        %212 = vst [vmem:[%s208 + $0x8] sm:$0xff] %v211
        %v213 = vld [vmem:[%s207 + $0x10] sm:$0xff]
        %214 = vst [vmem:[%s208 + $0x10] sm:$0xff] %v213
        %v215 = vld [vmem:[%s207 + $0x18] sm:$0xff]
        %216 = vst [vmem:[%s208 + $0x18] sm:$0xff] %v215
        %v217 = vld [vmem:[%s207 + $0x20] sm:$0xff]
        %218 = vst [vmem:[%s208 + $0x20] sm:$0xff] %v217
        %v219 = vld [vmem:[%s207 + $0x28] sm:$0xff]
        %220 = vst [vmem:[%s208 + $0x28] sm:$0xff] %v219
        %v221 = vld [vmem:[%s207 + $0x30] sm:$0xff]
        %222 = vst [vmem:[%s208 + $0x30] sm:$0xff] %v221
        %v223 = vld [vmem:[%s207 + $0x38] sm:$0xff]
        %224 = vst [vmem:[%s208 + $0x38] sm:$0xff] %v223
        %v225 = vld [vmem:[%s207 + $0x40] sm:$0xff]
        %226 = vst [vmem:[%s208 + $0x40] sm:$0xff] %v225
        %v227 = vld [vmem:[%s207 + $0x48] sm:$0xff]
        %228 = vst [vmem:[%s208 + $0x48] sm:$0xff] %v227
        %v229 = vld [vmem:[%s207 + $0x50] sm:$0xff]
        %230 = vst [vmem:[%s208 + $0x50] sm:$0xff] %v229
        %v231 = vld [vmem:[%s207 + $0x58] sm:$0xff]
        %232 = vst [vmem:[%s208 + $0x58] sm:$0xff] %v231
        %v233 = vld [vmem:[%s207 + $0x60] sm:$0xff]
        %234 = vst [vmem:[%s208 + $0x60] sm:$0xff] %v233
        %v235 = vld [vmem:[%s207 + $0x68] sm:$0xff]
        %236 = vst [vmem:[%s208 + $0x68] sm:$0xff] %v235
        %v237 = vld [vmem:[%s207 + $0x70] sm:$0xff]
        %238 = vst [vmem:[%s208 + $0x70] sm:$0xff] %v237
        %v239 = vld [vmem:[%s207 + $0x78] sm:$0xff]
        %240 = vst [vmem:[%s208 + $0x78] sm:$0xff] %v239
        %v241 = vld [vmem:[%s207 + $0x80] sm:$0xff]
        %242 = vst [vmem:[%s208 + $0x80] sm:$0xff] %v241
        %v243 = vld [vmem:[%s207 + $0x88] sm:$0xff]
        %244 = vst [vmem:[%s208 + $0x88] sm:$0xff] %v243
        %v245 = vld [vmem:[%s207 + $0x90] sm:$0xff]
        %246 = vst [vmem:[%s208 + $0x90] sm:$0xff] %v245
        %v247 = vld [vmem:[%s207 + $0x98] sm:$0xff]
        %248 = vst [vmem:[%s208 + $0x98] sm:$0xff] %v247
        %v249 = vld [vmem:[%s207 + $0xa0] sm:$0xff]
        %250 = vst [vmem:[%s208 + $0xa0] sm:$0xff] %v249
        %v251 = vld [vmem:[%s207 + $0xa8] sm:$0xff]
        %252 = vst [vmem:[%s208 + $0xa8] sm:$0xff] %v251
        %v253 = vld [vmem:[%s207 + $0xb0] sm:$0xff]
        %254 = vst [vmem:[%s208 + $0xb0] sm:$0xff] %v253
        %v255 = vld [vmem:[%s207 + $0xb8] sm:$0xff]
        %256 = vst [vmem:[%s208 + $0xb8] sm:$0xff] %v255
        %v257 = vld [vmem:[%s207 + $0xc0] sm:$0xff]
        %258 = vst [vmem:[%s208 + $0xc0] sm:$0xff] %v257
        %v259 = vld [vmem:[%s207 + $0xc8] sm:$0xff]
        %260 = vst [vmem:[%s208 + $0xc8] sm:$0xff] %v259
        %v261 = vld [vmem:[%s207 + $0xd0] sm:$0xff]
        %262 = vst [vmem:[%s208 + $0xd0] sm:$0xff] %v261
        %v263 = vld [vmem:[%s207 + $0xd8] sm:$0xff]
        %264 = vst [vmem:[%s208 + $0xd8] sm:$0xff] %v263
        %v265 = vld [vmem:[%s207 + $0xe0] sm:$0xff]
        %266 = vst [vmem:[%s208 + $0xe0] sm:$0xff] %v265
        %v267 = vld [vmem:[%s207 + $0xe8] sm:$0xff]
        %268 = vst [vmem:[%s208 + $0xe8] sm:$0xff] %v267
        %v269 = vld [vmem:[%s207 + $0xf0] sm:$0xff]
        %270 = vst [vmem:[%s208 + $0xf0] sm:$0xff] %v269
        %v271 = vld [vmem:[%s207 + $0xf8] sm:$0xff]
        %272 = vst [vmem:[%s208 + $0xf8] sm:$0xff] %v271
        %v273 = vld [vmem:[%s207 + $0x100] sm:$0xff]
        %274 = vst [vmem:[%s208 + $0x100] sm:$0xff] %v273
        %v275 = vld [vmem:[%s207 + $0x108] sm:$0xff]
        %276 = vst [vmem:[%s208 + $0x108] sm:$0xff] %v275
        %v277 = vld [vmem:[%s207 + $0x110] sm:$0xff]
        %278 = vst [vmem:[%s208 + $0x110] sm:$0xff] %v277
        %v279 = vld [vmem:[%s207 + $0x118] sm:$0xff]
        %280 = vst [vmem:[%s208 + $0x118] sm:$0xff] %v279
        %v281 = vld [vmem:[%s207 + $0x120] sm:$0xff]
        %282 = vst [vmem:[%s208 + $0x120] sm:$0xff] %v281
        %v283 = vld [vmem:[%s207 + $0x128] sm:$0xff]
        %284 = vst [vmem:[%s208 + $0x128] sm:$0xff] %v283
        %v285 = vld [vmem:[%s207 + $0x130] sm:$0xff]
        %286 = vst [vmem:[%s208 + $0x130] sm:$0xff] %v285
        %v287 = vld [vmem:[%s207 + $0x138] sm:$0xff]
        %288 = vst [vmem:[%s208 + $0x138] sm:$0xff] %v287
        %v289 = vld [vmem:[%s207 + $0x140] sm:$0xff]
        %290 = vst [vmem:[%s208 + $0x140] sm:$0xff] %v289
        %v291 = vld [vmem:[%s207 + $0x148] sm:$0xff]
        %292 = vst [vmem:[%s208 + $0x148] sm:$0xff] %v291
        %v293 = vld [vmem:[%s207 + $0x150] sm:$0xff]
        %294 = vst [vmem:[%s208 + $0x150] sm:$0xff] %v293
        %v295 = vld [vmem:[%s207 + $0x158] sm:$0xff]
        %296 = vst [vmem:[%s208 + $0x158] sm:$0xff] %v295
        %v297 = vld [vmem:[%s207 + $0x160] sm:$0xff]
        %298 = vst [vmem:[%s208 + $0x160] sm:$0xff] %v297
        %v299 = vld [vmem:[%s207 + $0x168] sm:$0xff]
        %300 = vst [vmem:[%s208 + $0x168] sm:$0xff] %v299
        %v301 = vld [vmem:[%s207 + $0x170] sm:$0xff]
        %302 = vst [vmem:[%s208 + $0x170] sm:$0xff] %v301
        %v303 = vld [vmem:[%s207 + $0x178] sm:$0xff]
        %304 = vst [vmem:[%s208 + $0x178] sm:$0xff] %v303
        %v305 = vld [vmem:[%s207 + $0x180] sm:$0xff]
        %306 = vst [vmem:[%s208 + $0x180] sm:$0xff] %v305
        %v307 = vld [vmem:[%s207 + $0x188] sm:$0xff]
        %308 = vst [vmem:[%s208 + $0x188] sm:$0xff] %v307
        %v309 = vld [vmem:[%s207 + $0x190] sm:$0xff]
        %310 = vst [vmem:[%s208 + $0x190] sm:$0xff] %v309
        %v311 = vld [vmem:[%s207 + $0x198] sm:$0xff]
        %312 = vst [vmem:[%s208 + $0x198] sm:$0xff] %v311
        %v313 = vld [vmem:[%s207 + $0x1a0] sm:$0xff]
        %314 = vst [vmem:[%s208 + $0x1a0] sm:$0xff] %v313
        %v315 = vld [vmem:[%s207 + $0x1a8] sm:$0xff]
        %316 = vst [vmem:[%s208 + $0x1a8] sm:$0xff] %v315
        %v317 = vld [vmem:[%s207 + $0x1b0] sm:$0xff]
        %318 = vst [vmem:[%s208 + $0x1b0] sm:$0xff] %v317
        %v319 = vld [vmem:[%s207 + $0x1b8] sm:$0xff]
        %320 = vst [vmem:[%s208 + $0x1b8] sm:$0xff] %v319
        %v321 = vld [vmem:[%s207 + $0x1c0] sm:$0xff]
        %322 = vst [vmem:[%s208 + $0x1c0] sm:$0xff] %v321
        %v323 = vld [vmem:[%s207 + $0x1c8] sm:$0xff]
        %324 = vst [vmem:[%s208 + $0x1c8] sm:$0xff] %v323
        %v325 = vld [vmem:[%s207 + $0x1d0] sm:$0xff]
        %326 = vst [vmem:[%s208 + $0x1d0] sm:$0xff] %v325
        %v327 = vld [vmem:[%s207 + $0x1d8] sm:$0xff]
        %328 = vst [vmem:[%s208 + $0x1d8] sm:$0xff] %v327
        %v329 = vld [vmem:[%s207 + $0x1e0] sm:$0xff]
        %330 = vst [vmem:[%s208 + $0x1e0] sm:$0xff] %v329
        %v331 = vld [vmem:[%s207 + $0x1e8] sm:$0xff]
        %332 = vst [vmem:[%s208 + $0x1e8] sm:$0xff] %v331
        %v333 = vld [vmem:[%s207 + $0x1f0] sm:$0xff]
        %334 = vst [vmem:[%s208 + $0x1f0] sm:$0xff] %v333
        %v335 = vld [vmem:[%s207 + $0x1f8] sm:$0xff]
        %336 = vst [vmem:[%s208 + $0x1f8] sm:$0xff] %v335
        %v337 = vld [vmem:[%s207 + $0x200] sm:$0xff]
        %338 = vst [vmem:[%s208 + $0x200] sm:$0xff] %v337
        %v339 = vld [vmem:[%s207 + $0x208] sm:$0xff]
        %340 = vst [vmem:[%s208 + $0x208] sm:$0xff] %v339
        %v341 = vld [vmem:[%s207 + $0x210] sm:$0xff]
        %342 = vst [vmem:[%s208 + $0x210] sm:$0xff] %v341
        %v343 = vld [vmem:[%s207 + $0x218] sm:$0xff]
        %344 = vst [vmem:[%s208 + $0x218] sm:$0xff] %v343
        %v345 = vld [vmem:[%s207 + $0x220] sm:$0xff]
        %346 = vst [vmem:[%s208 + $0x220] sm:$0xff] %v345
        %v347 = vld [vmem:[%s207 + $0x228] sm:$0xff]
        %348 = vst [vmem:[%s208 + $0x228] sm:$0xff] %v347
        %v349 = vld [vmem:[%s207 + $0x230] sm:$0xff]
        %350 = vst [vmem:[%s208 + $0x230] sm:$0xff] %v349
        %v351 = vld [vmem:[%s207 + $0x238] sm:$0xff]
        %352 = vst [vmem:[%s208 + $0x238] sm:$0xff] %v351
        %v353 = vld [vmem:[%s207 + $0x240] sm:$0xff]
        %354 = vst [vmem:[%s208 + $0x240] sm:$0xff] %v353
        %v355 = vld [vmem:[%s207 + $0x248] sm:$0xff]
        %356 = vst [vmem:[%s208 + $0x248] sm:$0xff] %v355
        %v357 = vld [vmem:[%s207 + $0x250] sm:$0xff]
        %358 = vst [vmem:[%s208 + $0x250] sm:$0xff] %v357
        %v359 = vld [vmem:[%s207 + $0x258] sm:$0xff]
        %360 = vst [vmem:[%s208 + $0x258] sm:$0xff] %v359
        %v361 = vld [vmem:[%s207 + $0x260] sm:$0xff]
        %362 = vst [vmem:[%s208 + $0x260] sm:$0xff] %v361
        %v363 = vld [vmem:[%s207 + $0x268] sm:$0xff]
        %364 = vst [vmem:[%s208 + $0x268] sm:$0xff] %v363
        %v365 = vld [vmem:[%s207 + $0x270] sm:$0xff]
        %366 = vst [vmem:[%s208 + $0x270] sm:$0xff] %v365
        %v367 = vld [vmem:[%s207 + $0x278] sm:$0xff]
        %368 = vst [vmem:[%s208 + $0x278] sm:$0xff] %v367
        %v369 = vld [vmem:[%s207 + $0x280] sm:$0xff]
        %370 = vst [vmem:[%s208 + $0x280] sm:$0xff] %v369
        %v371 = vld [vmem:[%s207 + $0x288] sm:$0xff]
        %372 = vst [vmem:[%s208 + $0x288] sm:$0xff] %v371
        %v373 = vld [vmem:[%s207 + $0x290] sm:$0xff]
        %374 = vst [vmem:[%s208 + $0x290] sm:$0xff] %v373
        %v375 = vld [vmem:[%s207 + $0x298] sm:$0xff]
        %376 = vst [vmem:[%s208 + $0x298] sm:$0xff] %v375
      $region131: #{wdiscriminator_forward.1} parent=125 // loop_footer
        %s206 = sadd.s32 1, %s202
      $region132: #{wdiscriminator_forward.1} parent=125 // loop_footer_branch
        %201 = sbr.rel target = $region128
      $region133: #{wdiscriminator_forward.1} parent=125 // loop_exit
        _
    $region126: #{wdiscriminator_forward.1} parent=110 // pred_fallthru
      _
    %p377 = pneg %p197
    // Predicated region
    $region134: #{wdiscriminator_forward.1} parent=110 // pred_check
      _
    $region135: #{wdiscriminator_forward.1} parent=110 // pred_check_branch
      %379 = sbr.rel (%p197) target = $region137
    $region136: #{wdiscriminator_forward.1} parent=110 // pred_region
      %s380 = sand.u32 672, 7
    $region137: #{wdiscriminator_forward.1} parent=110 // pred_fallthru
      _
  $region111: #{wdiscriminator_forward.1} parent=0 // pred_fallthru
    _
  // Predicated region
  $region112: #{wdiscriminator_forward.1} parent=0 // pred_check
    %p182 = pneg %p178
  $region113: #{wdiscriminator_forward.1} parent=0 // pred_check_branch
    %184 = sbr.rel (%p182) target = $region115
  $region114: #{wdiscriminator_forward.1} parent=0 // pred_region
    %s185 = sshllo.u32 0, 672
    loop: start=0, step=1, limit=1
    $region116: #{wdiscriminator_forward.1} parent=114 // loop_pre_header
      _
    $region117: #{wdiscriminator_forward.1} parent=114 // loop_header
      %s187 = sphi 0, %s191
      %p188 = scmp.ge.s32.totalorder %s187, 1
      %s192 = sphi %s6, %s6
      %s193 = sphi [#allocation3], [#allocation3]
    $region118: #{wdiscriminator_forward.1} parent=114 // loop_header_branch
      %190 = sbr.rel (%p188) target = $region122
    $region119: #{wdiscriminator_forward.1} parent=114 // loop_body
      %v194 = vld [vmem:[%s192] sm:%s185]
      %195 = vst [vmem:[%s193] sm:%s185] %v194
    $region120: #{wdiscriminator_forward.1} parent=114 // loop_footer
      %s191 = sadd.s32 1, %s187
    $region121: #{wdiscriminator_forward.1} parent=114 // loop_footer_branch
      %186 = sbr.rel target = $region117
    $region122: #{wdiscriminator_forward.1} parent=114 // loop_exit
      _
  $region115: #{wdiscriminator_forward.1} parent=0 // pred_fallthru
    _
  // Predicated region
  $region138: #{wdiscriminator_forward.1} parent=0 // pred_check
    _
  $region139: #{wdiscriminator_forward.1} parent=0 // pred_check_branch
    %383 = sbr.rel (0) target = $region141
  $region140: #{wdiscriminator_forward.1} parent=0 // pred_region
    %384 = vsyncadd %s176, 10752
  $region141: #{wdiscriminator_forward.1} parent=0 // pred_fallthru
    _
  %s385 = scalar_lea.sflag [#allocation7], 2
  %p387 = scmp.lt.u32.totalorder 288, 8
  %p388 = pneg %p387
  // Predicated region
  $region142: #{wdiscriminator_forward.1} parent=0 // pred_check
    _
  $region143: #{wdiscriminator_forward.1} parent=0 // pred_check_branch
    %390 = sbr.rel (%p387) target = $region145
  $region144: #{wdiscriminator_forward.1} parent=0 // pred_region
    %s405 = sand.u32 288, 7
    %p406 = scmp.eq.s32.totalorder %s405, 0
    // Predicated region
    $region157: #{wdiscriminator_forward.1} parent=144 // pred_check
      %p407 = pneg %p406
    $region158: #{wdiscriminator_forward.1} parent=144 // pred_check_branch
      %409 = sbr.rel (%p407) target = $region160
    $region159: #{wdiscriminator_forward.1} parent=144 // pred_region
      loop: start=0, step=1, limit=1
      $region161: #{wdiscriminator_forward.1} parent=159 // loop_pre_header
        _
      $region162: #{wdiscriminator_forward.1} parent=159 // loop_header
        %s411 = sphi 0, %s415
        %p412 = scmp.ge.s32.totalorder %s411, 1
        %s416 = sphi %s11, %s11
        %s417 = sphi [#allocation4], [#allocation4]
      $region163: #{wdiscriminator_forward.1} parent=159 // loop_header_branch
        %414 = sbr.rel (%p412) target = $region167
      $region164: #{wdiscriminator_forward.1} parent=159 // loop_body
        %v418 = vld [vmem:[%s416] sm:$0xff]
        %419 = vst [vmem:[%s417] sm:$0xff] %v418
        %v420 = vld [vmem:[%s416 + $0x8] sm:$0xff]
        %421 = vst [vmem:[%s417 + $0x8] sm:$0xff] %v420
        %v422 = vld [vmem:[%s416 + $0x10] sm:$0xff]
        %423 = vst [vmem:[%s417 + $0x10] sm:$0xff] %v422
        %v424 = vld [vmem:[%s416 + $0x18] sm:$0xff]
        %425 = vst [vmem:[%s417 + $0x18] sm:$0xff] %v424
        %v426 = vld [vmem:[%s416 + $0x20] sm:$0xff]
        %427 = vst [vmem:[%s417 + $0x20] sm:$0xff] %v426
        %v428 = vld [vmem:[%s416 + $0x28] sm:$0xff]
        %429 = vst [vmem:[%s417 + $0x28] sm:$0xff] %v428
        %v430 = vld [vmem:[%s416 + $0x30] sm:$0xff]
        %431 = vst [vmem:[%s417 + $0x30] sm:$0xff] %v430
        %v432 = vld [vmem:[%s416 + $0x38] sm:$0xff]
        %433 = vst [vmem:[%s417 + $0x38] sm:$0xff] %v432
        %v434 = vld [vmem:[%s416 + $0x40] sm:$0xff]
        %435 = vst [vmem:[%s417 + $0x40] sm:$0xff] %v434
        %v436 = vld [vmem:[%s416 + $0x48] sm:$0xff]
        %437 = vst [vmem:[%s417 + $0x48] sm:$0xff] %v436
        %v438 = vld [vmem:[%s416 + $0x50] sm:$0xff]
        %439 = vst [vmem:[%s417 + $0x50] sm:$0xff] %v438
        %v440 = vld [vmem:[%s416 + $0x58] sm:$0xff]
        %441 = vst [vmem:[%s417 + $0x58] sm:$0xff] %v440
        %v442 = vld [vmem:[%s416 + $0x60] sm:$0xff]
        %443 = vst [vmem:[%s417 + $0x60] sm:$0xff] %v442
        %v444 = vld [vmem:[%s416 + $0x68] sm:$0xff]
        %445 = vst [vmem:[%s417 + $0x68] sm:$0xff] %v444
        %v446 = vld [vmem:[%s416 + $0x70] sm:$0xff]
        %447 = vst [vmem:[%s417 + $0x70] sm:$0xff] %v446
        %v448 = vld [vmem:[%s416 + $0x78] sm:$0xff]
        %449 = vst [vmem:[%s417 + $0x78] sm:$0xff] %v448
        %v450 = vld [vmem:[%s416 + $0x80] sm:$0xff]
        %451 = vst [vmem:[%s417 + $0x80] sm:$0xff] %v450
        %v452 = vld [vmem:[%s416 + $0x88] sm:$0xff]
        %453 = vst [vmem:[%s417 + $0x88] sm:$0xff] %v452
        %v454 = vld [vmem:[%s416 + $0x90] sm:$0xff]
        %455 = vst [vmem:[%s417 + $0x90] sm:$0xff] %v454
        %v456 = vld [vmem:[%s416 + $0x98] sm:$0xff]
        %457 = vst [vmem:[%s417 + $0x98] sm:$0xff] %v456
        %v458 = vld [vmem:[%s416 + $0xa0] sm:$0xff]
        %459 = vst [vmem:[%s417 + $0xa0] sm:$0xff] %v458
        %v460 = vld [vmem:[%s416 + $0xa8] sm:$0xff]
        %461 = vst [vmem:[%s417 + $0xa8] sm:$0xff] %v460
        %v462 = vld [vmem:[%s416 + $0xb0] sm:$0xff]
        %463 = vst [vmem:[%s417 + $0xb0] sm:$0xff] %v462
        %v464 = vld [vmem:[%s416 + $0xb8] sm:$0xff]
        %465 = vst [vmem:[%s417 + $0xb8] sm:$0xff] %v464
        %v466 = vld [vmem:[%s416 + $0xc0] sm:$0xff]
        %467 = vst [vmem:[%s417 + $0xc0] sm:$0xff] %v466
        %v468 = vld [vmem:[%s416 + $0xc8] sm:$0xff]
        %469 = vst [vmem:[%s417 + $0xc8] sm:$0xff] %v468
        %v470 = vld [vmem:[%s416 + $0xd0] sm:$0xff]
        %471 = vst [vmem:[%s417 + $0xd0] sm:$0xff] %v470
        %v472 = vld [vmem:[%s416 + $0xd8] sm:$0xff]
        %473 = vst [vmem:[%s417 + $0xd8] sm:$0xff] %v472
        %v474 = vld [vmem:[%s416 + $0xe0] sm:$0xff]
        %475 = vst [vmem:[%s417 + $0xe0] sm:$0xff] %v474
        %v476 = vld [vmem:[%s416 + $0xe8] sm:$0xff]
        %477 = vst [vmem:[%s417 + $0xe8] sm:$0xff] %v476
        %v478 = vld [vmem:[%s416 + $0xf0] sm:$0xff]
        %479 = vst [vmem:[%s417 + $0xf0] sm:$0xff] %v478
        %v480 = vld [vmem:[%s416 + $0xf8] sm:$0xff]
        %481 = vst [vmem:[%s417 + $0xf8] sm:$0xff] %v480
        %v482 = vld [vmem:[%s416 + $0x100] sm:$0xff]
        %483 = vst [vmem:[%s417 + $0x100] sm:$0xff] %v482
        %v484 = vld [vmem:[%s416 + $0x108] sm:$0xff]
        %485 = vst [vmem:[%s417 + $0x108] sm:$0xff] %v484
        %v486 = vld [vmem:[%s416 + $0x110] sm:$0xff]
        %487 = vst [vmem:[%s417 + $0x110] sm:$0xff] %v486
        %v488 = vld [vmem:[%s416 + $0x118] sm:$0xff]
        %489 = vst [vmem:[%s417 + $0x118] sm:$0xff] %v488
      $region165: #{wdiscriminator_forward.1} parent=159 // loop_footer
        %s415 = sadd.s32 1, %s411
      $region166: #{wdiscriminator_forward.1} parent=159 // loop_footer_branch
        %410 = sbr.rel target = $region162
      $region167: #{wdiscriminator_forward.1} parent=159 // loop_exit
        _
    $region160: #{wdiscriminator_forward.1} parent=144 // pred_fallthru
      _
    %p490 = pneg %p406
    // Predicated region
    $region168: #{wdiscriminator_forward.1} parent=144 // pred_check
      _
    $region169: #{wdiscriminator_forward.1} parent=144 // pred_check_branch
      %492 = sbr.rel (%p406) target = $region171
    $region170: #{wdiscriminator_forward.1} parent=144 // pred_region
      %s493 = sand.u32 288, 7
    $region171: #{wdiscriminator_forward.1} parent=144 // pred_fallthru
      _
  $region145: #{wdiscriminator_forward.1} parent=0 // pred_fallthru
    _
  // Predicated region
  $region146: #{wdiscriminator_forward.1} parent=0 // pred_check
    %p391 = pneg %p387
  $region147: #{wdiscriminator_forward.1} parent=0 // pred_check_branch
    %393 = sbr.rel (%p391) target = $region149
  $region148: #{wdiscriminator_forward.1} parent=0 // pred_region
    %s394 = sshllo.u32 0, 288
    loop: start=0, step=1, limit=1
    $region150: #{wdiscriminator_forward.1} parent=148 // loop_pre_header
      _
    $region151: #{wdiscriminator_forward.1} parent=148 // loop_header
      %s396 = sphi 0, %s400
      %p397 = scmp.ge.s32.totalorder %s396, 1
      %s401 = sphi %s11, %s11
      %s402 = sphi [#allocation4], [#allocation4]
    $region152: #{wdiscriminator_forward.1} parent=148 // loop_header_branch
      %399 = sbr.rel (%p397) target = $region156
    $region153: #{wdiscriminator_forward.1} parent=148 // loop_body
      %v403 = vld [vmem:[%s401] sm:%s394]
      %404 = vst [vmem:[%s402] sm:%s394] %v403
    $region154: #{wdiscriminator_forward.1} parent=148 // loop_footer
      %s400 = sadd.s32 1, %s396
    $region155: #{wdiscriminator_forward.1} parent=148 // loop_footer_branch
      %395 = sbr.rel target = $region151
    $region156: #{wdiscriminator_forward.1} parent=148 // loop_exit
      _
  $region149: #{wdiscriminator_forward.1} parent=0 // pred_fallthru
    _
  // Predicated region
  $region172: #{wdiscriminator_forward.1} parent=0 // pred_check
    _
  $region173: #{wdiscriminator_forward.1} parent=0 // pred_check_branch
    %496 = sbr.rel (0) target = $region175
  $region174: #{wdiscriminator_forward.1} parent=0 // pred_region
    %497 = vsyncadd %s385, 4608
  $region175: #{wdiscriminator_forward.1} parent=0 // pred_fallthru
    _
  %s498 = scalar_lea.sflag [#allocation7], 3
  %p500 = scmp.lt.u32.totalorder 240, 8
  %p501 = pneg %p500
  // Predicated region
  $region176: #{wdiscriminator_forward.1} parent=0 // pred_check
    _
  $region177: #{wdiscriminator_forward.1} parent=0 // pred_check_branch
    %503 = sbr.rel (%p500) target = $region179
  $region178: #{wdiscriminator_forward.1} parent=0 // pred_region
    %s518 = sand.u32 240, 7
    %p519 = scmp.eq.s32.totalorder %s518, 0
    // Predicated region
    $region191: #{wdiscriminator_forward.1} parent=178 // pred_check
      %p520 = pneg %p519
    $region192: #{wdiscriminator_forward.1} parent=178 // pred_check_branch
      %522 = sbr.rel (%p520) target = $region194
    $region193: #{wdiscriminator_forward.1} parent=178 // pred_region
      loop: start=0, step=1, limit=1
      $region195: #{wdiscriminator_forward.1} parent=193 // loop_pre_header
        _
      $region196: #{wdiscriminator_forward.1} parent=193 // loop_header
        %s524 = sphi 0, %s528
        %p525 = scmp.ge.s32.totalorder %s524, 1
        %s529 = sphi %s16, %s16
        %s530 = sphi [#allocation5], [#allocation5]
      $region197: #{wdiscriminator_forward.1} parent=193 // loop_header_branch
        %527 = sbr.rel (%p525) target = $region201
      $region198: #{wdiscriminator_forward.1} parent=193 // loop_body
        %v531 = vld [vmem:[%s529] sm:$0xff]
        %532 = vst [vmem:[%s530] sm:$0xff] %v531
        %v533 = vld [vmem:[%s529 + $0x8] sm:$0xff]
        %534 = vst [vmem:[%s530 + $0x8] sm:$0xff] %v533
        %v535 = vld [vmem:[%s529 + $0x10] sm:$0xff]
        %536 = vst [vmem:[%s530 + $0x10] sm:$0xff] %v535
        %v537 = vld [vmem:[%s529 + $0x18] sm:$0xff]
        %538 = vst [vmem:[%s530 + $0x18] sm:$0xff] %v537
        %v539 = vld [vmem:[%s529 + $0x20] sm:$0xff]
        %540 = vst [vmem:[%s530 + $0x20] sm:$0xff] %v539
        %v541 = vld [vmem:[%s529 + $0x28] sm:$0xff]
        %542 = vst [vmem:[%s530 + $0x28] sm:$0xff] %v541
        %v543 = vld [vmem:[%s529 + $0x30] sm:$0xff]
        %544 = vst [vmem:[%s530 + $0x30] sm:$0xff] %v543
        %v545 = vld [vmem:[%s529 + $0x38] sm:$0xff]
        %546 = vst [vmem:[%s530 + $0x38] sm:$0xff] %v545
        %v547 = vld [vmem:[%s529 + $0x40] sm:$0xff]
        %548 = vst [vmem:[%s530 + $0x40] sm:$0xff] %v547
        %v549 = vld [vmem:[%s529 + $0x48] sm:$0xff]
        %550 = vst [vmem:[%s530 + $0x48] sm:$0xff] %v549
        %v551 = vld [vmem:[%s529 + $0x50] sm:$0xff]
        %552 = vst [vmem:[%s530 + $0x50] sm:$0xff] %v551
        %v553 = vld [vmem:[%s529 + $0x58] sm:$0xff]
        %554 = vst [vmem:[%s530 + $0x58] sm:$0xff] %v553
        %v555 = vld [vmem:[%s529 + $0x60] sm:$0xff]
        %556 = vst [vmem:[%s530 + $0x60] sm:$0xff] %v555
        %v557 = vld [vmem:[%s529 + $0x68] sm:$0xff]
        %558 = vst [vmem:[%s530 + $0x68] sm:$0xff] %v557
        %v559 = vld [vmem:[%s529 + $0x70] sm:$0xff]
        %560 = vst [vmem:[%s530 + $0x70] sm:$0xff] %v559
        %v561 = vld [vmem:[%s529 + $0x78] sm:$0xff]
        %562 = vst [vmem:[%s530 + $0x78] sm:$0xff] %v561
        %v563 = vld [vmem:[%s529 + $0x80] sm:$0xff]
        %564 = vst [vmem:[%s530 + $0x80] sm:$0xff] %v563
        %v565 = vld [vmem:[%s529 + $0x88] sm:$0xff]
        %566 = vst [vmem:[%s530 + $0x88] sm:$0xff] %v565
        %v567 = vld [vmem:[%s529 + $0x90] sm:$0xff]
        %568 = vst [vmem:[%s530 + $0x90] sm:$0xff] %v567
        %v569 = vld [vmem:[%s529 + $0x98] sm:$0xff]
        %570 = vst [vmem:[%s530 + $0x98] sm:$0xff] %v569
        %v571 = vld [vmem:[%s529 + $0xa0] sm:$0xff]
        %572 = vst [vmem:[%s530 + $0xa0] sm:$0xff] %v571
        %v573 = vld [vmem:[%s529 + $0xa8] sm:$0xff]
        %574 = vst [vmem:[%s530 + $0xa8] sm:$0xff] %v573
        %v575 = vld [vmem:[%s529 + $0xb0] sm:$0xff]
        %576 = vst [vmem:[%s530 + $0xb0] sm:$0xff] %v575
        %v577 = vld [vmem:[%s529 + $0xb8] sm:$0xff]
        %578 = vst [vmem:[%s530 + $0xb8] sm:$0xff] %v577
        %v579 = vld [vmem:[%s529 + $0xc0] sm:$0xff]
        %580 = vst [vmem:[%s530 + $0xc0] sm:$0xff] %v579
        %v581 = vld [vmem:[%s529 + $0xc8] sm:$0xff]
        %582 = vst [vmem:[%s530 + $0xc8] sm:$0xff] %v581
        %v583 = vld [vmem:[%s529 + $0xd0] sm:$0xff]
        %584 = vst [vmem:[%s530 + $0xd0] sm:$0xff] %v583
        %v585 = vld [vmem:[%s529 + $0xd8] sm:$0xff]
        %586 = vst [vmem:[%s530 + $0xd8] sm:$0xff] %v585
        %v587 = vld [vmem:[%s529 + $0xe0] sm:$0xff]
        %588 = vst [vmem:[%s530 + $0xe0] sm:$0xff] %v587
        %v589 = vld [vmem:[%s529 + $0xe8] sm:$0xff]
        %590 = vst [vmem:[%s530 + $0xe8] sm:$0xff] %v589
      $region199: #{wdiscriminator_forward.1} parent=193 // loop_footer
        %s528 = sadd.s32 1, %s524
      $region200: #{wdiscriminator_forward.1} parent=193 // loop_footer_branch
        %523 = sbr.rel target = $region196
      $region201: #{wdiscriminator_forward.1} parent=193 // loop_exit
        _
    $region194: #{wdiscriminator_forward.1} parent=178 // pred_fallthru
      _
    %p591 = pneg %p519
    // Predicated region
    $region202: #{wdiscriminator_forward.1} parent=178 // pred_check
      _
    $region203: #{wdiscriminator_forward.1} parent=178 // pred_check_branch
      %593 = sbr.rel (%p519) target = $region205
    $region204: #{wdiscriminator_forward.1} parent=178 // pred_region
      %s594 = sand.u32 240, 7
    $region205: #{wdiscriminator_forward.1} parent=178 // pred_fallthru
      _
  $region179: #{wdiscriminator_forward.1} parent=0 // pred_fallthru
    _
  // Predicated region
  $region180: #{wdiscriminator_forward.1} parent=0 // pred_check
    %p504 = pneg %p500
  $region181: #{wdiscriminator_forward.1} parent=0 // pred_check_branch
    %506 = sbr.rel (%p504) target = $region183
  $region182: #{wdiscriminator_forward.1} parent=0 // pred_region
    %s507 = sshllo.u32 0, 240
    loop: start=0, step=1, limit=1
    $region184: #{wdiscriminator_forward.1} parent=182 // loop_pre_header
      _
    $region185: #{wdiscriminator_forward.1} parent=182 // loop_header
      %s509 = sphi 0, %s513
      %p510 = scmp.ge.s32.totalorder %s509, 1
      %s514 = sphi %s16, %s16
      %s515 = sphi [#allocation5], [#allocation5]
    $region186: #{wdiscriminator_forward.1} parent=182 // loop_header_branch
      %512 = sbr.rel (%p510) target = $region190
    $region187: #{wdiscriminator_forward.1} parent=182 // loop_body
      %v516 = vld [vmem:[%s514] sm:%s507]
      %517 = vst [vmem:[%s515] sm:%s507] %v516
    $region188: #{wdiscriminator_forward.1} parent=182 // loop_footer
      %s513 = sadd.s32 1, %s509
    $region189: #{wdiscriminator_forward.1} parent=182 // loop_footer_branch
      %508 = sbr.rel target = $region185
    $region190: #{wdiscriminator_forward.1} parent=182 // loop_exit
      _
  $region183: #{wdiscriminator_forward.1} parent=0 // pred_fallthru
    _
  // Predicated region
  $region206: #{wdiscriminator_forward.1} parent=0 // pred_check
    _
  $region207: #{wdiscriminator_forward.1} parent=0 // pred_check_branch
    %597 = sbr.rel (0) target = $region209
  $region208: #{wdiscriminator_forward.1} parent=0 // pred_region
    %598 = vsyncadd %s498, 3840
  $region209: #{wdiscriminator_forward.1} parent=0 // pred_fallthru
    _
  %s599 = scalar_lea.sflag [#allocation7], 4
  %p601 = scmp.lt.u32.totalorder 192, 8
  %p602 = pneg %p601
  // Predicated region
  $region210: #{wdiscriminator_forward.1} parent=0 // pred_check
    _
  $region211: #{wdiscriminator_forward.1} parent=0 // pred_check_branch
    %604 = sbr.rel (%p601) target = $region213
  $region212: #{wdiscriminator_forward.1} parent=0 // pred_region
    %s619 = sand.u32 192, 7
    %p620 = scmp.eq.s32.totalorder %s619, 0
    // Predicated region
    $region225: #{wdiscriminator_forward.1} parent=212 // pred_check
      %p621 = pneg %p620
    $region226: #{wdiscriminator_forward.1} parent=212 // pred_check_branch
      %623 = sbr.rel (%p621) target = $region228
    $region227: #{wdiscriminator_forward.1} parent=212 // pred_region
      loop: start=0, step=1, limit=1
      $region229: #{wdiscriminator_forward.1} parent=227 // loop_pre_header
        _
      $region230: #{wdiscriminator_forward.1} parent=227 // loop_header
        %s625 = sphi 0, %s629
        %p626 = scmp.ge.s32.totalorder %s625, 1
        %s630 = sphi %s21, %s21
        %s631 = sphi [#allocation6], [#allocation6]
      $region231: #{wdiscriminator_forward.1} parent=227 // loop_header_branch
        %628 = sbr.rel (%p626) target = $region235
      $region232: #{wdiscriminator_forward.1} parent=227 // loop_body
        %v632 = vld [vmem:[%s630] sm:$0xff]
        %633 = vst [vmem:[%s631] sm:$0xff] %v632
        %v634 = vld [vmem:[%s630 + $0x8] sm:$0xff]
        %635 = vst [vmem:[%s631 + $0x8] sm:$0xff] %v634
        %v636 = vld [vmem:[%s630 + $0x10] sm:$0xff]
        %637 = vst [vmem:[%s631 + $0x10] sm:$0xff] %v636
        %v638 = vld [vmem:[%s630 + $0x18] sm:$0xff]
        %639 = vst [vmem:[%s631 + $0x18] sm:$0xff] %v638
        %v640 = vld [vmem:[%s630 + $0x20] sm:$0xff]
        %641 = vst [vmem:[%s631 + $0x20] sm:$0xff] %v640
        %v642 = vld [vmem:[%s630 + $0x28] sm:$0xff]
        %643 = vst [vmem:[%s631 + $0x28] sm:$0xff] %v642
        %v644 = vld [vmem:[%s630 + $0x30] sm:$0xff]
        %645 = vst [vmem:[%s631 + $0x30] sm:$0xff] %v644
        %v646 = vld [vmem:[%s630 + $0x38] sm:$0xff]
        %647 = vst [vmem:[%s631 + $0x38] sm:$0xff] %v646
        %v648 = vld [vmem:[%s630 + $0x40] sm:$0xff]
        %649 = vst [vmem:[%s631 + $0x40] sm:$0xff] %v648
        %v650 = vld [vmem:[%s630 + $0x48] sm:$0xff]
        %651 = vst [vmem:[%s631 + $0x48] sm:$0xff] %v650
        %v652 = vld [vmem:[%s630 + $0x50] sm:$0xff]
        %653 = vst [vmem:[%s631 + $0x50] sm:$0xff] %v652
        %v654 = vld [vmem:[%s630 + $0x58] sm:$0xff]
        %655 = vst [vmem:[%s631 + $0x58] sm:$0xff] %v654
        %v656 = vld [vmem:[%s630 + $0x60] sm:$0xff]
        %657 = vst [vmem:[%s631 + $0x60] sm:$0xff] %v656
        %v658 = vld [vmem:[%s630 + $0x68] sm:$0xff]
        %659 = vst [vmem:[%s631 + $0x68] sm:$0xff] %v658
        %v660 = vld [vmem:[%s630 + $0x70] sm:$0xff]
        %661 = vst [vmem:[%s631 + $0x70] sm:$0xff] %v660
        %v662 = vld [vmem:[%s630 + $0x78] sm:$0xff]
        %663 = vst [vmem:[%s631 + $0x78] sm:$0xff] %v662
        %v664 = vld [vmem:[%s630 + $0x80] sm:$0xff]
        %665 = vst [vmem:[%s631 + $0x80] sm:$0xff] %v664
        %v666 = vld [vmem:[%s630 + $0x88] sm:$0xff]
        %667 = vst [vmem:[%s631 + $0x88] sm:$0xff] %v666
        %v668 = vld [vmem:[%s630 + $0x90] sm:$0xff]
        %669 = vst [vmem:[%s631 + $0x90] sm:$0xff] %v668
        %v670 = vld [vmem:[%s630 + $0x98] sm:$0xff]
        %671 = vst [vmem:[%s631 + $0x98] sm:$0xff] %v670
        %v672 = vld [vmem:[%s630 + $0xa0] sm:$0xff]
        %673 = vst [vmem:[%s631 + $0xa0] sm:$0xff] %v672
        %v674 = vld [vmem:[%s630 + $0xa8] sm:$0xff]
        %675 = vst [vmem:[%s631 + $0xa8] sm:$0xff] %v674
        %v676 = vld [vmem:[%s630 + $0xb0] sm:$0xff]
        %677 = vst [vmem:[%s631 + $0xb0] sm:$0xff] %v676
        %v678 = vld [vmem:[%s630 + $0xb8] sm:$0xff]
        %679 = vst [vmem:[%s631 + $0xb8] sm:$0xff] %v678
      $region233: #{wdiscriminator_forward.1} parent=227 // loop_footer
        %s629 = sadd.s32 1, %s625
      $region234: #{wdiscriminator_forward.1} parent=227 // loop_footer_branch
        %624 = sbr.rel target = $region230
      $region235: #{wdiscriminator_forward.1} parent=227 // loop_exit
        _
    $region228: #{wdiscriminator_forward.1} parent=212 // pred_fallthru
      _
    %p680 = pneg %p620
    // Predicated region
    $region236: #{wdiscriminator_forward.1} parent=212 // pred_check
      _
    $region237: #{wdiscriminator_forward.1} parent=212 // pred_check_branch
      %682 = sbr.rel (%p620) target = $region239
    $region238: #{wdiscriminator_forward.1} parent=212 // pred_region
      %s683 = sand.u32 192, 7
    $region239: #{wdiscriminator_forward.1} parent=212 // pred_fallthru
      _
  $region213: #{wdiscriminator_forward.1} parent=0 // pred_fallthru
    _
  // Predicated region
  $region214: #{wdiscriminator_forward.1} parent=0 // pred_check
    %p605 = pneg %p601
  $region215: #{wdiscriminator_forward.1} parent=0 // pred_check_branch
    %607 = sbr.rel (%p605) target = $region217
  $region216: #{wdiscriminator_forward.1} parent=0 // pred_region
    %s608 = sshllo.u32 0, 192
    loop: start=0, step=1, limit=1
    $region218: #{wdiscriminator_forward.1} parent=216 // loop_pre_header
      _
    $region219: #{wdiscriminator_forward.1} parent=216 // loop_header
      %s610 = sphi 0, %s614
      %p611 = scmp.ge.s32.totalorder %s610, 1
      %s615 = sphi %s21, %s21
      %s616 = sphi [#allocation6], [#allocation6]
    $region220: #{wdiscriminator_forward.1} parent=216 // loop_header_branch
      %613 = sbr.rel (%p611) target = $region224
    $region221: #{wdiscriminator_forward.1} parent=216 // loop_body
      %v617 = vld [vmem:[%s615] sm:%s608]
      %618 = vst [vmem:[%s616] sm:%s608] %v617
    $region222: #{wdiscriminator_forward.1} parent=216 // loop_footer
      %s614 = sadd.s32 1, %s610
    $region223: #{wdiscriminator_forward.1} parent=216 // loop_footer_branch
      %609 = sbr.rel target = $region219
    $region224: #{wdiscriminator_forward.1} parent=216 // loop_exit
      _
  $region217: #{wdiscriminator_forward.1} parent=0 // pred_fallthru
    _
  // Predicated region
  $region240: #{wdiscriminator_forward.1} parent=0 // pred_check
    _
  $region241: #{wdiscriminator_forward.1} parent=0 // pred_check_branch
    %686 = sbr.rel (0) target = $region243
  $region242: #{wdiscriminator_forward.1} parent=0 // pred_region
    %687 = vsyncadd %s599, 3072
  $region243: #{wdiscriminator_forward.1} parent=0 // pred_fallthru
    _
  %v688 = vld [vmem:[%s0] sm:$0xff]
  %v689 = vld [vmem:[%s0 + $0x8] sm:$0xff]
  %v690 = vld [vmem:[%s0 + $0x10] sm:$0xff]
  %v691 = vld [vmem:[%s0 + $0x18] sm:$0xff]
  %vm694 = vcmask 1046528
  %v695 = vrot.slane %v688, 1
  %v696 = vrot.slane %v689, 1
  %v697 = vsel %vm694, %v695, %v696
  %698 = vrot.lane.b32.xlu0 %v697, 48
  %v699 = vpop.permute.xlu0 %698
  %700 = vrot.lane.b32.xlu0 %v696, 48
  %v701 = vpop.permute.xlu0 %700
  %vm704 = vcmask 1045504
  %v705 = vrot.slane %v688, 2
  %v706 = vrot.slane %v689, 2
  %v707 = vsel %vm704, %v705, %v706
  %708 = vrot.lane.b32.xlu0 %v707, 96
  %v709 = vpop.permute.xlu0 %708
  %710 = vrot.lane.b32.xlu0 %v706, 96
  %v711 = vpop.permute.xlu0 %710
  %vm714 = vcmask 392192
  %v715 = vsel %vm714, %v688, %v699
  %v716 = vsel %vm714, %v689, %v701
  %vm717 = vcmask 785408
  %v718 = vsel %vm717, %v715, %v709
  %v719 = vsel %vm717, %v716, %v711
  %v722 = vrot.slane %v690, 1
  %v723 = vrot.slane %v691, 1
  %v724 = vsel %vm694, %v722, %v723
  %725 = vrot.lane.b32.xlu0 %v724, 48
  %v726 = vpop.permute.xlu0 %725
  %727 = vrot.lane.b32.xlu0 %v723, 48
  %v728 = vpop.permute.xlu0 %727
  %v731 = vrot.slane %v690, 2
  %v732 = vrot.slane %v691, 2
  %v733 = vsel %vm704, %v731, %v732
  %734 = vrot.lane.b32.xlu0 %v733, 96
  %v735 = vpop.permute.xlu0 %734
  %736 = vrot.lane.b32.xlu0 %v732, 96
  %v737 = vpop.permute.xlu0 %736
  %v740 = vsel %vm714, %v690, %v726
  %v741 = vsel %vm714, %v691, %v728
  %v742 = vsel %vm717, %v740, %v735
  %v743 = vsel %vm717, %v741, %v737
  %v746 = vrot.slane %v742, 2
  %v747 = vrot.slane %v735, 2
  %v748 = vrot.slane %v743, 2
  %v749 = vsel %vm704, %v746, %v748
  %v750 = vrot.slane %v737, 2
  %v751 = vsel %vm704, %v747, %v750
  %v756 = vsel %vm704, %v719, %v746
  %v757 = vsel %vm704, %v711, %v747
  %s758 = smul.u32 8, 18
  %s759 = smul.u32 %s758, 2
  %s760 = sshll.u32 %s759, 4
  %761 = dma.done [#allocation7], %s760
  %v762 = vld [vmem:[#allocation2] sm:$0xff]
  %v763 = vld [vmem:[#allocation2 + $0x8] sm:$0xff]
  %v764 = vld [vmem:[#allocation2 + $0x10] sm:$0xff]
  %v765 = vld [vmem:[#allocation2 + $0x18] sm:$0xff]
  %v766 = vld [vmem:[#allocation2 + $0x20] sm:$0xff]
  %v767 = vld [vmem:[#allocation2 + $0x28] sm:$0xff]
  %v768 = vld [vmem:[#allocation2 + $0x30] sm:$0xff]
  %v769 = vld [vmem:[#allocation2 + $0x38] sm:$0xff]
  %v770 = vld [vmem:[#allocation2 + $0x40] sm:$0xff]
  %v771 = vld [vmem:[#allocation2 + $0x48] sm:$0xff]
  %v772 = vld [vmem:[#allocation2 + $0x50] sm:$0xff]
  %v773 = vld [vmem:[#allocation2 + $0x58] sm:$0xff]
  %v774 = vld [vmem:[#allocation2 + $0x60] sm:$0xff]
  %v775 = vld [vmem:[#allocation2 + $0x68] sm:$0xff]
  %v776 = vld [vmem:[#allocation2 + $0x70] sm:$0xff]
  %v777 = vld [vmem:[#allocation2 + $0x78] sm:$0xff]
  %v778 = vld [vmem:[#allocation2 + $0x80] sm:$0xff]
  %v779 = vld [vmem:[#allocation2 + $0x88] sm:$0xff]
  %v780 = vld [vmem:[#allocation2 + $0x90] sm:$0xff]
  %v781 = vld [vmem:[#allocation2 + $0x98] sm:$0xff]
  %v782 = vld [vmem:[#allocation2 + $0xa0] sm:$0xff]
  %v783 = vld [vmem:[#allocation2 + $0xa8] sm:$0xff]
  %v784 = vld [vmem:[#allocation2 + $0xb0] sm:$0xff]
  %v785 = vld [vmem:[#allocation2 + $0xb8] sm:$0xff]
  %v786 = vld [vmem:[#allocation2 + $0xc0] sm:$0xff]
  %v787 = vld [vmem:[#allocation2 + $0xc8] sm:$0xff]
  %v788 = vld [vmem:[#allocation2 + $0xd0] sm:$0xff]
  %v789 = vld [vmem:[#allocation2 + $0xd8] sm:$0xff]
  %v790 = vld [vmem:[#allocation2 + $0xe0] sm:$0xff]
  %v791 = vld [vmem:[#allocation2 + $0xe8] sm:$0xff]
  %v792 = vld [vmem:[#allocation2 + $0xf0] sm:$0xff]
  %v793 = vld [vmem:[#allocation2 + $0xf8] sm:$0xff]
  %v794 = vld [vmem:[#allocation2 + $0x100] sm:$0xff]
  %v795 = vld [vmem:[#allocation2 + $0x108] sm:$0xff]
  %v796 = vld [vmem:[#allocation2 + $0x110] sm:$0xff]
  %v797 = vld [vmem:[#allocation2 + $0x118] sm:$0xff]
  %vm798 = vcmask 130048
  %v799 = vsel %vm798, %v709, 0
  %v802 = vsel %vm798, %v757, 0
  %v804 = vsel %vm798, %v751, 0
  %v806 = vsel %vm798, %v750, 0
  %808 = vmatprep.subr.mxu0 %v763
  %809 = vmatpush1.msra.mxu0 %v762
  %810 = vmatprep.subr.mxu0 %v765
  %811 = vmatpush1.msra.mxu0 %v764
  %812 = vmatprep.subr.mxu0 %v767
  %813 = vmatpush1.msra.mxu0 %v766
  %814 = vmatprep.subr.mxu0 %v769
  %815 = vmatpush1.msra.mxu0 %v768
  %816 = vmatprep.subr.mxu0 %v771
  %817 = vmatpush1.msra.mxu0 %v770
  %818 = vmatprep.subr.mxu0 %v773
  %819 = vmatpush1.msra.mxu0 %v772
  %820 = vmatprep.subr.mxu0 %v775
  %821 = vmatpush1.msra.mxu0 %v774
  %822 = vmatprep.subr.mxu0 %v777
  %823 = vmatpush1.msra.mxu0 %v776
  %824 = vmatprep.subr.mxu0 %v779
  %825 = vmatpush1.msra.mxu0 %v778
  %826 = vmatprep.subr.mxu0 %v781
  %827 = vmatpush1.msra.mxu0 %v780
  %828 = vmatprep.subr.mxu0 %v783
  %829 = vmatpush1.msra.mxu0 %v782
  %830 = vmatprep.subr.mxu0 %v785
  %831 = vmatpush1.msra.mxu0 %v784
  %832 = vmatprep.subr.mxu0 %v787
  %833 = vmatpush1.msra.mxu0 %v786
  %834 = vmatprep.subr.mxu0 %v789
  %835 = vmatpush1.msra.mxu0 %v788
  %836 = vmatprep.subr.mxu0 %v791
  %837 = vmatpush1.msra.mxu0 %v790
  %838 = vmatprep.subr.mxu0 %v793
  %839 = vmatpush1.msra.mxu0 %v792
  %840 = vmatprep.subr.mxu0 %v795
  %841 = vmatpush1.msra.mxu0 %v794
  %842 = vmatprep.subr.mxu0 %v797
  %843 = vmatpush1.msra.mxu0 %v796
  %844 = vmatprep.subr.mxu0 0.0
  %845 = vmatpush1.msra.mxu0 0.0
  %846 = vmatprep.subr.mxu0 0.0
  %847 = vmatpush1.msra.mxu0 0.0
  %848 = vmatprep.subr.mxu0 0.0
  %849 = vmatpush1.msra.mxu0 0.0
  %850 = vmatprep.subr.mxu0 0.0
  %851 = vmatpush1.msra.mxu0 0.0
  %852 = vmatprep.subr.mxu0 0.0
  %853 = vmatpush1.msra.mxu0 0.0
  %854 = vmatprep.subr.mxu0 0.0
  %855 = vmatpush1.msra.mxu0 0.0
  %856 = vmatprep.subr.mxu0 0.0
  %857 = vmatpush1.msra.mxu0 0.0
  %858 = vmatprep.subr.mxu0 0.0
  %859 = vmatpush1.msra.mxu0 0.0
  %860 = vmatprep.subr.mxu0 0.0
  %861 = vmatpush1.msra.mxu0 0.0
  %862 = vmatprep.subr.mxu0 0.0
  %863 = vmatpush1.msra.mxu0 0.0
  %864 = vmatprep.subr.mxu0 0.0
  %865 = vmatpush1.msra.mxu0 0.0
  %866 = vmatprep.subr.mxu0 0.0
  %867 = vmatpush1.msra.mxu0 0.0
  %868 = vmatprep.subr.mxu0 0.0
  %869 = vmatpush1.msra.mxu0 0.0
  %870 = vmatprep.subr.mxu0 0.0
  %871 = vmatpush1.msra.mxu0 0.0
  %872 = vmatprep.mubr.f32.mxu0 %v799
  %873 = vmatmul.mubr.f32.gmra.mrb[0].mxu0 %v718
  %v874 = vpop.f32.mrb[0].mxu0
  %v875 = vadd.f32 0.0, %v874
  %v876 = vpop.f32.mrb[0].mxu0
  %v877 = vadd.f32 0.0, %v876
  %878 = vmatprep.mubr.f32.mxu0 %v802
  %879 = vmatmul.mubr.f32.gmra.mrb[0].mxu0 %v756
  %v880 = vpop.f32.mrb[0].mxu0
  %v881 = vadd.f32 0.0, %v880
  %v882 = vpop.f32.mrb[0].mxu0
  %v883 = vadd.f32 0.0, %v882
  %884 = vmatprep.mubr.f32.mxu0 %v804
  %885 = vmatmul.mubr.f32.gmra.mrb[0].mxu0 %v749
  %v886 = vpop.f32.mrb[0].mxu0
  %v887 = vadd.f32 0.0, %v886
  %v888 = vpop.f32.mrb[0].mxu0
  %v889 = vadd.f32 0.0, %v888
  %890 = vmatprep.mubr.f32.mxu0 %v806
  %891 = vmatmul.mubr.f32.gmra.mrb[0].mxu0 %v748
  %v892 = vpop.f32.mrb[0].mxu0
  %v893 = vadd.f32 0.0, %v892
  %v894 = vpop.f32.mrb[0].mxu0
  %v895 = vadd.f32 0.0, %v894
  %896 = vdwg.mxu0
  %v897 = vadd.f32 %v875, %v881
  %v898 = vadd.f32 %v897, %v887
  %vm899 = vcmask 1043456
  %v900 = vsel %vm899, %v893, 0.0
  %v901 = vadd.f32 %v898, %v900
  %v902 = vrot.slane %v901, 4
  %v903 = vadd.f32 %v901, %v902
  %v904 = vrot.slane %v903, 2
  %v905 = vadd.f32 %v903, %v904
  %v906 = vrot.slane %v905, 1
  %v907 = vadd.f32 %v905, %v906
  %v908 = vsel %vm717, %v877, 0.0
  %v909 = vsel %vm717, %v883, 0.0
  %v910 = vadd.f32 %v908, %v909
  %v911 = vsel %vm717, %v889, 0.0
  %v912 = vadd.f32 %v910, %v911
  %vm913 = vcmask 781312
  %v914 = vsel %vm913, %v895, 0.0
  %v915 = vadd.f32 %v912, %v914
  %v916 = vrot.slane %v915, 4
  %v917 = vadd.f32 %v915, %v916
  %v918 = vrot.slane %v917, 2
  %v919 = vadd.f32 %v917, %v918
  %v920 = vrot.slane %v919, 1
  %v921 = vadd.f32 %v919, %v920
  %v922 = vmul.f32 %v875, %v875
  %v923 = vmul.f32 %v877, %v877
  %v924 = vmul.f32 %v881, %v881
  %v925 = vmul.f32 %v883, %v883
  %v926 = vmul.f32 %v887, %v887
  %v927 = vmul.f32 %v889, %v889
  %v928 = vmul.f32 %v893, %v893
  %v929 = vmul.f32 %v895, %v895
  %v930 = vadd.f32 %v922, %v924
  %v931 = vadd.f32 %v930, %v926
  %v932 = vsel %vm899, %v928, 0.0
  %v933 = vadd.f32 %v931, %v932
  %v934 = vrot.slane %v933, 4
  %v935 = vadd.f32 %v933, %v934
  %v936 = vrot.slane %v935, 2
  %v937 = vadd.f32 %v935, %v936
  %v938 = vrot.slane %v937, 1
  %v939 = vadd.f32 %v937, %v938
  %v940 = vsel %vm717, %v923, 0.0
  %v941 = vsel %vm717, %v925, 0.0
  %v942 = vadd.f32 %v940, %v941
  %v943 = vsel %vm717, %v927, 0.0
  %v944 = vadd.f32 %v942, %v943
  %v945 = vsel %vm913, %v929, 0.0
  %v946 = vadd.f32 %v944, %v945
  %v947 = vrot.slane %v946, 4
  %v948 = vadd.f32 %v946, %v947
  %v949 = vrot.slane %v948, 2
  %v950 = vadd.f32 %v948, %v949
  %v951 = vrot.slane %v950, 1
  %v952 = vadd.f32 %v950, %v951
  %vm953 = vcmask 1040384
  %v954 = vsel %vm953, %v907, %v939
  %v955 = vsel %vm953, %v921, %v952
  %v956 = vld [vmem:[%s4] sm:$0xff]
  %v957 = vld [vmem:[%s4 + $0x8] sm:$0xff]
  %v958 = vld [vmem:[%s4 + $0x10] sm:$0xff]
  %v959 = vld [vmem:[%s4 + $0x18] sm:$0xff]
  %v960 = vld [vmem:[%s4 + $0x20] sm:$0xff]
  %v961 = vld [vmem:[%s4 + $0x28] sm:$0xff]
  %v962 = vld [vmem:[%s4 + $0x30] sm:$0xff]
  %v963 = vld [vmem:[%s4 + $0x38] sm:$0xff]
  %v964 = vld [vmem:[%s4 + $0x40] sm:$0xff]
  %v965 = vld [vmem:[%s4 + $0x48] sm:$0xff]
  %v966 = vld [vmem:[%s4 + $0x50] sm:$0xff]
  %v967 = vld [vmem:[%s4 + $0x58] sm:$0xff]
  %v968 = vld [vmem:[%s4 + $0x60] sm:$0xff]
  %v969 = vld [vmem:[%s4 + $0x68] sm:$0xff]
  %v970 = vld [vmem:[%s4 + $0x70] sm:$0xff]
  %v971 = vld [vmem:[%s4 + $0x78] sm:$0xff]
  %v972 = vld [vmem:[%s4 + $0x80] sm:$0xff]
  %v973 = vld [vmem:[%s4 + $0x88] sm:$0xff]
  %v974 = vld [vmem:[%s4 + $0x90] sm:$0xff]
  %v975 = vld [vmem:[%s4 + $0x98] sm:$0xff]
  %v976 = vld [vmem:[%s4 + $0xa0] sm:$0xff]
  %v977 = vld [vmem:[%s4 + $0xa8] sm:$0xff]
  %v978 = vld [vmem:[%s4 + $0xb0] sm:$0xff]
  %v979 = vld [vmem:[%s4 + $0xb8] sm:$0xff]
  %v980 = vld [vmem:[%s4 + $0xc0] sm:$0xff]
  %v981 = vld [vmem:[%s4 + $0xc8] sm:$0xff]
  %v982 = vld [vmem:[%s4 + $0xd0] sm:$0xff]
  %v983 = vld [vmem:[%s4 + $0xd8] sm:$0xff]
  %v985 = vsel %vm717, %v955, 0
  %987 = vmatprep.subr.mxu0 0.0
  %988 = vmatpush1.msra.mxu0 %v956
  %989 = vmatprep.subr.mxu0 0.0
  %990 = vmatpush1.msra.mxu0 %v957
  %991 = vmatprep.subr.mxu0 0.0
  %992 = vmatpush1.msra.mxu0 %v958
  %993 = vmatprep.subr.mxu0 0.0
  %994 = vmatpush1.msra.mxu0 %v959
  %995 = vmatprep.subr.mxu0 0.0
  %996 = vmatpush1.msra.mxu0 %v960
  %997 = vmatprep.subr.mxu0 0.0
  %998 = vmatpush1.msra.mxu0 %v961
  %999 = vmatprep.subr.mxu0 0.0
  %1000 = vmatpush1.msra.mxu0 %v962
  %1001 = vmatprep.subr.mxu0 0.0
  %1002 = vmatpush1.msra.mxu0 %v963
  %1003 = vmatprep.subr.mxu0 0.0
  %1004 = vmatpush1.msra.mxu0 %v964
  %1005 = vmatprep.subr.mxu0 0.0
  %1006 = vmatpush1.msra.mxu0 %v965
  %1007 = vmatprep.subr.mxu0 0.0
  %1008 = vmatpush1.msra.mxu0 %v966
  %1009 = vmatprep.subr.mxu0 0.0
  %1010 = vmatpush1.msra.mxu0 %v967
  %1011 = vmatprep.subr.mxu0 0.0
  %1012 = vmatpush1.msra.mxu0 %v968
  %1013 = vmatprep.subr.mxu0 0.0
  %1014 = vmatpush1.msra.mxu0 %v969
  %1015 = vmatprep.subr.mxu0 0.0
  %1016 = vmatpush1.msra.mxu0 %v970
  %1017 = vmatprep.subr.mxu0 0.0
  %1018 = vmatpush1.msra.mxu0 %v971
  %1019 = vmatprep.subr.mxu0 0.0
  %1020 = vmatpush1.msra.mxu0 %v972
  %1021 = vmatprep.subr.mxu0 0.0
  %1022 = vmatpush1.msra.mxu0 %v973
  %1023 = vmatprep.subr.mxu0 0.0
  %1024 = vmatpush1.msra.mxu0 %v974
  %1025 = vmatprep.subr.mxu0 0.0
  %1026 = vmatpush1.msra.mxu0 %v975
  %1027 = vmatprep.subr.mxu0 0.0
  %1028 = vmatpush1.msra.mxu0 %v976
  %1029 = vmatprep.subr.mxu0 0.0
  %1030 = vmatpush1.msra.mxu0 %v977
  %1031 = vmatprep.subr.mxu0 0.0
  %1032 = vmatpush1.msra.mxu0 %v978
  %1033 = vmatprep.subr.mxu0 0.0
  %1034 = vmatpush1.msra.mxu0 %v979
  %1035 = vmatprep.subr.mxu0 0.0
  %1036 = vmatpush1.msra.mxu0 %v980
  %1037 = vmatprep.subr.mxu0 0.0
  %1038 = vmatpush1.msra.mxu0 %v981
  %1039 = vmatprep.subr.mxu0 0.0
  %1040 = vmatpush1.msra.mxu0 %v982
  %1041 = vmatprep.subr.mxu0 0.0
  %1042 = vmatpush1.msra.mxu0 %v983
  %1043 = vmatprep.subr.mxu0 0.0
  %1044 = vmatpush1.msra.mxu0 0.0
  %1045 = vmatprep.subr.mxu0 0.0
  %1046 = vmatpush1.msra.mxu0 0.0
  %1047 = vmatprep.subr.mxu0 0.0
  %1048 = vmatpush1.msra.mxu0 0.0
  %1049 = vmatprep.subr.mxu0 0.0
  %1050 = vmatpush1.msra.mxu0 0.0
  %1051 = vmatprep.mubr.f32.mxu0 %v985
  %1052 = vmatmul.mubr.f32.gmra.mrb[0].mxu0 %v954
  %v1053 = vpop.f32.mrb[0].mxu0
  %v1054 = vadd.f32 0.0, %v1053
  %v1055 = vpop.f32.mrb[0].mxu0
  %1056 = vdwg.mxu0
  %v1057 = vmul.f32 %v1054, 0.0025510204
  %v1058 = vmul.f32 %v1057, %v1057
  %v1060 = vrot.slane %v1058, 7
  %v1062 = vsub.f32 %v1057, %v1060
  %v1063 = vld [vmem:[%s2] sm:$0x1]
  %v1064 = vadd.f32 %v1062, 1e-05
  %v1065 = vrsqrt.pop %v1064
  %v1068 = vunpack.c.l.s4 1966171168
  %v1069 = vunpack.c.0.s8 %v1068
  %v1070 = vlaneseq
  %v1071 = vshrl.u32 %v1070, 7
  %v1072 = vsub.s32 %v1069, %v1071
  %v1073 = vrot.slane %v1065, %v1072
  %v1074 = vcombine.high %v1073, %v1073
  %v1076 = vunpack.c.l.s4 1966171168
  %v1077 = vunpack.c.0.s8 %v1076
  %v1078 = vlaneseq
  %v1079 = vshrl.u32 %v1078, 7
  %v1080 = vsub.s32 %v1077, %v1079
  %v1081 = vrot.slane %v1074, %v1080
  %v1083 = vmul.f32 %v1063, %v1081
  %v1084 = vld [vmem:[%s3] sm:$0x1]
  %v1085 = vmul.f32 %v1057, %v1083
  %v1086 = vsub.f32 %v1084, %v1085
  %v1088 = vlaneseq
  %v1089 = vshrl.u32 %v1088, 7
  %v1090 = vsub.s32 0, %v1089
  %v1091 = vrot.slane %v1086, %v1090
  %v1093 = vsel %vm953, %v1083, %v1091
  %v1094 = vld [vmem:[%s5] sm:$0xff]
  %v1095 = vld [vmem:[%s5 + $0x8] sm:$0xff]
  %v1096 = vld [vmem:[%s5 + $0x10] sm:$0xff]
  %v1097 = vld [vmem:[%s5 + $0x18] sm:$0xff]
  %v1099 = vsel %vm798, %v1093, 0
  %1101 = vmatprep.subr.mxu0 %v1095
  %1102 = vmatpush1.msra.mxu0 %v1094
  %1103 = vmatprep.subr.mxu0 %v1097
  %1104 = vmatpush1.msra.mxu0 %v1096
  %1105 = vmatprep.subr.mxu0 0.0
  %1106 = vmatpush1.msra.mxu0 0.0
  %1107 = vmatprep.subr.mxu0 0.0
  %1108 = vmatpush1.msra.mxu0 0.0
  %1109 = vmatprep.subr.mxu0 0.0
  %1110 = vmatpush1.msra.mxu0 0.0
  %1111 = vmatprep.subr.mxu0 0.0
  %1112 = vmatpush1.msra.mxu0 0.0
  %1113 = vmatprep.subr.mxu0 0.0
  %1114 = vmatpush1.msra.mxu0 0.0
  %1115 = vmatprep.subr.mxu0 0.0
  %1116 = vmatpush1.msra.mxu0 0.0
  %1117 = vmatprep.subr.mxu0 0.0
  %1118 = vmatpush1.msra.mxu0 0.0
  %1119 = vmatprep.subr.mxu0 0.0
  %1120 = vmatpush1.msra.mxu0 0.0
  %1121 = vmatprep.subr.mxu0 0.0
  %1122 = vmatpush1.msra.mxu0 0.0
  %1123 = vmatprep.subr.mxu0 0.0
  %1124 = vmatpush1.msra.mxu0 0.0
  %1125 = vmatprep.subr.mxu0 0.0
  %1126 = vmatpush1.msra.mxu0 0.0
  %1127 = vmatprep.subr.mxu0 0.0
  %1128 = vmatpush1.msra.mxu0 0.0
  %1129 = vmatprep.subr.mxu0 0.0
  %1130 = vmatpush1.msra.mxu0 0.0
  %1131 = vmatprep.subr.mxu0 0.0
  %1132 = vmatpush1.msra.mxu0 0.0
  %1133 = vmatprep.subr.mxu0 0.0
  %1134 = vmatpush1.msra.mxu0 0.0
  %1135 = vmatprep.subr.mxu0 0.0
  %1136 = vmatpush1.msra.mxu0 0.0
  %1137 = vmatprep.subr.mxu0 0.0
  %1138 = vmatpush1.msra.mxu0 0.0
  %1139 = vmatprep.subr.mxu0 0.0
  %1140 = vmatpush1.msra.mxu0 0.0
  %1141 = vmatprep.subr.mxu0 0.0
  %1142 = vmatpush1.msra.mxu0 0.0
  %1143 = vmatprep.subr.mxu0 0.0
  %1144 = vmatpush1.msra.mxu0 0.0
  %1145 = vmatprep.subr.mxu0 0.0
  %1146 = vmatpush1.msra.mxu0 0.0
  %1147 = vmatprep.subr.mxu0 0.0
  %1148 = vmatpush1.msra.mxu0 0.0
  %1149 = vmatprep.subr.mxu0 0.0
  %1150 = vmatpush1.msra.mxu0 0.0
  %1151 = vmatprep.subr.mxu0 0.0
  %1152 = vmatpush1.msra.mxu0 0.0
  %1153 = vmatprep.subr.mxu0 0.0
  %1154 = vmatpush1.msra.mxu0 0.0
  %1155 = vmatprep.subr.mxu0 0.0
  %1156 = vmatpush1.msra.mxu0 0.0
  %1157 = vmatprep.subr.mxu0 0.0
  %1158 = vmatpush1.msra.mxu0 0.0
  %1159 = vmatprep.subr.mxu0 0.0
  %1160 = vmatpush1.msra.mxu0 0.0
  %1161 = vmatprep.subr.mxu0 0.0
  %1162 = vmatpush1.msra.mxu0 0.0
  %1163 = vmatprep.subr.mxu0 0.0
  %1164 = vmatpush1.msra.mxu0 0.0
  %1165 = vmatprep.mubr.f32.mxu0 0.0
  %1166 = vmatmul.mubr.f32.gmra.mrb[0].mxu0 %v1099
  %v1167 = vpop.f32.mrb[0].mxu0
  %v1168 = vadd.f32 0.0, %v1167
  %v1169 = vpop.f32.mrb[0].mxu0
  %v1170 = vadd.f32 0.0, %v1169
  %1171 = vdwg.mxu0
  %v1172 = vlaneseq
  %v1173 = vshrl.u32 %v1172, 7
  %v1174 = vsub.s32 0, %v1173
  %v1175 = vrot.slane %v1168, %v1174
  %v1176 = vlaneseq
  %v1177 = vshrl.u32 %v1176, 7
  %v1178 = vsub.s32 0, %v1177
  %v1179 = vrot.slane %v1170, %v1178
  %v1180 = vmul.f32 %v875, %v1175
  %v1181 = vmul.f32 %v877, %v1179
  %v1182 = vmul.f32 %v881, %v1175
  %v1183 = vmul.f32 %v883, %v1179
  %v1184 = vmul.f32 %v887, %v1175
  %v1185 = vmul.f32 %v889, %v1179
  %v1186 = vmul.f32 %v893, %v1175
  %v1187 = vmul.f32 %v895, %v1179
  %v1188 = vlaneseq
  %v1189 = vshrl.u32 %v1188, 7
  %v1190 = vsub.s32 1, %v1189
  %v1191 = vrot.slane %v1168, %v1190
  %v1192 = vlaneseq
  %v1193 = vshrl.u32 %v1192, 7
  %v1194 = vsub.s32 1, %v1193
  %v1195 = vrot.slane %v1170, %v1194
  %v1196 = vadd.f32 %v1180, %v1191
  %v1197 = vadd.f32 %v1181, %v1195
  %v1198 = vadd.f32 %v1182, %v1191
  %v1199 = vadd.f32 %v1183, %v1195
  %v1200 = vadd.f32 %v1184, %v1191
  %v1201 = vadd.f32 %v1185, %v1195
  %v1202 = vadd.f32 %v1186, %v1191
  %v1203 = vadd.f32 %v1187, %v1195
  %vm1204 = vcmp.ge.f32.partialorder %v1196, 0.0
  %vm1205 = vcmp.ge.f32.partialorder %v1197, 0.0
  %vm1206 = vcmp.ge.f32.partialorder %v1198, 0.0
  %vm1207 = vcmp.ge.f32.partialorder %v1199, 0.0
  %vm1208 = vcmp.ge.f32.partialorder %v1200, 0.0
  %vm1209 = vcmp.ge.f32.partialorder %v1201, 0.0
  %vm1210 = vcmp.ge.f32.partialorder %v1202, 0.0
  %vm1211 = vcmp.ge.f32.partialorder %v1203, 0.0
  %v1212 = vmul.f32 %v1196, 0.2
  %v1213 = vmul.f32 %v1197, 0.2
  %v1214 = vmul.f32 %v1198, 0.2
  %v1215 = vmul.f32 %v1199, 0.2
  %v1216 = vmul.f32 %v1200, 0.2
  %v1217 = vmul.f32 %v1201, 0.2
  %v1218 = vmul.f32 %v1202, 0.2
  %v1219 = vmul.f32 %v1203, 0.2
  %v1220 = vsel %vm1204, %v1196, %v1212
  %v1221 = vsel %vm1205, %v1197, %v1213
  %v1222 = vsel %vm1206, %v1198, %v1214
  %v1223 = vsel %vm1207, %v1199, %v1215
  %v1224 = vsel %vm1208, %v1200, %v1216
  %v1225 = vsel %vm1209, %v1201, %v1217
  %v1226 = vsel %vm1210, %v1202, %v1218
  %v1227 = vsel %vm1211, %v1203, %v1219
  %v1232 = vrot.slane %v1220, 1
  %v1233 = vrot.slane %v1222, 1
  %v1234 = vsel %vm694, %v1232, %v1233
  %v1235 = vrot.slane %v1221, 1
  %v1236 = vrot.slane %v1223, 1
  %v1237 = vsel %vm694, %v1235, %v1236
  %1238 = vrot.lane.b32.xlu0 %v1234, 96
  %v1239 = vpop.permute.xlu0 %1238
  %1240 = vrot.lane.b32.xlu0 %v1237, 96
  %v1241 = vpop.permute.xlu0 %1240
  %1242 = vrot.lane.b32.xlu0 %v1233, 96
  %v1243 = vpop.permute.xlu0 %1242
  %1244 = vrot.lane.b32.xlu0 %v1236, 96
  %v1245 = vpop.permute.xlu0 %1244
  %v1246 = vsel %vm717, %v1239, %v1241
  %v1247 = vsel %vm717, %v1243, %v1245
  %v1254 = vrot.slane %v1220, 2
  %v1255 = vrot.slane %v1222, 2
  %v1256 = vsel %vm704, %v1254, %v1255
  %v1257 = vrot.slane %v1221, 2
  %v1258 = vrot.slane %v1223, 2
  %v1259 = vsel %vm704, %v1257, %v1258
  %1260 = vrot.lane.b32.xlu0 %v1256, 64
  %v1261 = vpop.permute.xlu0 %1260
  %1262 = vrot.lane.b32.xlu0 %v1259, 64
  %v1263 = vpop.permute.xlu0 %1262
  %1264 = vrot.lane.b32.xlu0 %v1255, 64
  %v1265 = vpop.permute.xlu0 %1264
  %1266 = vrot.lane.b32.xlu0 %v1258, 64
  %v1267 = vpop.permute.xlu0 %1266
  %vm1268 = vcmask 523264
  %v1269 = vsel %vm1268, %v1261, %v1263
  %v1270 = vsel %vm1268, %v1265, %v1267
  %v1276 = vsel %vm717, %v1221, %v1239
  %v1277 = vsel %vm717, %v1223, %v1243
  %v1278 = vsel %vm1268, %v1241, %v1261
  %v1279 = vsel %vm1268, %v1245, %v1265
  %v1284 = vrot.slane %v1224, 1
  %v1285 = vsel %vm694, %v1233, %v1284
  %v1286 = vrot.slane %v1225, 1
  %v1287 = vsel %vm694, %v1236, %v1286
  %v1288 = vrot.slane %v1226, 1
  %v1289 = vsel %vm694, %v1284, %v1288
  %v1290 = vrot.slane %v1227, 1
  %v1291 = vsel %vm694, %v1286, %v1290
  %1292 = vrot.lane.b32.xlu0 %v1285, 96
  %v1293 = vpop.permute.xlu0 %1292
  %1294 = vrot.lane.b32.xlu0 %v1287, 96
  %v1295 = vpop.permute.xlu0 %1294
  %1296 = vrot.lane.b32.xlu0 %v1289, 96
  %v1297 = vpop.permute.xlu0 %1296
  %1298 = vrot.lane.b32.xlu0 %v1291, 96
  %v1299 = vpop.permute.xlu0 %1298
  %1300 = vrot.lane.b32.xlu0 %v1288, 96
  %v1301 = vpop.permute.xlu0 %1300
  %1302 = vrot.lane.b32.xlu0 %v1290, 96
  %v1303 = vpop.permute.xlu0 %1302
  %v1304 = vsel %vm717, %v1293, %v1295
  %v1305 = vsel %vm717, %v1297, %v1299
  %v1306 = vsel %vm717, %v1301, %v1303
  %v1313 = vrot.slane %v1224, 2
  %v1314 = vrot.slane %v1225, 2
  %v1315 = vrot.slane %v1226, 2
  %v1316 = vsel %vm704, %v1313, %v1315
  %v1317 = vrot.slane %v1227, 2
  %v1318 = vsel %vm704, %v1314, %v1317
  %1319 = vrot.lane.b32.xlu0 %v1313, 64
  %v1320 = vpop.permute.xlu0 %1319
  %1321 = vrot.lane.b32.xlu0 %v1314, 64
  %v1322 = vpop.permute.xlu0 %1321
  %1323 = vrot.lane.b32.xlu0 %v1316, 64
  %v1324 = vpop.permute.xlu0 %1323
  %1325 = vrot.lane.b32.xlu0 %v1318, 64
  %v1326 = vpop.permute.xlu0 %1325
  %1327 = vrot.lane.b32.xlu0 %v1315, 64
  %v1328 = vpop.permute.xlu0 %1327
  %1329 = vrot.lane.b32.xlu0 %v1317, 64
  %v1330 = vpop.permute.xlu0 %1329
  %v1331 = vsel %vm1268, %v1320, %v1322
  %v1332 = vsel %vm1268, %v1324, %v1326
  %v1333 = vsel %vm1268, %v1328, %v1330
  %v1337 = vsel %vm717, %v1223, %v1293
  %v1338 = vsel %vm717, %v1225, %v1297
  %v1339 = vsel %vm717, %v1227, %v1301
  %v1340 = vsel %vm1268, %v1295, %v1320
  %v1341 = vsel %vm1268, %v1299, %v1324
  %v1342 = vsel %vm1268, %v1303, %v1328
  %v1349 = vsel %vm704, %v1255, %v1313
  %v1350 = vrot.slane %v1337, 2
  %v1351 = vrot.slane %v1338, 2
  %v1352 = vsel %vm704, %v1350, %v1351
  %v1353 = vrot.slane %v1304, 2
  %v1354 = vrot.slane %v1305, 2
  %v1355 = vsel %vm704, %v1353, %v1354
  %v1356 = vrot.slane %v1340, 2
  %v1357 = vrot.slane %v1341, 2
  %v1358 = vsel %vm704, %v1356, %v1357
  %v1359 = vrot.slane %v1331, 2
  %v1360 = vrot.slane %v1332, 2
  %v1361 = vsel %vm704, %v1359, %v1360
  %v1362 = vrot.slane %v1322, 2
  %v1363 = vrot.slane %v1326, 2
  %v1364 = vsel %vm704, %v1362, %v1363
  %v1365 = vrot.slane %v1339, 2
  %v1366 = vsel %vm704, %v1351, %v1365
  %v1367 = vrot.slane %v1306, 2
  %v1368 = vsel %vm704, %v1354, %v1367
  %v1369 = vrot.slane %v1342, 2
  %v1370 = vsel %vm704, %v1357, %v1369
  %v1371 = vrot.slane %v1333, 2
  %v1372 = vsel %vm704, %v1360, %v1371
  %v1373 = vrot.slane %v1330, 2
  %v1374 = vsel %vm704, %v1363, %v1373
  %v1386 = vsel %vm899, %v1222, %v1349
  %v1387 = vsel %vm899, %v1277, %v1352
  %v1388 = vsel %vm899, %v1247, %v1355
  %v1389 = vsel %vm899, %v1279, %v1358
  %v1390 = vsel %vm899, %v1270, %v1361
  %v1391 = vsel %vm899, %v1267, %v1364
  %s1392 = smul.u32 672, 1
  %s1393 = sshll.u32 %s1392, 4
  %1394 = dma.done %s176, %s1393
  %v1395 = vld [vmem:[#allocation3] sm:$0xff]
  %v1396 = vld [vmem:[#allocation3 + $0x8] sm:$0xff]
  %v1397 = vld [vmem:[#allocation3 + $0x10] sm:$0xff]
  %v1398 = vld [vmem:[#allocation3 + $0x18] sm:$0xff]
  %v1399 = vld [vmem:[#allocation3 + $0x20] sm:$0xff]
  %v1400 = vld [vmem:[#allocation3 + $0x28] sm:$0xff]
  %v1401 = vld [vmem:[#allocation3 + $0x30] sm:$0xff]
  %v1402 = vld [vmem:[#allocation3 + $0x38] sm:$0xff]
  %v1403 = vld [vmem:[#allocation3 + $0x40] sm:$0xff]
  %v1404 = vld [vmem:[#allocation3 + $0x48] sm:$0xff]
  %v1405 = vld [vmem:[#allocation3 + $0x50] sm:$0xff]
  %v1406 = vld [vmem:[#allocation3 + $0x58] sm:$0xff]
  %v1407 = vld [vmem:[#allocation3 + $0x60] sm:$0xff]
  %v1408 = vld [vmem:[#allocation3 + $0x68] sm:$0xff]
  %v1409 = vld [vmem:[#allocation3 + $0x70] sm:$0xff]
  %v1410 = vld [vmem:[#allocation3 + $0x78] sm:$0xff]
  %v1411 = vld [vmem:[#allocation3 + $0x80] sm:$0xff]
  %v1412 = vld [vmem:[#allocation3 + $0x88] sm:$0xff]
  %v1413 = vld [vmem:[#allocation3 + $0x90] sm:$0xff]
  %v1414 = vld [vmem:[#allocation3 + $0x98] sm:$0xff]
  %v1415 = vld [vmem:[#allocation3 + $0xa0] sm:$0xff]
  %v1416 = vld [vmem:[#allocation3 + $0xa8] sm:$0xff]
  %v1417 = vld [vmem:[#allocation3 + $0xb0] sm:$0xff]
  %v1418 = vld [vmem:[#allocation3 + $0xb8] sm:$0xff]
  %v1419 = vld [vmem:[#allocation3 + $0xc0] sm:$0xff]
  %v1420 = vld [vmem:[#allocation3 + $0xc8] sm:$0xff]
  %v1421 = vld [vmem:[#allocation3 + $0xd0] sm:$0xff]
  %v1422 = vld [vmem:[#allocation3 + $0xd8] sm:$0xff]
  %v1423 = vld [vmem:[#allocation3 + $0xe0] sm:$0xff]
  %v1424 = vld [vmem:[#allocation3 + $0xe8] sm:$0xff]
  %v1425 = vld [vmem:[#allocation3 + $0xf0] sm:$0xff]
  %v1426 = vld [vmem:[#allocation3 + $0xf8] sm:$0xff]
  %v1427 = vld [vmem:[#allocation3 + $0x100] sm:$0xff]
  %v1428 = vld [vmem:[#allocation3 + $0x108] sm:$0xff]
  %v1429 = vld [vmem:[#allocation3 + $0x110] sm:$0xff]
  %v1430 = vld [vmem:[#allocation3 + $0x118] sm:$0xff]
  %v1431 = vld [vmem:[#allocation3 + $0x120] sm:$0xff]
  %v1432 = vld [vmem:[#allocation3 + $0x128] sm:$0xff]
  %v1433 = vld [vmem:[#allocation3 + $0x130] sm:$0xff]
  %v1434 = vld [vmem:[#allocation3 + $0x138] sm:$0xff]
  %v1435 = vld [vmem:[#allocation3 + $0x140] sm:$0xff]
  %v1436 = vld [vmem:[#allocation3 + $0x148] sm:$0xff]
  %v1437 = vld [vmem:[#allocation3 + $0x150] sm:$0xff]
  %v1438 = vld [vmem:[#allocation3 + $0x158] sm:$0xff]
  %v1439 = vld [vmem:[#allocation3 + $0x160] sm:$0xff]
  %v1440 = vld [vmem:[#allocation3 + $0x168] sm:$0xff]
  %v1441 = vld [vmem:[#allocation3 + $0x170] sm:$0xff]
  %v1442 = vld [vmem:[#allocation3 + $0x178] sm:$0xff]
  %v1443 = vld [vmem:[#allocation3 + $0x180] sm:$0xff]
  %v1444 = vld [vmem:[#allocation3 + $0x188] sm:$0xff]
  %v1445 = vld [vmem:[#allocation3 + $0x190] sm:$0xff]
  %v1446 = vld [vmem:[#allocation3 + $0x198] sm:$0xff]
  %v1447 = vld [vmem:[#allocation3 + $0x1a0] sm:$0xff]
  %v1448 = vld [vmem:[#allocation3 + $0x1a8] sm:$0xff]
  %v1449 = vld [vmem:[#allocation3 + $0x1b0] sm:$0xff]
  %v1450 = vld [vmem:[#allocation3 + $0x1b8] sm:$0xff]
  %v1451 = vld [vmem:[#allocation3 + $0x1c0] sm:$0xff]
  %v1452 = vld [vmem:[#allocation3 + $0x1c8] sm:$0xff]
  %v1453 = vld [vmem:[#allocation3 + $0x1d0] sm:$0xff]
  %v1454 = vld [vmem:[#allocation3 + $0x1d8] sm:$0xff]
  %v1455 = vld [vmem:[#allocation3 + $0x1e0] sm:$0xff]
  %v1456 = vld [vmem:[#allocation3 + $0x1e8] sm:$0xff]
  %v1457 = vld [vmem:[#allocation3 + $0x1f0] sm:$0xff]
  %v1458 = vld [vmem:[#allocation3 + $0x1f8] sm:$0xff]
  %v1459 = vld [vmem:[#allocation3 + $0x200] sm:$0xff]
  %v1460 = vld [vmem:[#allocation3 + $0x208] sm:$0xff]
  %v1461 = vld [vmem:[#allocation3 + $0x210] sm:$0xff]
  %v1462 = vld [vmem:[#allocation3 + $0x218] sm:$0xff]
  %v1463 = vld [vmem:[#allocation3 + $0x220] sm:$0xff]
  %v1464 = vld [vmem:[#allocation3 + $0x228] sm:$0xff]
  %v1465 = vld [vmem:[#allocation3 + $0x230] sm:$0xff]
  %v1466 = vld [vmem:[#allocation3 + $0x238] sm:$0xff]
  %v1467 = vld [vmem:[#allocation3 + $0x240] sm:$0xff]
  %v1468 = vld [vmem:[#allocation3 + $0x248] sm:$0xff]
  %v1469 = vld [vmem:[#allocation3 + $0x250] sm:$0xff]
  %v1470 = vld [vmem:[#allocation3 + $0x258] sm:$0xff]
  %v1471 = vld [vmem:[#allocation3 + $0x260] sm:$0xff]
  %v1472 = vld [vmem:[#allocation3 + $0x268] sm:$0xff]
  %v1473 = vld [vmem:[#allocation3 + $0x270] sm:$0xff]
  %v1474 = vld [vmem:[#allocation3 + $0x278] sm:$0xff]
  %v1475 = vld [vmem:[#allocation3 + $0x280] sm:$0xff]
  %v1476 = vld [vmem:[#allocation3 + $0x288] sm:$0xff]
  %v1477 = vld [vmem:[#allocation3 + $0x290] sm:$0xff]
  %v1478 = vld [vmem:[#allocation3 + $0x298] sm:$0xff]
  %vm1479 = vcmask 261120
  %v1480 = vsel %vm1479, %v1263, 0
  %v1483 = vsel %vm1479, %v1391, 0
  %v1485 = vsel %vm1479, %v1374, 0
  %1487 = vmatprep.subr.mxu0 0.0
  %1488 = vmatpush1.msra.mxu0 %v1395
  %1489 = vmatprep.subr.mxu0 0.0
  %1490 = vmatpush1.msra.mxu0 %v1396
  %1491 = vmatprep.subr.mxu0 0.0
  %1492 = vmatpush1.msra.mxu0 %v1397
  %1493 = vmatprep.subr.mxu0 0.0
  %1494 = vmatpush1.msra.mxu0 %v1398
  %1495 = vmatprep.subr.mxu0 0.0
  %1496 = vmatpush1.msra.mxu0 %v1399
  %1497 = vmatprep.subr.mxu0 0.0
  %1498 = vmatpush1.msra.mxu0 %v1400
  %1499 = vmatprep.subr.mxu0 0.0
  %1500 = vmatpush1.msra.mxu0 %v1401
  %1501 = vmatprep.subr.mxu0 0.0
  %1502 = vmatpush1.msra.mxu0 %v1402
  %1503 = vmatprep.subr.mxu0 0.0
  %1504 = vmatpush1.msra.mxu0 %v1403
  %1505 = vmatprep.subr.mxu0 0.0
  %1506 = vmatpush1.msra.mxu0 %v1404
  %1507 = vmatprep.subr.mxu0 0.0
  %1508 = vmatpush1.msra.mxu0 %v1405
  %1509 = vmatprep.subr.mxu0 0.0
  %1510 = vmatpush1.msra.mxu0 %v1406
  %1511 = vmatprep.subr.mxu0 0.0
  %1512 = vmatpush1.msra.mxu0 %v1407
  %1513 = vmatprep.subr.mxu0 0.0
  %1514 = vmatpush1.msra.mxu0 %v1408
  %1515 = vmatprep.subr.mxu0 0.0
  %1516 = vmatpush1.msra.mxu0 %v1409
  %1517 = vmatprep.subr.mxu0 0.0
  %1518 = vmatpush1.msra.mxu0 %v1410
  %1519 = vmatprep.subr.mxu0 0.0
  %1520 = vmatpush1.msra.mxu0 %v1411
  %1521 = vmatprep.subr.mxu0 0.0
  %1522 = vmatpush1.msra.mxu0 %v1412
  %1523 = vmatprep.subr.mxu0 0.0
  %1524 = vmatpush1.msra.mxu0 %v1413
  %1525 = vmatprep.subr.mxu0 0.0
  %1526 = vmatpush1.msra.mxu0 %v1414
  %1527 = vmatprep.subr.mxu0 0.0
  %1528 = vmatpush1.msra.mxu0 %v1415
  %1529 = vmatprep.subr.mxu0 0.0
  %1530 = vmatpush1.msra.mxu0 %v1416
  %1531 = vmatprep.subr.mxu0 0.0
  %1532 = vmatpush1.msra.mxu0 %v1417
  %1533 = vmatprep.subr.mxu0 0.0
  %1534 = vmatpush1.msra.mxu0 %v1418
  %1535 = vmatprep.subr.mxu0 0.0
  %1536 = vmatpush1.msra.mxu0 %v1419
  %1537 = vmatprep.subr.mxu0 0.0
  %1538 = vmatpush1.msra.mxu0 %v1420
  %1539 = vmatprep.subr.mxu0 0.0
  %1540 = vmatpush1.msra.mxu0 %v1421
  %1541 = vmatprep.subr.mxu0 0.0
  %1542 = vmatpush1.msra.mxu0 %v1422
  %1543 = vmatprep.subr.mxu0 0.0
  %1544 = vmatpush1.msra.mxu0 %v1423
  %1545 = vmatprep.subr.mxu0 0.0
  %1546 = vmatpush1.msra.mxu0 %v1424
  %1547 = vmatprep.subr.mxu0 0.0
  %1548 = vmatpush1.msra.mxu0 %v1425
  %1549 = vmatprep.subr.mxu0 0.0
  %1550 = vmatpush1.msra.mxu0 %v1426
  %1551 = vmatprep.mubr.f32.mxu0 %v1276
  %1552 = vmatmul.mubr.f32.gmra.mrb[0].mxu0 %v1220
  %v1553 = vpop.f32.mrb[0].mxu0
  %v1554 = vadd.f32 0.0, %v1553
  %v1555 = vpop.f32.mrb[0].mxu0
  %1556 = vmatprep.mubr.f32.mxu0 %v1387
  %1557 = vmatmul.mubr.f32.gmra.mrb[0].mxu0 %v1386
  %v1558 = vpop.f32.mrb[0].mxu0
  %v1559 = vadd.f32 0.0, %v1558
  %v1560 = vpop.f32.mrb[0].mxu0
  %1561 = vmatprep.mubr.f32.mxu0 %v1366
  %1562 = vmatmul.mubr.f32.gmra.mrb[0].mxu0 %v1316
  %v1563 = vpop.f32.mrb[0].mxu0
  %v1564 = vadd.f32 0.0, %v1563
  %v1565 = vpop.f32.mrb[0].mxu0
  %1566 = vdwg.mxu0
  %1567 = vmatprep.subr.mxu0 0.0
  %1568 = vmatpush1.msra.mxu0 %v1427
  %1569 = vmatprep.subr.mxu0 0.0
  %1570 = vmatpush1.msra.mxu0 %v1428
  %1571 = vmatprep.subr.mxu0 0.0
  %1572 = vmatpush1.msra.mxu0 %v1429
  %1573 = vmatprep.subr.mxu0 0.0
  %1574 = vmatpush1.msra.mxu0 %v1430
  %1575 = vmatprep.subr.mxu0 0.0
  %1576 = vmatpush1.msra.mxu0 %v1431
  %1577 = vmatprep.subr.mxu0 0.0
  %1578 = vmatpush1.msra.mxu0 %v1432
  %1579 = vmatprep.subr.mxu0 0.0
  %1580 = vmatpush1.msra.mxu0 %v1433
  %1581 = vmatprep.subr.mxu0 0.0
  %1582 = vmatpush1.msra.mxu0 %v1434
  %1583 = vmatprep.subr.mxu0 0.0
  %1584 = vmatpush1.msra.mxu0 %v1435
  %1585 = vmatprep.subr.mxu0 0.0
  %1586 = vmatpush1.msra.mxu0 %v1436
  %1587 = vmatprep.subr.mxu0 0.0
  %1588 = vmatpush1.msra.mxu0 %v1437
  %1589 = vmatprep.subr.mxu0 0.0
  %1590 = vmatpush1.msra.mxu0 %v1438
  %1591 = vmatprep.subr.mxu0 0.0
  %1592 = vmatpush1.msra.mxu0 %v1439
  %1593 = vmatprep.subr.mxu0 0.0
  %1594 = vmatpush1.msra.mxu0 %v1440
  %1595 = vmatprep.subr.mxu0 0.0
  %1596 = vmatpush1.msra.mxu0 %v1441
  %1597 = vmatprep.subr.mxu0 0.0
  %1598 = vmatpush1.msra.mxu0 %v1442
  %1599 = vmatprep.subr.mxu0 0.0
  %1600 = vmatpush1.msra.mxu0 %v1443
  %1601 = vmatprep.subr.mxu0 0.0
  %1602 = vmatpush1.msra.mxu0 %v1444
  %1603 = vmatprep.subr.mxu0 0.0
  %1604 = vmatpush1.msra.mxu0 %v1445
  %1605 = vmatprep.subr.mxu0 0.0
  %1606 = vmatpush1.msra.mxu0 %v1446
  %1607 = vmatprep.subr.mxu0 0.0
  %1608 = vmatpush1.msra.mxu0 %v1447
  %1609 = vmatprep.subr.mxu0 0.0
  %1610 = vmatpush1.msra.mxu0 %v1448
  %1611 = vmatprep.subr.mxu0 0.0
  %1612 = vmatpush1.msra.mxu0 %v1449
  %1613 = vmatprep.subr.mxu0 0.0
  %1614 = vmatpush1.msra.mxu0 %v1450
  %1615 = vmatprep.subr.mxu0 0.0
  %1616 = vmatpush1.msra.mxu0 %v1451
  %1617 = vmatprep.subr.mxu0 0.0
  %1618 = vmatpush1.msra.mxu0 %v1452
  %1619 = vmatprep.subr.mxu0 0.0
  %1620 = vmatpush1.msra.mxu0 %v1453
  %1621 = vmatprep.subr.mxu0 0.0
  %1622 = vmatpush1.msra.mxu0 %v1454
  %1623 = vmatprep.subr.mxu0 0.0
  %1624 = vmatpush1.msra.mxu0 %v1455
  %1625 = vmatprep.subr.mxu0 0.0
  %1626 = vmatpush1.msra.mxu0 %v1456
  %1627 = vmatprep.subr.mxu0 0.0
  %1628 = vmatpush1.msra.mxu0 %v1457
  %1629 = vmatprep.subr.mxu0 0.0
  %1630 = vmatpush1.msra.mxu0 %v1458
  %1631 = vmatprep.mubr.f32.mxu0 %v1278
  %1632 = vmatmul.mubr.f32.gmra.mrb[0].mxu0 %v1246
  %v1633 = vpop.f32.mrb[0].mxu0
  %v1634 = vadd.f32 %v1554, %v1633
  %v1635 = vpop.f32.mrb[0].mxu0
  %1636 = vmatprep.mubr.f32.mxu0 %v1389
  %1637 = vmatmul.mubr.f32.gmra.mrb[0].mxu0 %v1388
  %v1638 = vpop.f32.mrb[0].mxu0
  %v1639 = vadd.f32 %v1559, %v1638
  %v1640 = vpop.f32.mrb[0].mxu0
  %1641 = vmatprep.mubr.f32.mxu0 %v1370
  %1642 = vmatmul.mubr.f32.gmra.mrb[0].mxu0 %v1368
  %v1643 = vpop.f32.mrb[0].mxu0
  %v1644 = vadd.f32 %v1564, %v1643
  %v1645 = vpop.f32.mrb[0].mxu0
  %1646 = vdwg.mxu0
  %1647 = vmatprep.subr.mxu0 0.0
  %1648 = vmatpush1.msra.mxu0 %v1459
  %1649 = vmatprep.subr.mxu0 0.0
  %1650 = vmatpush1.msra.mxu0 %v1460
  %1651 = vmatprep.subr.mxu0 0.0
  %1652 = vmatpush1.msra.mxu0 %v1461
  %1653 = vmatprep.subr.mxu0 0.0
  %1654 = vmatpush1.msra.mxu0 %v1462
  %1655 = vmatprep.subr.mxu0 0.0
  %1656 = vmatpush1.msra.mxu0 %v1463
  %1657 = vmatprep.subr.mxu0 0.0
  %1658 = vmatpush1.msra.mxu0 %v1464
  %1659 = vmatprep.subr.mxu0 0.0
  %1660 = vmatpush1.msra.mxu0 %v1465
  %1661 = vmatprep.subr.mxu0 0.0
  %1662 = vmatpush1.msra.mxu0 %v1466
  %1663 = vmatprep.subr.mxu0 0.0
  %1664 = vmatpush1.msra.mxu0 %v1467
  %1665 = vmatprep.subr.mxu0 0.0
  %1666 = vmatpush1.msra.mxu0 %v1468
  %1667 = vmatprep.subr.mxu0 0.0
  %1668 = vmatpush1.msra.mxu0 %v1469
  %1669 = vmatprep.subr.mxu0 0.0
  %1670 = vmatpush1.msra.mxu0 %v1470
  %1671 = vmatprep.subr.mxu0 0.0
  %1672 = vmatpush1.msra.mxu0 %v1471
  %1673 = vmatprep.subr.mxu0 0.0
  %1674 = vmatpush1.msra.mxu0 %v1472
  %1675 = vmatprep.subr.mxu0 0.0
  %1676 = vmatpush1.msra.mxu0 %v1473
  %1677 = vmatprep.subr.mxu0 0.0
  %1678 = vmatpush1.msra.mxu0 %v1474
  %1679 = vmatprep.subr.mxu0 0.0
  %1680 = vmatpush1.msra.mxu0 %v1475
  %1681 = vmatprep.subr.mxu0 0.0
  %1682 = vmatpush1.msra.mxu0 %v1476
  %1683 = vmatprep.subr.mxu0 0.0
  %1684 = vmatpush1.msra.mxu0 %v1477
  %1685 = vmatprep.subr.mxu0 0.0
  %1686 = vmatpush1.msra.mxu0 %v1478
  %1687 = vmatprep.subr.mxu0 0.0
  %1688 = vmatpush1.msra.mxu0 0.0
  %1689 = vmatprep.subr.mxu0 0.0
  %1690 = vmatpush1.msra.mxu0 0.0
  %1691 = vmatprep.subr.mxu0 0.0
  %1692 = vmatpush1.msra.mxu0 0.0
  %1693 = vmatprep.subr.mxu0 0.0
  %1694 = vmatpush1.msra.mxu0 0.0
  %1695 = vmatprep.subr.mxu0 0.0
  %1696 = vmatpush1.msra.mxu0 0.0
  %1697 = vmatprep.subr.mxu0 0.0
  %1698 = vmatpush1.msra.mxu0 0.0
  %1699 = vmatprep.subr.mxu0 0.0
  %1700 = vmatpush1.msra.mxu0 0.0
  %1701 = vmatprep.subr.mxu0 0.0
  %1702 = vmatpush1.msra.mxu0 0.0
  %1703 = vmatprep.subr.mxu0 0.0
  %1704 = vmatpush1.msra.mxu0 0.0
  %1705 = vmatprep.subr.mxu0 0.0
  %1706 = vmatpush1.msra.mxu0 0.0
  %1707 = vmatprep.subr.mxu0 0.0
  %1708 = vmatpush1.msra.mxu0 0.0
  %1709 = vmatprep.subr.mxu0 0.0
  %1710 = vmatpush1.msra.mxu0 0.0
  %1711 = vmatprep.mubr.f32.mxu0 %v1480
  %1712 = vmatmul.mubr.f32.gmra.mrb[0].mxu0 %v1269
  %v1713 = vpop.f32.mrb[0].mxu0
  %v1714 = vadd.f32 %v1634, %v1713
  %v1715 = vpop.f32.mrb[0].mxu0
  %1716 = vmatprep.mubr.f32.mxu0 %v1483
  %1717 = vmatmul.mubr.f32.gmra.mrb[0].mxu0 %v1390
  %v1718 = vpop.f32.mrb[0].mxu0
  %v1719 = vadd.f32 %v1639, %v1718
  %v1720 = vpop.f32.mrb[0].mxu0
  %1721 = vmatprep.mubr.f32.mxu0 %v1485
  %1722 = vmatmul.mubr.f32.gmra.mrb[0].mxu0 %v1372
  %v1723 = vpop.f32.mrb[0].mxu0
  %v1724 = vadd.f32 %v1644, %v1723
  %v1725 = vpop.f32.mrb[0].mxu0
  %1726 = vdwg.mxu0
  %v1727 = vsel %vm717, %v1714, 0.0
  %v1728 = vsel %vm717, %v1719, 0.0
  %v1729 = vadd.f32 %v1727, %v1728
  %v1730 = vsel %vm717, %v1724, 0.0
  %v1731 = vadd.f32 %v1729, %v1730
  %v1732 = vrot.slane %v1731, 4
  %v1733 = vadd.f32 %v1731, %v1732
  %v1734 = vrot.slane %v1733, 2
  %v1735 = vadd.f32 %v1733, %v1734
  %v1736 = vrot.slane %v1735, 1
  %v1737 = vadd.f32 %v1735, %v1736
  %v1738 = vmul.f32 %v1714, %v1714
  %v1739 = vmul.f32 %v1719, %v1719
  %v1740 = vmul.f32 %v1724, %v1724
  %v1741 = vsel %vm717, %v1738, 0.0
  %v1742 = vsel %vm717, %v1739, 0.0
  %v1743 = vadd.f32 %v1741, %v1742
  %v1744 = vsel %vm717, %v1740, 0.0
  %v1745 = vadd.f32 %v1743, %v1744
  %v1746 = vrot.slane %v1745, 4
  %v1747 = vadd.f32 %v1745, %v1746
  %v1748 = vrot.slane %v1747, 2
  %v1749 = vadd.f32 %v1747, %v1748
  %v1750 = vrot.slane %v1749, 1
  %v1751 = vadd.f32 %v1749, %v1750
  %v1752 = vsel %vm953, %v1737, %v1751
  %v1753 = vld [vmem:[%s9] sm:$0xff]
  %v1754 = vld [vmem:[%s9 + $0x8] sm:$0xff]
  %v1755 = vld [vmem:[%s9 + $0x10] sm:$0xff]
  %v1756 = vld [vmem:[%s9 + $0x18] sm:$0xff]
  %v1757 = vld [vmem:[%s9 + $0x20] sm:$0xff]
  %v1758 = vld [vmem:[%s9 + $0x28] sm:$0xff]
  %v1759 = vld [vmem:[%s9 + $0x30] sm:$0xff]
  %v1760 = vld [vmem:[%s9 + $0x38] sm:$0xff]
  %v1761 = vld [vmem:[%s9 + $0x40] sm:$0xff]
  %v1762 = vld [vmem:[%s9 + $0x48] sm:$0xff]
  %v1763 = vld [vmem:[%s9 + $0x50] sm:$0xff]
  %v1764 = vld [vmem:[%s9 + $0x58] sm:$0xff]
  %v1766 = vsel %vm717, %v1752, 0
  %1768 = vmatprep.subr.mxu0 0.0
  %1769 = vmatpush1.msra.mxu0 %v1753
  %1770 = vmatprep.subr.mxu0 0.0
  %1771 = vmatpush1.msra.mxu0 %v1754
  %1772 = vmatprep.subr.mxu0 0.0
  %1773 = vmatpush1.msra.mxu0 %v1755
  %1774 = vmatprep.subr.mxu0 0.0
  %1775 = vmatpush1.msra.mxu0 %v1756
  %1776 = vmatprep.subr.mxu0 0.0
  %1777 = vmatpush1.msra.mxu0 %v1757
  %1778 = vmatprep.subr.mxu0 0.0
  %1779 = vmatpush1.msra.mxu0 %v1758
  %1780 = vmatprep.subr.mxu0 0.0
  %1781 = vmatpush1.msra.mxu0 %v1759
  %1782 = vmatprep.subr.mxu0 0.0
  %1783 = vmatpush1.msra.mxu0 %v1760
  %1784 = vmatprep.subr.mxu0 0.0
  %1785 = vmatpush1.msra.mxu0 %v1761
  %1786 = vmatprep.subr.mxu0 0.0
  %1787 = vmatpush1.msra.mxu0 %v1762
  %1788 = vmatprep.subr.mxu0 0.0
  %1789 = vmatpush1.msra.mxu0 %v1763
  %1790 = vmatprep.subr.mxu0 0.0
  %1791 = vmatpush1.msra.mxu0 %v1764
  %1792 = vmatprep.subr.mxu0 0.0
  %1793 = vmatpush1.msra.mxu0 0.0
  %1794 = vmatprep.subr.mxu0 0.0
  %1795 = vmatpush1.msra.mxu0 0.0
  %1796 = vmatprep.subr.mxu0 0.0
  %1797 = vmatpush1.msra.mxu0 0.0
  %1798 = vmatprep.subr.mxu0 0.0
  %1799 = vmatpush1.msra.mxu0 0.0
  %1800 = vmatprep.subr.mxu0 0.0
  %1801 = vmatpush1.msra.mxu0 0.0
  %1802 = vmatprep.subr.mxu0 0.0
  %1803 = vmatpush1.msra.mxu0 0.0
  %1804 = vmatprep.subr.mxu0 0.0
  %1805 = vmatpush1.msra.mxu0 0.0
  %1806 = vmatprep.subr.mxu0 0.0
  %1807 = vmatpush1.msra.mxu0 0.0
  %1808 = vmatprep.subr.mxu0 0.0
  %1809 = vmatpush1.msra.mxu0 0.0
  %1810 = vmatprep.subr.mxu0 0.0
  %1811 = vmatpush1.msra.mxu0 0.0
  %1812 = vmatprep.subr.mxu0 0.0
  %1813 = vmatpush1.msra.mxu0 0.0
  %1814 = vmatprep.subr.mxu0 0.0
  %1815 = vmatpush1.msra.mxu0 0.0
  %1816 = vmatprep.subr.mxu0 0.0
  %1817 = vmatpush1.msra.mxu0 0.0
  %1818 = vmatprep.subr.mxu0 0.0
  %1819 = vmatpush1.msra.mxu0 0.0
  %1820 = vmatprep.subr.mxu0 0.0
  %1821 = vmatpush1.msra.mxu0 0.0
  %1822 = vmatprep.subr.mxu0 0.0
  %1823 = vmatpush1.msra.mxu0 0.0
  %1824 = vmatprep.subr.mxu0 0.0
  %1825 = vmatpush1.msra.mxu0 0.0
  %1826 = vmatprep.subr.mxu0 0.0
  %1827 = vmatpush1.msra.mxu0 0.0
  %1828 = vmatprep.subr.mxu0 0.0
  %1829 = vmatpush1.msra.mxu0 0.0
  %1830 = vmatprep.subr.mxu0 0.0
  %1831 = vmatpush1.msra.mxu0 0.0
  %1832 = vmatprep.mubr.f32.mxu0 0.0
  %1833 = vmatmul.mubr.f32.gmra.mrb[0].mxu0 %v1766
  %v1834 = vpop.f32.mrb[0].mxu0
  %v1835 = vadd.f32 0.0, %v1834
  %v1836 = vpop.f32.mrb[0].mxu0
  %1837 = vdwg.mxu0
  %v1838 = vmul.f32 %v1835, 0.0034722222
  %v1839 = vmul.f32 %v1838, %v1838
  %v1841 = vrot.slane %v1839, 7
  %v1843 = vsub.f32 %v1838, %v1841
  %v1844 = vld [vmem:[%s7] sm:$0x1]
  %v1845 = vadd.f32 %v1843, 1e-05
  %v1846 = vrsqrt.pop %v1845
  %v1849 = vunpack.c.l.s4 1966171168
  %v1850 = vunpack.c.0.s8 %v1849
  %v1851 = vlaneseq
  %v1852 = vshrl.u32 %v1851, 7
  %v1853 = vsub.s32 %v1850, %v1852
  %v1854 = vrot.slane %v1846, %v1853
  %v1855 = vcombine.high %v1854, %v1854
  %v1857 = vunpack.c.l.s4 1966171168
  %v1858 = vunpack.c.0.s8 %v1857
  %v1859 = vlaneseq
  %v1860 = vshrl.u32 %v1859, 7
  %v1861 = vsub.s32 %v1858, %v1860
  %v1862 = vrot.slane %v1855, %v1861
  %v1864 = vmul.f32 %v1844, %v1862
  %v1865 = vld [vmem:[%s8] sm:$0x1]
  %v1866 = vmul.f32 %v1838, %v1864
  %v1867 = vsub.f32 %v1865, %v1866
  %v1869 = vlaneseq
  %v1870 = vshrl.u32 %v1869, 7
  %v1871 = vsub.s32 0, %v1870
  %v1872 = vrot.slane %v1867, %v1871
  %v1874 = vsel %vm953, %v1864, %v1872
  %v1875 = vld [vmem:[%s10] sm:$0xff]
  %vm1876 = vcmask 64512
  %v1878 = vsel %vm1876, %v1874, 0
  %1880 = vmatprep.subr.mxu0 0.0
  %1881 = vmatpush1.msra.mxu0 %v1875
  %1882 = vmatprep.subr.mxu0 0.0
  %1883 = vmatpush1.msra.mxu0 0.0
  %1884 = vmatprep.subr.mxu0 0.0
  %1885 = vmatpush1.msra.mxu0 0.0
  %1886 = vmatprep.subr.mxu0 0.0
  %1887 = vmatpush1.msra.mxu0 0.0
  %1888 = vmatprep.subr.mxu0 0.0
  %1889 = vmatpush1.msra.mxu0 0.0
  %1890 = vmatprep.subr.mxu0 0.0
  %1891 = vmatpush1.msra.mxu0 0.0
  %1892 = vmatprep.subr.mxu0 0.0
  %1893 = vmatpush1.msra.mxu0 0.0
  %1894 = vmatprep.subr.mxu0 0.0
  %1895 = vmatpush1.msra.mxu0 0.0
  %1896 = vmatprep.subr.mxu0 0.0
  %1897 = vmatpush1.msra.mxu0 0.0
  %1898 = vmatprep.subr.mxu0 0.0
  %1899 = vmatpush1.msra.mxu0 0.0
  %1900 = vmatprep.subr.mxu0 0.0
  %1901 = vmatpush1.msra.mxu0 0.0
  %1902 = vmatprep.subr.mxu0 0.0
  %1903 = vmatpush1.msra.mxu0 0.0
  %1904 = vmatprep.subr.mxu0 0.0
  %1905 = vmatpush1.msra.mxu0 0.0
  %1906 = vmatprep.subr.mxu0 0.0
  %1907 = vmatpush1.msra.mxu0 0.0
  %1908 = vmatprep.subr.mxu0 0.0
  %1909 = vmatpush1.msra.mxu0 0.0
  %1910 = vmatprep.subr.mxu0 0.0
  %1911 = vmatpush1.msra.mxu0 0.0
  %1912 = vmatprep.subr.mxu0 0.0
  %1913 = vmatpush1.msra.mxu0 0.0
  %1914 = vmatprep.subr.mxu0 0.0
  %1915 = vmatpush1.msra.mxu0 0.0
  %1916 = vmatprep.subr.mxu0 0.0
  %1917 = vmatpush1.msra.mxu0 0.0
  %1918 = vmatprep.subr.mxu0 0.0
  %1919 = vmatpush1.msra.mxu0 0.0
  %1920 = vmatprep.subr.mxu0 0.0
  %1921 = vmatpush1.msra.mxu0 0.0
  %1922 = vmatprep.subr.mxu0 0.0
  %1923 = vmatpush1.msra.mxu0 0.0
  %1924 = vmatprep.subr.mxu0 0.0
  %1925 = vmatpush1.msra.mxu0 0.0
  %1926 = vmatprep.subr.mxu0 0.0
  %1927 = vmatpush1.msra.mxu0 0.0
  %1928 = vmatprep.subr.mxu0 0.0
  %1929 = vmatpush1.msra.mxu0 0.0
  %1930 = vmatprep.subr.mxu0 0.0
  %1931 = vmatpush1.msra.mxu0 0.0
  %1932 = vmatprep.subr.mxu0 0.0
  %1933 = vmatpush1.msra.mxu0 0.0
  %1934 = vmatprep.subr.mxu0 0.0
  %1935 = vmatpush1.msra.mxu0 0.0
  %1936 = vmatprep.subr.mxu0 0.0
  %1937 = vmatpush1.msra.mxu0 0.0
  %1938 = vmatprep.subr.mxu0 0.0
  %1939 = vmatpush1.msra.mxu0 0.0
  %1940 = vmatprep.subr.mxu0 0.0
  %1941 = vmatpush1.msra.mxu0 0.0
  %1942 = vmatprep.subr.mxu0 0.0
  %1943 = vmatpush1.msra.mxu0 0.0
  %1944 = vmatprep.mubr.f32.mxu0 0.0
  %1945 = vmatmul.mubr.f32.gmra.mrb[0].mxu0 %v1878
  %v1946 = vpop.f32.mrb[0].mxu0
  %v1947 = vadd.f32 0.0, %v1946
  %v1948 = vpop.f32.mrb[0].mxu0
  %1949 = vdwg.mxu0
  %v1950 = vlaneseq
  %v1951 = vshrl.u32 %v1950, 7
  %v1952 = vsub.s32 0, %v1951
  %v1953 = vrot.slane %v1947, %v1952
  %v1954 = vmul.f32 %v1714, %v1953
  %v1955 = vmul.f32 %v1719, %v1953
  %v1956 = vmul.f32 %v1724, %v1953
  %v1957 = vlaneseq
  %v1958 = vshrl.u32 %v1957, 7
  %v1959 = vsub.s32 1, %v1958
  %v1960 = vrot.slane %v1947, %v1959
  %v1961 = vadd.f32 %v1954, %v1960
  %v1962 = vadd.f32 %v1955, %v1960
  %v1963 = vadd.f32 %v1956, %v1960
  %vm1964 = vcmp.ge.f32.partialorder %v1961, 0.0
  %vm1965 = vcmp.ge.f32.partialorder %v1962, 0.0
  %vm1966 = vcmp.ge.f32.partialorder %v1963, 0.0
  %v1967 = vmul.f32 %v1961, 0.2
  %v1968 = vmul.f32 %v1962, 0.2
  %v1969 = vmul.f32 %v1963, 0.2
  %v1970 = vsel %vm1964, %v1961, %v1967
  %v1971 = vsel %vm1965, %v1962, %v1968
  %v1972 = vsel %vm1966, %v1963, %v1969
  %v1975 = vrot.slane %v1970, 1
  %v1976 = vrot.slane %v1971, 1
  %v1977 = vsel %vm694, %v1975, %v1976
  %1978 = vrot.lane.b32.xlu0 %v1977, 96
  %v1979 = vpop.permute.xlu0 %1978
  %1980 = vrot.lane.b32.xlu0 %v1976, 96
  %v1981 = vpop.permute.xlu0 %1980
  %v1984 = vrot.slane %v1970, 2
  %v1985 = vrot.slane %v1971, 2
  %v1986 = vsel %vm704, %v1984, %v1985
  %1987 = vrot.lane.b32.xlu0 %v1986, 64
  %v1988 = vpop.permute.xlu0 %1987
  %1989 = vrot.lane.b32.xlu0 %v1985, 64
  %v1990 = vpop.permute.xlu0 %1989
  %v1993 = vsel %vm717, %v1970, %v1979
  %v1994 = vsel %vm717, %v1971, %v1981
  %v1995 = vsel %vm1268, %v1979, %v1988
  %v1996 = vsel %vm1268, %v1981, %v1990
  %v1998 = vrot.slane %v1972, 1
  %v1999 = vsel %vm694, %v1976, %v1998
  %2000 = vrot.lane.b32.xlu0 %v1999, 96
  %v2001 = vpop.permute.xlu0 %2000
  %2002 = vrot.lane.b32.xlu0 %v1998, 96
  %v2003 = vpop.permute.xlu0 %2002
  %v2006 = vrot.slane %v1972, 2
  %v2007 = vsel %vm704, %v1985, %v2006
  %2008 = vrot.lane.b32.xlu0 %v2007, 64
  %v2009 = vpop.permute.xlu0 %2008
  %2010 = vrot.lane.b32.xlu0 %v2006, 64
  %v2011 = vpop.permute.xlu0 %2010
  %v2014 = vsel %vm717, %v1971, %v2001
  %v2015 = vsel %vm717, %v1972, %v2003
  %v2016 = vsel %vm1268, %v2001, %v2009
  %v2017 = vsel %vm1268, %v2003, %v2011
  %v2022 = vrot.slane %v2014, 2
  %v2023 = vrot.slane %v2015, 2
  %v2024 = vsel %vm704, %v2022, %v2023
  %v2025 = vrot.slane %v2016, 2
  %v2026 = vrot.slane %v2017, 2
  %v2027 = vsel %vm704, %v2025, %v2026
  %v2028 = vrot.slane %v2009, 2
  %v2029 = vrot.slane %v2011, 2
  %v2030 = vsel %vm704, %v2028, %v2029
  %vm2036 = vcmask 1041408
  %v2037 = vsel %vm2036, %v1994, %v2024
  %v2038 = vsel %vm2036, %v1996, %v2027
  %v2039 = vsel %vm2036, %v1990, %v2030
  %s2040 = smul.u32 288, 1
  %s2041 = sshll.u32 %s2040, 4
  %2042 = dma.done %s385, %s2041
  %v2043 = vld [vmem:[#allocation4] sm:$0xff]
  %v2044 = vld [vmem:[#allocation4 + $0x8] sm:$0xff]
  %v2045 = vld [vmem:[#allocation4 + $0x10] sm:$0xff]
  %v2046 = vld [vmem:[#allocation4 + $0x18] sm:$0xff]
  %v2047 = vld [vmem:[#allocation4 + $0x20] sm:$0xff]
  %v2048 = vld [vmem:[#allocation4 + $0x28] sm:$0xff]
  %v2049 = vld [vmem:[#allocation4 + $0x30] sm:$0xff]
  %v2050 = vld [vmem:[#allocation4 + $0x38] sm:$0xff]
  %v2051 = vld [vmem:[#allocation4 + $0x40] sm:$0xff]
  %v2052 = vld [vmem:[#allocation4 + $0x48] sm:$0xff]
  %v2053 = vld [vmem:[#allocation4 + $0x50] sm:$0xff]
  %v2054 = vld [vmem:[#allocation4 + $0x58] sm:$0xff]
  %v2055 = vld [vmem:[#allocation4 + $0x60] sm:$0xff]
  %v2056 = vld [vmem:[#allocation4 + $0x68] sm:$0xff]
  %v2057 = vld [vmem:[#allocation4 + $0x70] sm:$0xff]
  %v2058 = vld [vmem:[#allocation4 + $0x78] sm:$0xff]
  %v2059 = vld [vmem:[#allocation4 + $0x80] sm:$0xff]
  %v2060 = vld [vmem:[#allocation4 + $0x88] sm:$0xff]
  %v2061 = vld [vmem:[#allocation4 + $0x90] sm:$0xff]
  %v2062 = vld [vmem:[#allocation4 + $0x98] sm:$0xff]
  %v2063 = vld [vmem:[#allocation4 + $0xa0] sm:$0xff]
  %v2064 = vld [vmem:[#allocation4 + $0xa8] sm:$0xff]
  %v2065 = vld [vmem:[#allocation4 + $0xb0] sm:$0xff]
  %v2066 = vld [vmem:[#allocation4 + $0xb8] sm:$0xff]
  %v2067 = vld [vmem:[#allocation4 + $0xc0] sm:$0xff]
  %v2068 = vld [vmem:[#allocation4 + $0xc8] sm:$0xff]
  %v2069 = vld [vmem:[#allocation4 + $0xd0] sm:$0xff]
  %v2070 = vld [vmem:[#allocation4 + $0xd8] sm:$0xff]
  %v2071 = vld [vmem:[#allocation4 + $0xe0] sm:$0xff]
  %v2072 = vld [vmem:[#allocation4 + $0xe8] sm:$0xff]
  %v2073 = vld [vmem:[#allocation4 + $0xf0] sm:$0xff]
  %v2074 = vld [vmem:[#allocation4 + $0xf8] sm:$0xff]
  %v2075 = vld [vmem:[#allocation4 + $0x100] sm:$0xff]
  %v2076 = vld [vmem:[#allocation4 + $0x108] sm:$0xff]
  %v2077 = vld [vmem:[#allocation4 + $0x110] sm:$0xff]
  %v2078 = vld [vmem:[#allocation4 + $0x118] sm:$0xff]
  %v2079 = vsel %vm1479, %v1988, 0
  %v2082 = vsel %vm1479, %v2039, 0
  %v2084 = vsel %vm1479, %v2029, 0
  %2086 = vmatprep.subr.mxu0 0.0
  %2087 = vmatpush1.msra.mxu0 %v2043
  %2088 = vmatprep.subr.mxu0 0.0
  %2089 = vmatpush1.msra.mxu0 %v2044
  %2090 = vmatprep.subr.mxu0 0.0
  %2091 = vmatpush1.msra.mxu0 %v2045
  %2092 = vmatprep.subr.mxu0 0.0
  %2093 = vmatpush1.msra.mxu0 %v2046
  %2094 = vmatprep.subr.mxu0 0.0
  %2095 = vmatpush1.msra.mxu0 %v2047
  %2096 = vmatprep.subr.mxu0 0.0
  %2097 = vmatpush1.msra.mxu0 %v2048
  %2098 = vmatprep.subr.mxu0 0.0
  %2099 = vmatpush1.msra.mxu0 %v2049
  %2100 = vmatprep.subr.mxu0 0.0
  %2101 = vmatpush1.msra.mxu0 %v2050
  %2102 = vmatprep.subr.mxu0 0.0
  %2103 = vmatpush1.msra.mxu0 %v2051
  %2104 = vmatprep.subr.mxu0 0.0
  %2105 = vmatpush1.msra.mxu0 %v2052
  %2106 = vmatprep.subr.mxu0 0.0
  %2107 = vmatpush1.msra.mxu0 %v2053
  %2108 = vmatprep.subr.mxu0 0.0
  %2109 = vmatpush1.msra.mxu0 %v2054
  %2110 = vmatprep.subr.mxu0 0.0
  %2111 = vmatpush1.msra.mxu0 %v2055
  %2112 = vmatprep.subr.mxu0 0.0
  %2113 = vmatpush1.msra.mxu0 %v2056
  %2114 = vmatprep.subr.mxu0 0.0
  %2115 = vmatpush1.msra.mxu0 %v2057
  %2116 = vmatprep.subr.mxu0 0.0
  %2117 = vmatpush1.msra.mxu0 %v2058
  %2118 = vmatprep.subr.mxu0 0.0
  %2119 = vmatpush1.msra.mxu0 %v2059
  %2120 = vmatprep.subr.mxu0 0.0
  %2121 = vmatpush1.msra.mxu0 %v2060
  %2122 = vmatprep.subr.mxu0 0.0
  %2123 = vmatpush1.msra.mxu0 %v2061
  %2124 = vmatprep.subr.mxu0 0.0
  %2125 = vmatpush1.msra.mxu0 %v2062
  %2126 = vmatprep.subr.mxu0 0.0
  %2127 = vmatpush1.msra.mxu0 %v2063
  %2128 = vmatprep.subr.mxu0 0.0
  %2129 = vmatpush1.msra.mxu0 %v2064
  %2130 = vmatprep.subr.mxu0 0.0
  %2131 = vmatpush1.msra.mxu0 %v2065
  %2132 = vmatprep.subr.mxu0 0.0
  %2133 = vmatpush1.msra.mxu0 %v2066
  %2134 = vmatprep.subr.mxu0 0.0
  %2135 = vmatpush1.msra.mxu0 %v2067
  %2136 = vmatprep.subr.mxu0 0.0
  %2137 = vmatpush1.msra.mxu0 %v2068
  %2138 = vmatprep.subr.mxu0 0.0
  %2139 = vmatpush1.msra.mxu0 %v2069
  %2140 = vmatprep.subr.mxu0 0.0
  %2141 = vmatpush1.msra.mxu0 %v2070
  %2142 = vmatprep.subr.mxu0 0.0
  %2143 = vmatpush1.msra.mxu0 %v2071
  %2144 = vmatprep.subr.mxu0 0.0
  %2145 = vmatpush1.msra.mxu0 %v2072
  %2146 = vmatprep.subr.mxu0 0.0
  %2147 = vmatpush1.msra.mxu0 %v2073
  %2148 = vmatprep.subr.mxu0 0.0
  %2149 = vmatpush1.msra.mxu0 %v2074
  %2150 = vmatprep.mubr.f32.mxu0 %v1995
  %2151 = vmatmul.mubr.f32.gmra.mrb[0].mxu0 %v1993
  %v2152 = vpop.f32.mrb[0].mxu0
  %v2153 = vadd.f32 0.0, %v2152
  %v2154 = vpop.f32.mrb[0].mxu0
  %2155 = vmatprep.mubr.f32.mxu0 %v2038
  %2156 = vmatmul.mubr.f32.gmra.mrb[0].mxu0 %v2037
  %v2157 = vpop.f32.mrb[0].mxu0
  %v2158 = vadd.f32 0.0, %v2157
  %v2159 = vpop.f32.mrb[0].mxu0
  %2160 = vmatprep.mubr.f32.mxu0 %v2026
  %2161 = vmatmul.mubr.f32.gmra.mrb[0].mxu0 %v2023
  %v2162 = vpop.f32.mrb[0].mxu0
  %v2163 = vadd.f32 0.0, %v2162
  %v2164 = vpop.f32.mrb[0].mxu0
  %2165 = vdwg.mxu0
  %2166 = vmatprep.subr.mxu0 0.0
  %2167 = vmatpush1.msra.mxu0 %v2075
  %2168 = vmatprep.subr.mxu0 0.0
  %2169 = vmatpush1.msra.mxu0 %v2076
  %2170 = vmatprep.subr.mxu0 0.0
  %2171 = vmatpush1.msra.mxu0 %v2077
  %2172 = vmatprep.subr.mxu0 0.0
  %2173 = vmatpush1.msra.mxu0 %v2078
  %2174 = vmatprep.subr.mxu0 0.0
  %2175 = vmatpush1.msra.mxu0 0.0
  %2176 = vmatprep.subr.mxu0 0.0
  %2177 = vmatpush1.msra.mxu0 0.0
  %2178 = vmatprep.subr.mxu0 0.0
  %2179 = vmatpush1.msra.mxu0 0.0
  %2180 = vmatprep.subr.mxu0 0.0
  %2181 = vmatpush1.msra.mxu0 0.0
  %2182 = vmatprep.subr.mxu0 0.0
  %2183 = vmatpush1.msra.mxu0 0.0
  %2184 = vmatprep.subr.mxu0 0.0
  %2185 = vmatpush1.msra.mxu0 0.0
  %2186 = vmatprep.subr.mxu0 0.0
  %2187 = vmatpush1.msra.mxu0 0.0
  %2188 = vmatprep.subr.mxu0 0.0
  %2189 = vmatpush1.msra.mxu0 0.0
  %2190 = vmatprep.subr.mxu0 0.0
  %2191 = vmatpush1.msra.mxu0 0.0
  %2192 = vmatprep.subr.mxu0 0.0
  %2193 = vmatpush1.msra.mxu0 0.0
  %2194 = vmatprep.subr.mxu0 0.0
  %2195 = vmatpush1.msra.mxu0 0.0
  %2196 = vmatprep.subr.mxu0 0.0
  %2197 = vmatpush1.msra.mxu0 0.0
  %2198 = vmatprep.subr.mxu0 0.0
  %2199 = vmatpush1.msra.mxu0 0.0
  %2200 = vmatprep.subr.mxu0 0.0
  %2201 = vmatpush1.msra.mxu0 0.0
  %2202 = vmatprep.subr.mxu0 0.0
  %2203 = vmatpush1.msra.mxu0 0.0
  %2204 = vmatprep.subr.mxu0 0.0
  %2205 = vmatpush1.msra.mxu0 0.0
  %2206 = vmatprep.subr.mxu0 0.0
  %2207 = vmatpush1.msra.mxu0 0.0
  %2208 = vmatprep.subr.mxu0 0.0
  %2209 = vmatpush1.msra.mxu0 0.0
  %2210 = vmatprep.subr.mxu0 0.0
  %2211 = vmatpush1.msra.mxu0 0.0
  %2212 = vmatprep.subr.mxu0 0.0
  %2213 = vmatpush1.msra.mxu0 0.0
  %2214 = vmatprep.subr.mxu0 0.0
  %2215 = vmatpush1.msra.mxu0 0.0
  %2216 = vmatprep.subr.mxu0 0.0
  %2217 = vmatpush1.msra.mxu0 0.0
  %2218 = vmatprep.subr.mxu0 0.0
  %2219 = vmatpush1.msra.mxu0 0.0
  %2220 = vmatprep.subr.mxu0 0.0
  %2221 = vmatpush1.msra.mxu0 0.0
  %2222 = vmatprep.subr.mxu0 0.0
  %2223 = vmatpush1.msra.mxu0 0.0
  %2224 = vmatprep.subr.mxu0 0.0
  %2225 = vmatpush1.msra.mxu0 0.0
  %2226 = vmatprep.subr.mxu0 0.0
  %2227 = vmatpush1.msra.mxu0 0.0
  %2228 = vmatprep.subr.mxu0 0.0
  %2229 = vmatpush1.msra.mxu0 0.0
  %2230 = vmatprep.mubr.f32.mxu0 0.0
  %2231 = vmatmul.mubr.f32.gmra.mrb[0].mxu0 %v2079
  %v2232 = vpop.f32.mrb[0].mxu0
  %v2233 = vadd.f32 %v2153, %v2232
  %v2234 = vpop.f32.mrb[0].mxu0
  %2235 = vmatprep.mubr.f32.mxu0 0.0
  %2236 = vmatmul.mubr.f32.gmra.mrb[0].mxu0 %v2082
  %v2237 = vpop.f32.mrb[0].mxu0
  %v2238 = vadd.f32 %v2158, %v2237
  %v2239 = vpop.f32.mrb[0].mxu0
  %2240 = vmatprep.mubr.f32.mxu0 0.0
  %2241 = vmatmul.mubr.f32.gmra.mrb[0].mxu0 %v2084
  %v2242 = vpop.f32.mrb[0].mxu0
  %v2243 = vadd.f32 %v2163, %v2242
  %v2244 = vpop.f32.mrb[0].mxu0
  %2245 = vdwg.mxu0
  %vm2246 = vcmask 654336
  %v2247 = vsel %vm2246, %v2233, 0.0
  %v2248 = vsel %vm2246, %v2238, 0.0
  %v2249 = vadd.f32 %v2247, %v2248
  %vm2250 = vcmask 650240
  %v2251 = vsel %vm2250, %v2243, 0.0
  %v2252 = vadd.f32 %v2249, %v2251
  %v2253 = vrot.slane %v2252, 4
  %v2254 = vadd.f32 %v2252, %v2253
  %v2255 = vrot.slane %v2254, 2
  %v2256 = vadd.f32 %v2254, %v2255
  %v2257 = vrot.slane %v2256, 1
  %v2258 = vadd.f32 %v2256, %v2257
  %v2259 = vmul.f32 %v2233, %v2233
  %v2260 = vmul.f32 %v2238, %v2238
  %v2261 = vmul.f32 %v2243, %v2243
  %v2262 = vsel %vm2246, %v2259, 0.0
  %v2263 = vsel %vm2246, %v2260, 0.0
  %v2264 = vadd.f32 %v2262, %v2263
  %v2265 = vsel %vm2250, %v2261, 0.0
  %v2266 = vadd.f32 %v2264, %v2265
  %v2267 = vrot.slane %v2266, 4
  %v2268 = vadd.f32 %v2266, %v2267
  %v2269 = vrot.slane %v2268, 2
  %v2270 = vadd.f32 %v2268, %v2269
  %v2271 = vrot.slane %v2270, 1
  %v2272 = vadd.f32 %v2270, %v2271
  %v2273 = vsel %vm953, %v2258, %v2272
  %v2274 = vld [vmem:[%s14] sm:$0xff]
  %v2275 = vld [vmem:[%s14 + $0x8] sm:$0xff]
  %v2276 = vld [vmem:[%s14 + $0x10] sm:$0xff]
  %v2277 = vld [vmem:[%s14 + $0x18] sm:$0xff]
  %v2278 = vld [vmem:[%s14 + $0x20] sm:$0xff]
  %v2279 = vld [vmem:[%s14 + $0x28] sm:$0xff]
  %v2280 = vld [vmem:[%s14 + $0x30] sm:$0xff]
  %v2281 = vld [vmem:[%s14 + $0x38] sm:$0xff]
  %v2282 = vld [vmem:[%s14 + $0x40] sm:$0xff]
  %v2283 = vld [vmem:[%s14 + $0x48] sm:$0xff]
  %v2285 = vsel %vm2246, %v2273, 0
  %2287 = vmatprep.subr.mxu0 0.0
  %2288 = vmatpush1.msra.mxu0 %v2274
  %2289 = vmatprep.subr.mxu0 0.0
  %2290 = vmatpush1.msra.mxu0 %v2275
  %2291 = vmatprep.subr.mxu0 0.0
  %2292 = vmatpush1.msra.mxu0 %v2276
  %2293 = vmatprep.subr.mxu0 0.0
  %2294 = vmatpush1.msra.mxu0 %v2277
  %2295 = vmatprep.subr.mxu0 0.0
  %2296 = vmatpush1.msra.mxu0 %v2278
  %2297 = vmatprep.subr.mxu0 0.0
  %2298 = vmatpush1.msra.mxu0 %v2279
  %2299 = vmatprep.subr.mxu0 0.0
  %2300 = vmatpush1.msra.mxu0 %v2280
  %2301 = vmatprep.subr.mxu0 0.0
  %2302 = vmatpush1.msra.mxu0 %v2281
  %2303 = vmatprep.subr.mxu0 0.0
  %2304 = vmatpush1.msra.mxu0 %v2282
  %2305 = vmatprep.subr.mxu0 0.0
  %2306 = vmatpush1.msra.mxu0 %v2283
  %2307 = vmatprep.subr.mxu0 0.0
  %2308 = vmatpush1.msra.mxu0 0.0
  %2309 = vmatprep.subr.mxu0 0.0
  %2310 = vmatpush1.msra.mxu0 0.0
  %2311 = vmatprep.subr.mxu0 0.0
  %2312 = vmatpush1.msra.mxu0 0.0
  %2313 = vmatprep.subr.mxu0 0.0
  %2314 = vmatpush1.msra.mxu0 0.0
  %2315 = vmatprep.subr.mxu0 0.0
  %2316 = vmatpush1.msra.mxu0 0.0
  %2317 = vmatprep.subr.mxu0 0.0
  %2318 = vmatpush1.msra.mxu0 0.0
  %2319 = vmatprep.subr.mxu0 0.0
  %2320 = vmatpush1.msra.mxu0 0.0
  %2321 = vmatprep.subr.mxu0 0.0
  %2322 = vmatpush1.msra.mxu0 0.0
  %2323 = vmatprep.subr.mxu0 0.0
  %2324 = vmatpush1.msra.mxu0 0.0
  %2325 = vmatprep.subr.mxu0 0.0
  %2326 = vmatpush1.msra.mxu0 0.0
  %2327 = vmatprep.subr.mxu0 0.0
  %2328 = vmatpush1.msra.mxu0 0.0
  %2329 = vmatprep.subr.mxu0 0.0
  %2330 = vmatpush1.msra.mxu0 0.0
  %2331 = vmatprep.subr.mxu0 0.0
  %2332 = vmatpush1.msra.mxu0 0.0
  %2333 = vmatprep.subr.mxu0 0.0
  %2334 = vmatpush1.msra.mxu0 0.0
  %2335 = vmatprep.subr.mxu0 0.0
  %2336 = vmatpush1.msra.mxu0 0.0
  %2337 = vmatprep.subr.mxu0 0.0
  %2338 = vmatpush1.msra.mxu0 0.0
  %2339 = vmatprep.subr.mxu0 0.0
  %2340 = vmatpush1.msra.mxu0 0.0
  %2341 = vmatprep.subr.mxu0 0.0
  %2342 = vmatpush1.msra.mxu0 0.0
  %2343 = vmatprep.subr.mxu0 0.0
  %2344 = vmatpush1.msra.mxu0 0.0
  %2345 = vmatprep.subr.mxu0 0.0
  %2346 = vmatpush1.msra.mxu0 0.0
  %2347 = vmatprep.subr.mxu0 0.0
  %2348 = vmatpush1.msra.mxu0 0.0
  %2349 = vmatprep.subr.mxu0 0.0
  %2350 = vmatpush1.msra.mxu0 0.0
  %2351 = vmatprep.mubr.f32.mxu0 0.0
  %2352 = vmatmul.mubr.f32.gmra.mrb[0].mxu0 %v2285
  %v2353 = vpop.f32.mrb[0].mxu0
  %v2354 = vadd.f32 0.0, %v2353
  %v2355 = vpop.f32.mrb[0].mxu0
  %2356 = vdwg.mxu0
  %v2357 = vmul.f32 %v2354, 0.005
  %v2358 = vmul.f32 %v2357, %v2357
  %v2360 = vrot.slane %v2358, 7
  %v2362 = vsub.f32 %v2357, %v2360
  %v2363 = vld [vmem:[%s12] sm:$0x1]
  %v2364 = vadd.f32 %v2362, 1e-05
  %v2365 = vrsqrt.pop %v2364
  %v2368 = vunpack.c.l.s4 1966171168
  %v2369 = vunpack.c.0.s8 %v2368
  %v2370 = vlaneseq
  %v2371 = vshrl.u32 %v2370, 7
  %v2372 = vsub.s32 %v2369, %v2371
  %v2373 = vrot.slane %v2365, %v2372
  %v2374 = vcombine.high %v2373, %v2373
  %v2376 = vunpack.c.l.s4 1966171168
  %v2377 = vunpack.c.0.s8 %v2376
  %v2378 = vlaneseq
  %v2379 = vshrl.u32 %v2378, 7
  %v2380 = vsub.s32 %v2377, %v2379
  %v2381 = vrot.slane %v2374, %v2380
  %v2383 = vmul.f32 %v2363, %v2381
  %v2384 = vld [vmem:[%s13] sm:$0x1]
  %v2385 = vmul.f32 %v2357, %v2383
  %v2386 = vsub.f32 %v2384, %v2385
  %v2388 = vlaneseq
  %v2389 = vshrl.u32 %v2388, 7
  %v2390 = vsub.s32 0, %v2389
  %v2391 = vrot.slane %v2386, %v2390
  %v2393 = vsel %vm953, %v2383, %v2391
  %v2394 = vld [vmem:[%s15] sm:$0xff]
  %v2396 = vsel %vm1876, %v2393, 0
  %2398 = vmatprep.subr.mxu0 0.0
  %2399 = vmatpush1.msra.mxu0 %v2394
  %2400 = vmatprep.subr.mxu0 0.0
  %2401 = vmatpush1.msra.mxu0 0.0
  %2402 = vmatprep.subr.mxu0 0.0
  %2403 = vmatpush1.msra.mxu0 0.0
  %2404 = vmatprep.subr.mxu0 0.0
  %2405 = vmatpush1.msra.mxu0 0.0
  %2406 = vmatprep.subr.mxu0 0.0
  %2407 = vmatpush1.msra.mxu0 0.0
  %2408 = vmatprep.subr.mxu0 0.0
  %2409 = vmatpush1.msra.mxu0 0.0
  %2410 = vmatprep.subr.mxu0 0.0
  %2411 = vmatpush1.msra.mxu0 0.0
  %2412 = vmatprep.subr.mxu0 0.0
  %2413 = vmatpush1.msra.mxu0 0.0
  %2414 = vmatprep.subr.mxu0 0.0
  %2415 = vmatpush1.msra.mxu0 0.0
  %2416 = vmatprep.subr.mxu0 0.0
  %2417 = vmatpush1.msra.mxu0 0.0
  %2418 = vmatprep.subr.mxu0 0.0
  %2419 = vmatpush1.msra.mxu0 0.0
  %2420 = vmatprep.subr.mxu0 0.0
  %2421 = vmatpush1.msra.mxu0 0.0
  %2422 = vmatprep.subr.mxu0 0.0
  %2423 = vmatpush1.msra.mxu0 0.0
  %2424 = vmatprep.subr.mxu0 0.0
  %2425 = vmatpush1.msra.mxu0 0.0
  %2426 = vmatprep.subr.mxu0 0.0
  %2427 = vmatpush1.msra.mxu0 0.0
  %2428 = vmatprep.subr.mxu0 0.0
  %2429 = vmatpush1.msra.mxu0 0.0
  %2430 = vmatprep.subr.mxu0 0.0
  %2431 = vmatpush1.msra.mxu0 0.0
  %2432 = vmatprep.subr.mxu0 0.0
  %2433 = vmatpush1.msra.mxu0 0.0
  %2434 = vmatprep.subr.mxu0 0.0
  %2435 = vmatpush1.msra.mxu0 0.0
  %2436 = vmatprep.subr.mxu0 0.0
  %2437 = vmatpush1.msra.mxu0 0.0
  %2438 = vmatprep.subr.mxu0 0.0
  %2439 = vmatpush1.msra.mxu0 0.0
  %2440 = vmatprep.subr.mxu0 0.0
  %2441 = vmatpush1.msra.mxu0 0.0
  %2442 = vmatprep.subr.mxu0 0.0
  %2443 = vmatpush1.msra.mxu0 0.0
  %2444 = vmatprep.subr.mxu0 0.0
  %2445 = vmatpush1.msra.mxu0 0.0
  %2446 = vmatprep.subr.mxu0 0.0
  %2447 = vmatpush1.msra.mxu0 0.0
  %2448 = vmatprep.subr.mxu0 0.0
  %2449 = vmatpush1.msra.mxu0 0.0
  %2450 = vmatprep.subr.mxu0 0.0
  %2451 = vmatpush1.msra.mxu0 0.0
  %2452 = vmatprep.subr.mxu0 0.0
  %2453 = vmatpush1.msra.mxu0 0.0
  %2454 = vmatprep.subr.mxu0 0.0
  %2455 = vmatpush1.msra.mxu0 0.0
  %2456 = vmatprep.subr.mxu0 0.0
  %2457 = vmatpush1.msra.mxu0 0.0
  %2458 = vmatprep.subr.mxu0 0.0
  %2459 = vmatpush1.msra.mxu0 0.0
  %2460 = vmatprep.subr.mxu0 0.0
  %2461 = vmatpush1.msra.mxu0 0.0
  %2462 = vmatprep.mubr.f32.mxu0 0.0
  %2463 = vmatmul.mubr.f32.gmra.mrb[0].mxu0 %v2396
  %v2464 = vpop.f32.mrb[0].mxu0
  %v2465 = vadd.f32 0.0, %v2464
  %v2466 = vpop.f32.mrb[0].mxu0
  %2467 = vdwg.mxu0
  %v2468 = vlaneseq
  %v2469 = vshrl.u32 %v2468, 7
  %v2470 = vsub.s32 0, %v2469
  %v2471 = vrot.slane %v2465, %v2470
  %v2472 = vmul.f32 %v2233, %v2471
  %v2473 = vmul.f32 %v2238, %v2471
  %v2474 = vmul.f32 %v2243, %v2471
  %v2475 = vlaneseq
  %v2476 = vshrl.u32 %v2475, 7
  %v2477 = vsub.s32 1, %v2476
  %v2478 = vrot.slane %v2465, %v2477
  %v2479 = vadd.f32 %v2472, %v2478
  %v2480 = vadd.f32 %v2473, %v2478
  %v2481 = vadd.f32 %v2474, %v2478
  %vm2482 = vcmp.ge.f32.partialorder %v2479, 0.0
  %vm2483 = vcmp.ge.f32.partialorder %v2480, 0.0
  %vm2484 = vcmp.ge.f32.partialorder %v2481, 0.0
  %v2485 = vmul.f32 %v2479, 0.2
  %v2486 = vmul.f32 %v2480, 0.2
  %v2487 = vmul.f32 %v2481, 0.2
  %v2488 = vsel %vm2482, %v2479, %v2485
  %v2489 = vsel %vm2483, %v2480, %v2486
  %v2490 = vsel %vm2484, %v2481, %v2487
  %v2493 = vrot.slane %v2488, 1
  %v2494 = vrot.slane %v2489, 1
  %v2495 = vsel %vm694, %v2493, %v2494
  %2496 = vrot.lane.b32.xlu0 %v2495, 80
  %v2497 = vpop.permute.xlu0 %2496
  %v2499 = vrot.slane %v2488, 2
  %v2500 = vrot.slane %v2489, 2
  %v2501 = vsel %vm704, %v2499, %v2500
  %2502 = vrot.lane.b32.xlu0 %v2501, 32
  %v2503 = vpop.permute.xlu0 %2502
  %v2505 = vsel %vm2246, %v2488, %v2497
  %v2506 = vsel %vm1479, %v2497, %v2503
  %v2508 = vrot.slane %v2490, 1
  %v2509 = vsel %vm694, %v2494, %v2508
  %2510 = vrot.lane.b32.xlu0 %v2509, 80
  %v2511 = vpop.permute.xlu0 %2510
  %2512 = vrot.lane.b32.xlu0 %v2508, 80
  %v2513 = vpop.permute.xlu0 %2512
  %v2516 = vrot.slane %v2490, 2
  %v2517 = vsel %vm704, %v2500, %v2516
  %2518 = vrot.lane.b32.xlu0 %v2517, 32
  %v2519 = vpop.permute.xlu0 %2518
  %2520 = vrot.lane.b32.xlu0 %v2516, 32
  %v2521 = vpop.permute.xlu0 %2520
  %v2524 = vsel %vm2246, %v2489, %v2511
  %v2525 = vsel %vm2246, %v2490, %v2513
  %v2526 = vsel %vm1479, %v2511, %v2519
  %v2527 = vsel %vm1479, %v2513, %v2521
  %v2532 = vrot.slane %v2524, 2
  %v2533 = vrot.slane %v2525, 2
  %v2534 = vsel %vm704, %v2532, %v2533
  %v2535 = vrot.slane %v2526, 2
  %v2536 = vrot.slane %v2527, 2
  %v2537 = vsel %vm704, %v2535, %v2536
  %s2539 = smul.u32 240, 1
  %s2540 = sshll.u32 %s2539, 4
  %2541 = dma.done %s498, %s2540
  %v2542 = vld [vmem:[#allocation5] sm:$0xff]
  %v2543 = vld [vmem:[#allocation5 + $0x8] sm:$0xff]
  %v2544 = vld [vmem:[#allocation5 + $0x10] sm:$0xff]
  %v2545 = vld [vmem:[#allocation5 + $0x18] sm:$0xff]
  %v2546 = vld [vmem:[#allocation5 + $0x20] sm:$0xff]
  %v2547 = vld [vmem:[#allocation5 + $0x28] sm:$0xff]
  %v2548 = vld [vmem:[#allocation5 + $0x30] sm:$0xff]
  %v2549 = vld [vmem:[#allocation5 + $0x38] sm:$0xff]
  %v2550 = vld [vmem:[#allocation5 + $0x40] sm:$0xff]
  %v2551 = vld [vmem:[#allocation5 + $0x48] sm:$0xff]
  %v2552 = vld [vmem:[#allocation5 + $0x50] sm:$0xff]
  %v2553 = vld [vmem:[#allocation5 + $0x58] sm:$0xff]
  %v2554 = vld [vmem:[#allocation5 + $0x60] sm:$0xff]
  %v2555 = vld [vmem:[#allocation5 + $0x68] sm:$0xff]
  %v2556 = vld [vmem:[#allocation5 + $0x70] sm:$0xff]
  %v2557 = vld [vmem:[#allocation5 + $0x78] sm:$0xff]
  %v2558 = vld [vmem:[#allocation5 + $0x80] sm:$0xff]
  %v2559 = vld [vmem:[#allocation5 + $0x88] sm:$0xff]
  %v2560 = vld [vmem:[#allocation5 + $0x90] sm:$0xff]
  %v2561 = vld [vmem:[#allocation5 + $0x98] sm:$0xff]
  %v2562 = vld [vmem:[#allocation5 + $0xa0] sm:$0xff]
  %v2563 = vld [vmem:[#allocation5 + $0xa8] sm:$0xff]
  %v2564 = vld [vmem:[#allocation5 + $0xb0] sm:$0xff]
  %v2565 = vld [vmem:[#allocation5 + $0xb8] sm:$0xff]
  %v2566 = vld [vmem:[#allocation5 + $0xc0] sm:$0xff]
  %v2567 = vld [vmem:[#allocation5 + $0xc8] sm:$0xff]
  %v2568 = vld [vmem:[#allocation5 + $0xd0] sm:$0xff]
  %v2569 = vld [vmem:[#allocation5 + $0xd8] sm:$0xff]
  %v2570 = vld [vmem:[#allocation5 + $0xe0] sm:$0xff]
  %v2571 = vld [vmem:[#allocation5 + $0xe8] sm:$0xff]
  %vm2572 = vcmask 916480
  %v2574 = vsel %vm2572, %v2506, 0
  %v2576 = vsel %vm2572, %v2537, 0
  %2578 = vmatprep.subr.mxu0 0.0
  %2579 = vmatpush1.msra.mxu0 %v2542
  %2580 = vmatprep.subr.mxu0 0.0
  %2581 = vmatpush1.msra.mxu0 %v2543
  %2582 = vmatprep.subr.mxu0 0.0
  %2583 = vmatpush1.msra.mxu0 %v2544
  %2584 = vmatprep.subr.mxu0 0.0
  %2585 = vmatpush1.msra.mxu0 %v2545
  %2586 = vmatprep.subr.mxu0 0.0
  %2587 = vmatpush1.msra.mxu0 %v2546
  %2588 = vmatprep.subr.mxu0 0.0
  %2589 = vmatpush1.msra.mxu0 %v2547
  %2590 = vmatprep.subr.mxu0 0.0
  %2591 = vmatpush1.msra.mxu0 %v2548
  %2592 = vmatprep.subr.mxu0 0.0
  %2593 = vmatpush1.msra.mxu0 %v2549
  %2594 = vmatprep.subr.mxu0 0.0
  %2595 = vmatpush1.msra.mxu0 %v2550
  %2596 = vmatprep.subr.mxu0 0.0
  %2597 = vmatpush1.msra.mxu0 %v2551
  %2598 = vmatprep.subr.mxu0 0.0
  %2599 = vmatpush1.msra.mxu0 %v2552
  %2600 = vmatprep.subr.mxu0 0.0
  %2601 = vmatpush1.msra.mxu0 %v2553
  %2602 = vmatprep.subr.mxu0 0.0
  %2603 = vmatpush1.msra.mxu0 %v2554
  %2604 = vmatprep.subr.mxu0 0.0
  %2605 = vmatpush1.msra.mxu0 %v2555
  %2606 = vmatprep.subr.mxu0 0.0
  %2607 = vmatpush1.msra.mxu0 %v2556
  %2608 = vmatprep.subr.mxu0 0.0
  %2609 = vmatpush1.msra.mxu0 %v2557
  %2610 = vmatprep.subr.mxu0 0.0
  %2611 = vmatpush1.msra.mxu0 %v2558
  %2612 = vmatprep.subr.mxu0 0.0
  %2613 = vmatpush1.msra.mxu0 %v2559
  %2614 = vmatprep.subr.mxu0 0.0
  %2615 = vmatpush1.msra.mxu0 %v2560
  %2616 = vmatprep.subr.mxu0 0.0
  %2617 = vmatpush1.msra.mxu0 %v2561
  %2618 = vmatprep.subr.mxu0 0.0
  %2619 = vmatpush1.msra.mxu0 %v2562
  %2620 = vmatprep.subr.mxu0 0.0
  %2621 = vmatpush1.msra.mxu0 %v2563
  %2622 = vmatprep.subr.mxu0 0.0
  %2623 = vmatpush1.msra.mxu0 %v2564
  %2624 = vmatprep.subr.mxu0 0.0
  %2625 = vmatpush1.msra.mxu0 %v2565
  %2626 = vmatprep.subr.mxu0 0.0
  %2627 = vmatpush1.msra.mxu0 %v2566
  %2628 = vmatprep.subr.mxu0 0.0
  %2629 = vmatpush1.msra.mxu0 %v2567
  %2630 = vmatprep.subr.mxu0 0.0
  %2631 = vmatpush1.msra.mxu0 %v2568
  %2632 = vmatprep.subr.mxu0 0.0
  %2633 = vmatpush1.msra.mxu0 %v2569
  %2634 = vmatprep.subr.mxu0 0.0
  %2635 = vmatpush1.msra.mxu0 %v2570
  %2636 = vmatprep.subr.mxu0 0.0
  %2637 = vmatpush1.msra.mxu0 %v2571
  %2638 = vmatprep.subr.mxu0 0.0
  %2639 = vmatpush1.msra.mxu0 0.0
  %2640 = vmatprep.subr.mxu0 0.0
  %2641 = vmatpush1.msra.mxu0 0.0
  %2642 = vmatprep.mubr.f32.mxu0 %v2574
  %2643 = vmatmul.mubr.f32.gmra.mrb[0].mxu0 %v2505
  %v2644 = vpop.f32.mrb[0].mxu0
  %v2645 = vadd.f32 0.0, %v2644
  %v2646 = vpop.f32.mrb[0].mxu0
  %2647 = vmatprep.mubr.f32.mxu0 %v2576
  %2648 = vmatmul.mubr.f32.gmra.mrb[0].mxu0 %v2534
  %v2649 = vpop.f32.mrb[0].mxu0
  %v2650 = vadd.f32 0.0, %v2649
  %v2651 = vpop.f32.mrb[0].mxu0
  %2652 = vdwg.mxu0
  %v2653 = vsel %vm1268, %v2645, 0.0
  %v2654 = vsel %vm1268, %v2650, 0.0
  %v2655 = vadd.f32 %v2653, %v2654
  %v2656 = vrot.slane %v2655, 4
  %v2657 = vadd.f32 %v2655, %v2656
  %v2658 = vrot.slane %v2657, 2
  %v2659 = vadd.f32 %v2657, %v2658
  %v2660 = vrot.slane %v2659, 1
  %v2661 = vadd.f32 %v2659, %v2660
  %v2662 = vmul.f32 %v2645, %v2645
  %v2663 = vmul.f32 %v2650, %v2650
  %v2664 = vsel %vm1268, %v2662, 0.0
  %v2665 = vsel %vm1268, %v2663, 0.0
  %v2666 = vadd.f32 %v2664, %v2665
  %v2667 = vrot.slane %v2666, 4
  %v2668 = vadd.f32 %v2666, %v2667
  %v2669 = vrot.slane %v2668, 2
  %v2670 = vadd.f32 %v2668, %v2669
  %v2671 = vrot.slane %v2670, 1
  %v2672 = vadd.f32 %v2670, %v2671
  %v2673 = vsel %vm953, %v2661, %v2672
  %v2674 = vld [vmem:[%s19] sm:$0xff]
  %v2675 = vld [vmem:[%s19 + $0x8] sm:$0xff]
  %v2676 = vld [vmem:[%s19 + $0x10] sm:$0xff]
  %v2677 = vld [vmem:[%s19 + $0x18] sm:$0xff]
  %v2678 = vld [vmem:[%s19 + $0x20] sm:$0xff]
  %v2679 = vld [vmem:[%s19 + $0x28] sm:$0xff]
  %v2680 = vld [vmem:[%s19 + $0x30] sm:$0xff]
  %v2681 = vld [vmem:[%s19 + $0x38] sm:$0xff]
  %v2683 = vsel %vm1268, %v2673, 0
  %2685 = vmatprep.subr.mxu0 0.0
  %2686 = vmatpush1.msra.mxu0 %v2674
  %2687 = vmatprep.subr.mxu0 0.0
  %2688 = vmatpush1.msra.mxu0 %v2675
  %2689 = vmatprep.subr.mxu0 0.0
  %2690 = vmatpush1.msra.mxu0 %v2676
  %2691 = vmatprep.subr.mxu0 0.0
  %2692 = vmatpush1.msra.mxu0 %v2677
  %2693 = vmatprep.subr.mxu0 0.0
  %2694 = vmatpush1.msra.mxu0 %v2678
  %2695 = vmatprep.subr.mxu0 0.0
  %2696 = vmatpush1.msra.mxu0 %v2679
  %2697 = vmatprep.subr.mxu0 0.0
  %2698 = vmatpush1.msra.mxu0 %v2680
  %2699 = vmatprep.subr.mxu0 0.0
  %2700 = vmatpush1.msra.mxu0 %v2681
  %2701 = vmatprep.subr.mxu0 0.0
  %2702 = vmatpush1.msra.mxu0 0.0
  %2703 = vmatprep.subr.mxu0 0.0
  %2704 = vmatpush1.msra.mxu0 0.0
  %2705 = vmatprep.subr.mxu0 0.0
  %2706 = vmatpush1.msra.mxu0 0.0
  %2707 = vmatprep.subr.mxu0 0.0
  %2708 = vmatpush1.msra.mxu0 0.0
  %2709 = vmatprep.subr.mxu0 0.0
  %2710 = vmatpush1.msra.mxu0 0.0
  %2711 = vmatprep.subr.mxu0 0.0
  %2712 = vmatpush1.msra.mxu0 0.0
  %2713 = vmatprep.subr.mxu0 0.0
  %2714 = vmatpush1.msra.mxu0 0.0
  %2715 = vmatprep.subr.mxu0 0.0
  %2716 = vmatpush1.msra.mxu0 0.0
  %2717 = vmatprep.subr.mxu0 0.0
  %2718 = vmatpush1.msra.mxu0 0.0
  %2719 = vmatprep.subr.mxu0 0.0
  %2720 = vmatpush1.msra.mxu0 0.0
  %2721 = vmatprep.subr.mxu0 0.0
  %2722 = vmatpush1.msra.mxu0 0.0
  %2723 = vmatprep.subr.mxu0 0.0
  %2724 = vmatpush1.msra.mxu0 0.0
  %2725 = vmatprep.subr.mxu0 0.0
  %2726 = vmatpush1.msra.mxu0 0.0
  %2727 = vmatprep.subr.mxu0 0.0
  %2728 = vmatpush1.msra.mxu0 0.0
  %2729 = vmatprep.subr.mxu0 0.0
  %2730 = vmatpush1.msra.mxu0 0.0
  %2731 = vmatprep.subr.mxu0 0.0
  %2732 = vmatpush1.msra.mxu0 0.0
  %2733 = vmatprep.subr.mxu0 0.0
  %2734 = vmatpush1.msra.mxu0 0.0
  %2735 = vmatprep.subr.mxu0 0.0
  %2736 = vmatpush1.msra.mxu0 0.0
  %2737 = vmatprep.subr.mxu0 0.0
  %2738 = vmatpush1.msra.mxu0 0.0
  %2739 = vmatprep.subr.mxu0 0.0
  %2740 = vmatpush1.msra.mxu0 0.0
  %2741 = vmatprep.subr.mxu0 0.0
  %2742 = vmatpush1.msra.mxu0 0.0
  %2743 = vmatprep.subr.mxu0 0.0
  %2744 = vmatpush1.msra.mxu0 0.0
  %2745 = vmatprep.subr.mxu0 0.0
  %2746 = vmatpush1.msra.mxu0 0.0
  %2747 = vmatprep.subr.mxu0 0.0
  %2748 = vmatpush1.msra.mxu0 0.0
  %2749 = vmatprep.mubr.f32.mxu0 0.0
  %2750 = vmatmul.mubr.f32.gmra.mrb[0].mxu0 %v2683
  %v2751 = vpop.f32.mrb[0].mxu0
  %v2752 = vadd.f32 0.0, %v2751
  %v2753 = vpop.f32.mrb[0].mxu0
  %2754 = vdwg.mxu0
  %v2755 = vmul.f32 %v2752, 0.0078125
  %v2756 = vmul.f32 %v2755, %v2755
  %v2758 = vrot.slane %v2756, 7
  %v2760 = vsub.f32 %v2755, %v2758
  %v2761 = vld [vmem:[%s17] sm:$0x1]
  %v2762 = vadd.f32 %v2760, 1e-05
  %v2763 = vrsqrt.pop %v2762
  %v2766 = vunpack.c.l.s4 1966171168
  %v2767 = vunpack.c.0.s8 %v2766
  %v2768 = vlaneseq
  %v2769 = vshrl.u32 %v2768, 7
  %v2770 = vsub.s32 %v2767, %v2769
  %v2771 = vrot.slane %v2763, %v2770
  %v2772 = vcombine.high %v2771, %v2771
  %v2774 = vunpack.c.l.s4 1966171168
  %v2775 = vunpack.c.0.s8 %v2774
  %v2776 = vlaneseq
  %v2777 = vshrl.u32 %v2776, 7
  %v2778 = vsub.s32 %v2775, %v2777
  %v2779 = vrot.slane %v2772, %v2778
  %v2781 = vmul.f32 %v2761, %v2779
  %v2782 = vld [vmem:[%s18] sm:$0x1]
  %v2783 = vmul.f32 %v2755, %v2781
  %v2784 = vsub.f32 %v2782, %v2783
  %v2786 = vlaneseq
  %v2787 = vshrl.u32 %v2786, 7
  %v2788 = vsub.s32 0, %v2787
  %v2789 = vrot.slane %v2784, %v2788
  %v2791 = vsel %vm953, %v2781, %v2789
  %v2792 = vld [vmem:[%s20] sm:$0xff]
  %v2794 = vsel %vm1876, %v2791, 0
  %2796 = vmatprep.subr.mxu0 0.0
  %2797 = vmatpush1.msra.mxu0 %v2792
  %2798 = vmatprep.subr.mxu0 0.0
  %2799 = vmatpush1.msra.mxu0 0.0
  %2800 = vmatprep.subr.mxu0 0.0
  %2801 = vmatpush1.msra.mxu0 0.0
  %2802 = vmatprep.subr.mxu0 0.0
  %2803 = vmatpush1.msra.mxu0 0.0
  %2804 = vmatprep.subr.mxu0 0.0
  %2805 = vmatpush1.msra.mxu0 0.0
  %2806 = vmatprep.subr.mxu0 0.0
  %2807 = vmatpush1.msra.mxu0 0.0
  %2808 = vmatprep.subr.mxu0 0.0
  %2809 = vmatpush1.msra.mxu0 0.0
  %2810 = vmatprep.subr.mxu0 0.0
  %2811 = vmatpush1.msra.mxu0 0.0
  %2812 = vmatprep.subr.mxu0 0.0
  %2813 = vmatpush1.msra.mxu0 0.0
  %2814 = vmatprep.subr.mxu0 0.0
  %2815 = vmatpush1.msra.mxu0 0.0
  %2816 = vmatprep.subr.mxu0 0.0
  %2817 = vmatpush1.msra.mxu0 0.0
  %2818 = vmatprep.subr.mxu0 0.0
  %2819 = vmatpush1.msra.mxu0 0.0
  %2820 = vmatprep.subr.mxu0 0.0
  %2821 = vmatpush1.msra.mxu0 0.0
  %2822 = vmatprep.subr.mxu0 0.0
  %2823 = vmatpush1.msra.mxu0 0.0
  %2824 = vmatprep.subr.mxu0 0.0
  %2825 = vmatpush1.msra.mxu0 0.0
  %2826 = vmatprep.subr.mxu0 0.0
  %2827 = vmatpush1.msra.mxu0 0.0
  %2828 = vmatprep.subr.mxu0 0.0
  %2829 = vmatpush1.msra.mxu0 0.0
  %2830 = vmatprep.subr.mxu0 0.0
  %2831 = vmatpush1.msra.mxu0 0.0
  %2832 = vmatprep.subr.mxu0 0.0
  %2833 = vmatpush1.msra.mxu0 0.0
  %2834 = vmatprep.subr.mxu0 0.0
  %2835 = vmatpush1.msra.mxu0 0.0
  %2836 = vmatprep.subr.mxu0 0.0
  %2837 = vmatpush1.msra.mxu0 0.0
  %2838 = vmatprep.subr.mxu0 0.0
  %2839 = vmatpush1.msra.mxu0 0.0
  %2840 = vmatprep.subr.mxu0 0.0
  %2841 = vmatpush1.msra.mxu0 0.0
  %2842 = vmatprep.subr.mxu0 0.0
  %2843 = vmatpush1.msra.mxu0 0.0
  %2844 = vmatprep.subr.mxu0 0.0
  %2845 = vmatpush1.msra.mxu0 0.0
  %2846 = vmatprep.subr.mxu0 0.0
  %2847 = vmatpush1.msra.mxu0 0.0
  %2848 = vmatprep.subr.mxu0 0.0
  %2849 = vmatpush1.msra.mxu0 0.0
  %2850 = vmatprep.subr.mxu0 0.0
  %2851 = vmatpush1.msra.mxu0 0.0
  %2852 = vmatprep.subr.mxu0 0.0
  %2853 = vmatpush1.msra.mxu0 0.0
  %2854 = vmatprep.subr.mxu0 0.0
  %2855 = vmatpush1.msra.mxu0 0.0
  %2856 = vmatprep.subr.mxu0 0.0
  %2857 = vmatpush1.msra.mxu0 0.0
  %2858 = vmatprep.subr.mxu0 0.0
  %2859 = vmatpush1.msra.mxu0 0.0
  %2860 = vmatprep.mubr.f32.mxu0 0.0
  %2861 = vmatmul.mubr.f32.gmra.mrb[0].mxu0 %v2794
  %v2862 = vpop.f32.mrb[0].mxu0
  %v2863 = vadd.f32 0.0, %v2862
  %v2864 = vpop.f32.mrb[0].mxu0
  %2865 = vdwg.mxu0
  %v2866 = vlaneseq
  %v2867 = vshrl.u32 %v2866, 7
  %v2868 = vsub.s32 0, %v2867
  %v2869 = vrot.slane %v2863, %v2868
  %v2870 = vmul.f32 %v2645, %v2869
  %v2871 = vmul.f32 %v2650, %v2869
  %v2872 = vlaneseq
  %v2873 = vshrl.u32 %v2872, 7
  %v2874 = vsub.s32 1, %v2873
  %v2875 = vrot.slane %v2863, %v2874
  %v2876 = vadd.f32 %v2870, %v2875
  %v2877 = vadd.f32 %v2871, %v2875
  %vm2878 = vcmp.ge.f32.partialorder %v2876, 0.0
  %vm2879 = vcmp.ge.f32.partialorder %v2877, 0.0
  %v2880 = vmul.f32 %v2876, 0.2
  %v2881 = vmul.f32 %v2877, 0.2
  %v2882 = vsel %vm2878, %v2876, %v2880
  %v2883 = vsel %vm2879, %v2877, %v2881
  %v2885 = vrot.slane %v2882, 1
  %2886 = vrot.lane.b32.xlu0 %v2885, 64
  %v2887 = vpop.permute.xlu0 %2886
  %v2889 = vrot.slane %v2882, 2
  %v2891 = vsel %vm1268, %v2882, %v2887
  %v2893 = vrot.slane %v2883, 1
  %2894 = vrot.lane.b32.xlu0 %v2893, 64
  %v2895 = vpop.permute.xlu0 %2894
  %v2897 = vrot.slane %v2883, 2
  %v2898 = vsel %vm1268, %v2883, %v2895
  %v2900 = vrot.slane %v2898, 2
  %v2901 = vrot.slane %v2897, 2
  %v2904 = vsel %vm704, %v2891, %v2900
  %v2905 = vsel %vm704, %v2889, %v2901
  %s2906 = smul.u32 192, 1
  %s2907 = sshll.u32 %s2906, 4
  %2908 = dma.done %s599, %s2907
  %v2909 = vld [vmem:[#allocation6] sm:$0xff]
  %v2910 = vld [vmem:[#allocation6 + $0x8] sm:$0xff]
  %v2911 = vld [vmem:[#allocation6 + $0x10] sm:$0xff]
  %v2912 = vld [vmem:[#allocation6 + $0x18] sm:$0xff]
  %v2913 = vld [vmem:[#allocation6 + $0x20] sm:$0xff]
  %v2914 = vld [vmem:[#allocation6 + $0x28] sm:$0xff]
  %v2915 = vld [vmem:[#allocation6 + $0x30] sm:$0xff]
  %v2916 = vld [vmem:[#allocation6 + $0x38] sm:$0xff]
  %v2917 = vld [vmem:[#allocation6 + $0x40] sm:$0xff]
  %v2918 = vld [vmem:[#allocation6 + $0x48] sm:$0xff]
  %v2919 = vld [vmem:[#allocation6 + $0x50] sm:$0xff]
  %v2920 = vld [vmem:[#allocation6 + $0x58] sm:$0xff]
  %v2921 = vld [vmem:[#allocation6 + $0x60] sm:$0xff]
  %v2922 = vld [vmem:[#allocation6 + $0x68] sm:$0xff]
  %v2923 = vld [vmem:[#allocation6 + $0x70] sm:$0xff]
  %v2924 = vld [vmem:[#allocation6 + $0x78] sm:$0xff]
  %v2925 = vld [vmem:[#allocation6 + $0x80] sm:$0xff]
  %v2926 = vld [vmem:[#allocation6 + $0x88] sm:$0xff]
  %v2927 = vld [vmem:[#allocation6 + $0x90] sm:$0xff]
  %v2928 = vld [vmem:[#allocation6 + $0x98] sm:$0xff]
  %v2929 = vld [vmem:[#allocation6 + $0xa0] sm:$0xff]
  %v2930 = vld [vmem:[#allocation6 + $0xa8] sm:$0xff]
  %v2931 = vld [vmem:[#allocation6 + $0xb0] sm:$0xff]
  %v2932 = vld [vmem:[#allocation6 + $0xb8] sm:$0xff]
  %v2933 = vld [vmem:[%s22] sm:$0x1]
  %v2935 = vlaneseq
  %v2936 = vshrl.u32 %v2935, 7
  %v2937 = vsub.s32 0, %v2936
  %v2938 = vrot.slane %v2933, %v2937
  %v2941 = vsel %vm1268, %v2905, 0
  %v2943 = vsel %vm1268, %v2901, 0
  %2945 = vmatprep.subr.mxu0 0.0
  %2946 = vmatpush1.msra.mxu0 %v2909
  %2947 = vmatprep.subr.mxu0 0.0
  %2948 = vmatpush1.msra.mxu0 %v2910
  %2949 = vmatprep.subr.mxu0 0.0
  %2950 = vmatpush1.msra.mxu0 %v2911
  %2951 = vmatprep.subr.mxu0 0.0
  %2952 = vmatpush1.msra.mxu0 %v2912
  %2953 = vmatprep.subr.mxu0 0.0
  %2954 = vmatpush1.msra.mxu0 %v2913
  %2955 = vmatprep.subr.mxu0 0.0
  %2956 = vmatpush1.msra.mxu0 %v2914
  %2957 = vmatprep.subr.mxu0 0.0
  %2958 = vmatpush1.msra.mxu0 %v2915
  %2959 = vmatprep.subr.mxu0 0.0
  %2960 = vmatpush1.msra.mxu0 %v2916
  %2961 = vmatprep.subr.mxu0 0.0
  %2962 = vmatpush1.msra.mxu0 %v2917
  %2963 = vmatprep.subr.mxu0 0.0
  %2964 = vmatpush1.msra.mxu0 %v2918
  %2965 = vmatprep.subr.mxu0 0.0
  %2966 = vmatpush1.msra.mxu0 %v2919
  %2967 = vmatprep.subr.mxu0 0.0
  %2968 = vmatpush1.msra.mxu0 %v2920
  %2969 = vmatprep.subr.mxu0 0.0
  %2970 = vmatpush1.msra.mxu0 %v2921
  %2971 = vmatprep.subr.mxu0 0.0
  %2972 = vmatpush1.msra.mxu0 %v2922
  %2973 = vmatprep.subr.mxu0 0.0
  %2974 = vmatpush1.msra.mxu0 %v2923
  %2975 = vmatprep.subr.mxu0 0.0
  %2976 = vmatpush1.msra.mxu0 %v2924
  %2977 = vmatprep.subr.mxu0 0.0
  %2978 = vmatpush1.msra.mxu0 %v2925
  %2979 = vmatprep.subr.mxu0 0.0
  %2980 = vmatpush1.msra.mxu0 %v2926
  %2981 = vmatprep.subr.mxu0 0.0
  %2982 = vmatpush1.msra.mxu0 %v2927
  %2983 = vmatprep.subr.mxu0 0.0
  %2984 = vmatpush1.msra.mxu0 %v2928
  %2985 = vmatprep.subr.mxu0 0.0
  %2986 = vmatpush1.msra.mxu0 %v2929
  %2987 = vmatprep.subr.mxu0 0.0
  %2988 = vmatpush1.msra.mxu0 %v2930
  %2989 = vmatprep.subr.mxu0 0.0
  %2990 = vmatpush1.msra.mxu0 %v2931
  %2991 = vmatprep.subr.mxu0 0.0
  %2992 = vmatpush1.msra.mxu0 %v2932
  %2993 = vmatprep.subr.mxu0 0.0
  %2994 = vmatpush1.msra.mxu0 0.0
  %2995 = vmatprep.subr.mxu0 0.0
  %2996 = vmatpush1.msra.mxu0 0.0
  %2997 = vmatprep.subr.mxu0 0.0
  %2998 = vmatpush1.msra.mxu0 0.0
  %2999 = vmatprep.subr.mxu0 0.0
  %3000 = vmatpush1.msra.mxu0 0.0
  %3001 = vmatprep.subr.mxu0 0.0
  %3002 = vmatpush1.msra.mxu0 0.0
  %3003 = vmatprep.subr.mxu0 0.0
  %3004 = vmatpush1.msra.mxu0 0.0
  %3005 = vmatprep.subr.mxu0 0.0
  %3006 = vmatpush1.msra.mxu0 0.0
  %3007 = vmatprep.subr.mxu0 0.0
  %3008 = vmatpush1.msra.mxu0 0.0
  %3009 = vmatprep.mubr.f32.mxu0 %v2941
  %3010 = vmatmul.mubr.f32.gmra.mrb[0].mxu0 %v2904
  %v3011 = vpop.f32.mrb[0].mxu0
  %v3012 = vadd.f32 %v2938, %v3011
  %v3013 = vpop.f32.mrb[0].mxu0
  %3014 = vmatprep.mubr.f32.mxu0 %v2943
  %3015 = vmatmul.mubr.f32.gmra.mrb[0].mxu0 %v2900
  %v3016 = vpop.f32.mrb[0].mxu0
  %v3017 = vadd.f32 %v2938, %v3016
  %v3018 = vpop.f32.mrb[0].mxu0
  %3019 = vdwg.mxu0
  %vm3020 = vcmask 48128
  %3021 = vst.msk [vmem:[%s23] sm:$0xff] %vm3020, %v3012
  %vm3022 = vcmask 44032
  %3023 = vst.msk [vmem:[%s23 + $0x8] sm:$0xf] %vm3022, %v3017
  // Predicated region
  $region244: #{wdiscriminator_forward.1} parent=0 // pred_check
    _
  $region245: #{wdiscriminator_forward.1} parent=0 // pred_check_branch
    %3025 = sbr.rel (0) target = $region247
  $region246: #{wdiscriminator_forward.1} parent=0 // pred_region
    _
  $region247: #{wdiscriminator_forward.1} parent=0 // pred_fallthru
    _
  // Predicated region
  $region248: #{wdiscriminator_forward.1} parent=0 // pred_check
    _
  $region249: #{wdiscriminator_forward.1} parent=0 // pred_check_branch
    %3027 = sbr.rel (0) target = $region251
  $region250: #{wdiscriminator_forward.1} parent=0 // pred_region
    _
  $region251: #{wdiscriminator_forward.1} parent=0 // pred_fallthru
    _
  %3028 = vsyncmov [#allocation7]
  %s3029 = vpop.sfrf %3028
  %p3030 = scmp.eq.s32.totalorder %s3029, 0
  %p3031 = pneg %p3030
  %3033 = shalt.err (%p3031)
  %s3034 = scalar_lea.sflag [#allocation7], 1
  %3035 = vsyncmov %s3034
  %s3036 = vpop.sfrf %3035
  %p3037 = scmp.eq.s32.totalorder %s3036, 0
  %p3038 = pneg %p3037
  %3040 = shalt.err (%p3038)
  %s3041 = scalar_lea.sflag [#allocation7], 2
  %3042 = vsyncmov %s3041
  %s3043 = vpop.sfrf %3042
  %p3044 = scmp.eq.s32.totalorder %s3043, 0
  %p3045 = pneg %p3044
  %3047 = shalt.err (%p3045)
  %s3048 = scalar_lea.sflag [#allocation7], 3
  %3049 = vsyncmov %s3048
  %s3050 = vpop.sfrf %3049
  %p3051 = scmp.eq.s32.totalorder %s3050, 0
  %p3052 = pneg %p3051
  %3054 = shalt.err (%p3052)
  %s3055 = scalar_lea.sflag [#allocation7], 4
  %3056 = vsyncmov %s3055
  %s3057 = vpop.sfrf %3056
  %p3058 = scmp.eq.s32.totalorder %s3057, 0
  %p3059 = pneg %p3058
  %3061 = shalt.err (%p3059)

</llo_original>
